<compile_context>
chip_gen: v7x
topology: tpu7x:2x2x1
jax: 0.10.0
libtpu: 0.0.40
codegen_flags: <defaults>
</compile_context>

<pallas_src>
import functools
import math

import jax
import jax.numpy as jnp
from jax import lax
from jax.experimental import pallas as pl
from jax.experimental.pallas import tpu as pltpu


LN_EPS = 1e-5                  # PyTorch nn.LayerNorm default


def _default_vmem_limit():
    """Generation-specific VMEM budget: 75% of physical capacity.
    v5e/v6e (128 MiB) -> 96 MiB; v7x (64 MiB) -> 48 MiB."""
    try:
        info = pltpu.get_tpu_info()
        cap = int(getattr(info, "vmem_capacity_bytes", 0)) or 64 * 1024 * 1024
    except Exception:
        cap = 64 * 1024 * 1024
    return min(cap * 3 // 4, 100 * 1024 * 1024)


VMEM_LIMIT = _default_vmem_limit()


# ------------------------------ tiling helpers ------------------------------

def _pick_tile(dim, target, align):
    """Largest tile <= target that divides `dim` and is a multiple of `align`,
    or the full dim (a full-extent block is always legal)."""
    if dim <= target:
        return dim
    t = (target // align) * align
    while t >= align:
        if dim % t == 0:
            return t
        t -= align
    return dim  # fallback: whole dimension


def _bf16(a):
    return a if a.dtype == jnp.bfloat16 else a.astype(jnp.bfloat16)


# ----------------------------- Pallas kernels ------------------------------

def _mm_kernel(*refs, activation, has_bias):
    """o = act(x @ w [+ b]) with K-tiled accumulation.

    refs = (x_ref, w_ref, [b_ref,] o_ref, acc_ref); grid = (Mi, Ni, Ki)."""
    if has_bias:
        x_ref, w_ref, b_ref, o_ref, acc_ref = refs
    else:
        x_ref, w_ref, o_ref, acc_ref = refs
        b_ref = None

    kk = pl.program_id(2)

    @pl.when(kk == 0)
    def _():
        acc_ref[...] = jnp.zeros_like(acc_ref)

    acc_ref[...] += jnp.dot(x_ref[...], w_ref[...],
                            preferred_element_type=jnp.float32)

    @pl.when(kk == pl.num_programs(2) - 1)
    def _():
        out = acc_ref[...]
        if has_bias:
            out = out + b_ref[...]
        if activation == "relu":
            out = jnp.maximum(out, 0.0)
        o_ref[...] = out.astype(o_ref.dtype)


def _mm_res_ln_kernel(*refs, has_bias, eps):
    """(o_f32, o_bf16) = LayerNorm(x @ w [+ b] + residual) — fused epilogue
    with dual-dtype outputs.

    refs = (x_ref, w_ref, [b_ref,] res_ref, g_ref, beta_ref,
            o32_ref, o16_ref, acc_ref); grid = (Mi, Ki).
    The feature (N) axis is kept whole so the row-wise LayerNorm reduction
    sees the full row."""
    if has_bias:
        x_ref, w_ref, b_ref, res_ref, g_ref, bt_ref, o32_ref, o16_ref, acc_ref = refs
    else:
        x_ref, w_ref, res_ref, g_ref, bt_ref, o32_ref, o16_ref, acc_ref = refs
        b_ref = None

    kk = pl.program_id(1)

    @pl.when(kk == 0)
    def _():
        acc_ref[...] = jnp.zeros_like(acc_ref)

    acc_ref[...] += jnp.dot(x_ref[...], w_ref[...],
                            preferred_element_type=jnp.float32)

    @pl.when(kk == pl.num_programs(1) - 1)
    def _():
        h = acc_ref[...]
        if has_bias:
            h = h + b_ref[...]
        h = h + res_ref[...].astype(jnp.float32)
        mean = jnp.mean(h, axis=-1, keepdims=True)
        var = jnp.mean((h - mean) ** 2, axis=-1, keepdims=True)
        hn = (h - mean) * lax.rsqrt(var + eps)
        out = hn * g_ref[...] + bt_ref[...]
        o32_ref[...] = out
        o16_ref[...] = out.astype(jnp.bfloat16)


def _ln_mm_kernel(x_ref, g_ref, bt_ref, w_ref, b_ref, o_ref, *, eps):
    """o = LayerNorm(x) @ w + b — LN prologue fused into the logits matmul.

    K (= model dim) is kept whole so the row LN reduction is local;
    grid = (Mi, Ni)."""
    x = x_ref[...].astype(jnp.float32)
    mean = jnp.mean(x, axis=-1, keepdims=True)
    var = jnp.mean((x - mean) ** 2, axis=-1, keepdims=True)
    xn = (x - mean) * lax.rsqrt(var + eps) * g_ref[...] + bt_ref[...]
    o = jnp.dot(xn.astype(jnp.bfloat16), w_ref[...],
                preferred_element_type=jnp.float32)
    o = o + b_ref[...]
    o_ref[...] = o.astype(o_ref.dtype)


def _attention_kernel(qkv_ref, o_ref, *, heads, dim_head, scale, causal):
    """One batch element per grid step, all heads.

    qkv block: (1, S, 3*H*Dh) bf16 (lane-dense, straight from the QKV matmul);
    output block: (1, S, H*Dh) bf16 (lane-dense).  Head split is done inside
    the kernel with static slices; softmax math in f32, EUP reciprocal."""
    S = qkv_ref.shape[1]
    HD = heads * dim_head
    xq = qkv_ref[0]                      # (S, 3*H*Dh) bf16

    if causal:
        row = lax.broadcasted_iota(jnp.int32, (S, S), 0)
        col = lax.broadcasted_iota(jnp.int32, (S, S), 1)
        keep = col <= row

    outs = []
    for h in range(heads):
        qh = xq[:, h * dim_head:(h + 1) * dim_head]                  # (S, Dh)
        kh = xq[:, HD + h * dim_head:HD + (h + 1) * dim_head]
        vh = xq[:, 2 * HD + h * dim_head:2 * HD + (h + 1) * dim_head]
        # q @ k^T without an explicit transpose (contract the Dh axis).
        s = lax.dot_general(qh, kh, (((1,), (1,)), ((), ())),
                            preferred_element_type=jnp.float32) * scale
        if causal:
            # finite mask value: the diagonal is never masked, so no 0-denominator
            s = jnp.where(keep, s, jnp.float32(-1e30))
        m = jnp.max(s, axis=-1, keepdims=True)
        p = jnp.exp(s - m)
        denom = jnp.sum(p, axis=-1, keepdims=True)
        p = p * pl.reciprocal(denom, approx=True)
        outs.append(jnp.dot(p.astype(vh.dtype), vh,
                            preferred_element_type=jnp.float32))      # (S, Dh)

    o = jnp.concatenate(outs, axis=-1)                                # (S, H*Dh)
    o_ref[0] = o.astype(o_ref.dtype)
    # TODO(synk): for long sequences convert to online-softmax (flash) KV
    # tiling with m/l/acc scratch and causal tile skipping; the full (S,S)
    # score block scales quadratically in VMEM (tightest on v7x's 64 MiB).


# ------------------------------ Pallas wrappers -----------------------------

def pallas_linear(x2d, w, b=None, activation=None, out_dtype=jnp.float32):
    """o = act(x @ w [+ b]) — tiled (M//tm, N//tn, K//tk) matmul, bf16 inputs,
    f32 accumulation."""
    M, K = x2d.shape
    K2, N = w.shape
    assert K == K2
    tm = _pick_tile(M, 256, 16)
    tn = _pick_tile(N, 256, 128)
    tk = _pick_tile(K, 512, 128)
    # Keep >=2 parallel grid points so v7x's second TensorCore gets work.
    if (M // tm) * (N // tn) == 1 and M >= 16 and M % 16 == 0:
        tm = max(8, M // 2)
    has_bias = b is not None

    args = [_bf16(x2d), _bf16(w)]
    in_specs = [
        pl.BlockSpec((tm, tk), lambda i, j, kk: (i, kk)),
        pl.BlockSpec((tk, tn), lambda i, j, kk: (kk, j)),
        # TODO(synk): pipeline_mode=pl.Buffered(3) on the weight spec for
        # small-M decode shapes once K//tk > 2 (no effect at demo sizes).
    ]
    if has_bias:
        args.append(b.reshape(1, N).astype(jnp.float32))
        in_specs.append(pl.BlockSpec((1, tn), lambda i, j, kk: (0, j)))

    kernel = functools.partial(_mm_kernel, activation=activation,
                               has_bias=has_bias)
    return pl.pallas_call(
        kernel,
        out_shape=jax.ShapeDtypeStruct((M, N), out_dtype),
        grid=(M // tm, N // tn, K // tk),
        in_specs=in_specs,
        out_specs=pl.BlockSpec((tm, tn), lambda i, j, kk: (i, j)),
        scratch_shapes=[pltpu.VMEM((tm, tn), jnp.float32)],
        compiler_params=pltpu.CompilerParams(
            dimension_semantics=("parallel", "parallel", "arbitrary"),
            vmem_limit_bytes=VMEM_LIMIT),
    )(*args)


def pallas_linear_residual_ln(x2d, w, b, res, gamma, beta):
    """(o_f32, o_bf16) = LayerNorm(x @ w [+ b] + res) — fused matmul +
    residual + LN with dual-dtype outputs."""
    M, K = x2d.shape
    K2, N = w.shape
    assert K == K2 and res.shape == (M, N)
    tm = _pick_tile(M, 256, 16)
    tk = _pick_tile(K, 512, 128)
    if M // tm == 1 and M >= 16 and M % 16 == 0:
        tm = max(8, M // 2)              # >=2 parallel grid points (v7x)
    has_bias = b is not None
    # TODO(synk): for production dim/ff_dim on v7x (64 MiB VMEM), tile N and
    # switch the LN epilogue to a two-pass/Welford reduction.

    args = [_bf16(x2d), _bf16(w)]
    in_specs = [
        pl.BlockSpec((tm, tk), lambda i, kk: (i, kk)),
        pl.BlockSpec((tk, N), lambda i, kk: (kk, 0)),
    ]
    if has_bias:
        args.append(b.reshape(1, N).astype(jnp.float32))
        in_specs.append(pl.BlockSpec((1, N), lambda i, kk: (0, 0)))
    args += [res,
             gamma.reshape(1, N).astype(jnp.float32),
             beta.reshape(1, N).astype(jnp.float32)]
    in_specs += [
        pl.BlockSpec((tm, N), lambda i, kk: (i, 0)),
        pl.BlockSpec((1, N), lambda i, kk: (0, 0)),
        pl.BlockSpec((1, N), lambda i, kk: (0, 0)),
    ]

    kernel = functools.partial(_mm_res_ln_kernel, has_bias=has_bias, eps=LN_EPS)
    out_spec = pl.BlockSpec((tm, N), lambda i, kk: (i, 0))
    return pl.pallas_call(
        kernel,
        out_shape=(jax.ShapeDtypeStruct((M, N), jnp.float32),
                   jax.ShapeDtypeStruct((M, N), jnp.bfloat16)),
        grid=(M // tm, K // tk),
        in_specs=in_specs,
        out_specs=[out_spec, out_spec],
        scratch_shapes=[pltpu.VMEM((tm, N), jnp.float32)],
        compiler_params=pltpu.CompilerParams(
            dimension_semantics=("parallel", "arbitrary"),
            vmem_limit_bytes=VMEM_LIMIT),
    )(*args)


def pallas_ln_linear(x2d, gamma, beta, w, b):
    """o = LayerNorm(x) @ w + b — final LN fused into the vocab projection."""
    M, D = x2d.shape
    D2, N = w.shape
    assert D == D2
    tm = _pick_tile(M, 256, 16)
    tn = _pick_tile(N, 256, 128)
    if (M // tm) * (N // tn) == 1 and M >= 16 and M % 16 == 0:
        tm = max(8, M // 2)

    kernel = functools.partial(_ln_mm_kernel, eps=LN_EPS)
    return pl.pallas_call(
        kernel,
        out_shape=jax.ShapeDtypeStruct((M, N), jnp.float32),
        grid=(M // tm, N // tn),
        in_specs=[
            pl.BlockSpec((tm, D), lambda i, j: (i, 0)),
            pl.BlockSpec((1, D), lambda i, j: (0, 0)),
            pl.BlockSpec((1, D), lambda i, j: (0, 0)),
            pl.BlockSpec((D, tn), lambda i, j: (0, j)),
            pl.BlockSpec((1, tn), lambda i, j: (0, j)),
        ],
        out_specs=pl.BlockSpec((tm, tn), lambda i, j: (i, j)),
        compiler_params=pltpu.CompilerParams(
            dimension_semantics=("parallel", "parallel"),
            vmem_limit_bytes=VMEM_LIMIT),
    )(_bf16(x2d),
      gamma.reshape(1, D).astype(jnp.float32),
      beta.reshape(1, D).astype(jnp.float32),
      _bf16(w),
      b.reshape(1, N).astype(jnp.float32))


def pallas_attention(qkv, *, heads, dim_head, scale, causal):
    """qkv: (B, S, 3*H*Dh) bf16 (lane-dense) → (B, S, H*Dh) bf16.

    One batch element (all heads) per grid step; both v7x TCs busy when B>=2."""
    B, S, F = qkv.shape
    HD = heads * dim_head
    assert F == 3 * HD
    kernel = functools.partial(_attention_kernel, heads=heads,
                               dim_head=dim_head, scale=scale, causal=causal)
    return pl.pallas_call(
        kernel,
        out_shape=jax.ShapeDtypeStruct((B, S, HD), jnp.bfloat16),
        grid=(B,),
        in_specs=[pl.BlockSpec((1, S, F), lambda b: (b, 0, 0))],
        out_specs=pl.BlockSpec((1, S, HD), lambda b: (b, 0, 0)),
        compiler_params=pltpu.CompilerParams(
            dimension_semantics=("parallel",),
            vmem_limit_bytes=VMEM_LIMIT),
    )(_bf16(qkv))


# ------------------------------- model setup --------------------------------

def sinusoidal_pos_encoding(max_len, dim):
    pos = jnp.arange(max_len, dtype=jnp.float32)[:, None]
    div = jnp.exp(jnp.arange(0, dim, 2, dtype=jnp.float32)
                  * (-math.log(10000.0) / dim))
    pe = jnp.zeros((max_len, dim), dtype=jnp.float32)
    pe = pe.at[:, 0::2].set(jnp.sin(pos * div))
    pe = pe.at[:, 1::2].set(jnp.cos(pos * div))
    return pe


def init_params(key, *, dim, vocab, num_layers, heads, dim_head, ff_dim,
                max_seq_len):
    # Matmul weights are stored in bf16 ONCE here (no per-call converts);
    # biases and LayerNorm params stay f32.
    def dense(k, shape, scale=0.02):
        return (scale * jax.random.normal(k, shape, dtype=jnp.float32)
                ).astype(jnp.bfloat16)

    keys = jax.random.split(key, 2 + 4 * num_layers)
    params = {
        "tok_emb": jax.random.normal(keys[0], (vocab, dim), dtype=jnp.float32),
        "pos_enc": sinusoidal_pos_encoding(max_seq_len, dim),
        "layers": [],
        "ln_f_g": jnp.ones((dim,), jnp.float32),
        "ln_f_b": jnp.zeros((dim,), jnp.float32),
        "w_logit": dense(keys[1], (dim, vocab)),
        "b_logit": jnp.zeros((vocab,), jnp.float32),
    }
    for l in range(num_layers):
        k0, k1, k2, k3 = keys[2 + 4 * l: 6 + 4 * l]
        params["layers"].append({
            "w_qkv": dense(k0, (dim, 3 * heads * dim_head)),   # no bias
            "w_out": dense(k1, (heads * dim_head, dim)),       # no bias
            "ln1_g": jnp.ones((dim,), jnp.float32),
            "ln1_b": jnp.zeros((dim,), jnp.float32),
            "w_ff1": dense(k2, (dim, ff_dim)),
            "b_ff1": jnp.zeros((ff_dim,), jnp.float32),
            "w_ff2": dense(k3, (ff_dim, dim)),
            "b_ff2": jnp.zeros((dim,), jnp.float32),
            "ln2_g": jnp.ones((dim,), jnp.float32),
            "ln2_b": jnp.zeros((dim,), jnp.float32),
        })
    return params


def simple_transformer_forward(params, tokens, *, heads, dim_head, causal):
    B, S = tokens.shape
    D = params["tok_emb"].shape[1]
    HD = heads * dim_head
    scale = dim_head ** -0.5

    # token embedding gather + positional encoding (plain XLA)
    x = params["tok_emb"][tokens] + params["pos_enc"][None, :S, :]   # (B,S,D)
    x2_f32 = x.reshape(B * S, D)
    x2_bf16 = x2_f32.astype(jnp.bfloat16)

    for lp in params["layers"]:
        # --- multi-head self-attention (lane-dense I/O, head split in-kernel) ---
        qkv = pallas_linear(x2_bf16, lp["w_qkv"],
                            out_dtype=jnp.bfloat16)                  # (B*S, 3*H*Dh)
        attn = pallas_attention(qkv.reshape(B, S, 3 * HD), heads=heads,
                                dim_head=dim_head, scale=scale,
                                causal=causal)                        # (B,S,H*Dh)
        attn2 = attn.reshape(B * S, HD)

        # W_0 projection + residual + LayerNorm, fused (dual f32/bf16 outputs)
        y_f32, y_bf16 = pallas_linear_residual_ln(
            attn2, lp["w_out"], None, x2_f32, lp["ln1_g"], lp["ln1_b"])

        # --- feed-forward: Linear -> ReLU -> (Linear + residual + LN, fused) ---
        h = pallas_linear(y_bf16, lp["w_ff1"], lp["b_ff1"], activation="relu",
                          out_dtype=jnp.bfloat16)
        x2_f32, x2_bf16 = pallas_linear_residual_ln(
            h, lp["w_ff2"], lp["b_ff2"], y_f32, lp["ln2_g"], lp["ln2_b"])

    # to_logits: LayerNorm fused into the vocab projection
    logits = pallas_ln_linear(x2_bf16, params["ln_f_g"], params["ln_f_b"],
                              params["w_logit"], params["b_logit"])
    vocab = params["w_logit"].shape[1]
    return logits.reshape(B, S, vocab)


# ----------------------------------- main ------------------------------------

if __name__ == "__main__":
    # small config consistent with the module's signature
    B, S = 2, 8
    DIM = 32
    HEADS = 4
    DIM_HEAD = DIM // HEADS          # dim_head=None -> dim // heads
    NUM_LAYERS = 2
    VOCAB = 256                      # num_unique_tokens
    FF_DIM = 64                      # TransformerBlock FFN width
    MAX_SEQ_LEN = 64
    CAUSAL = True

    key = jax.random.PRNGKey(0)
    k_params, k_tok = jax.random.split(key)
    params = init_params(k_params, dim=DIM, vocab=VOCAB, num_layers=NUM_LAYERS,
                         heads=HEADS, dim_head=DIM_HEAD, ff_dim=FF_DIM,
                         max_seq_len=MAX_SEQ_LEN)
    tokens = jax.random.randint(k_tok, (B, S), 0, VOCAB, dtype=jnp.int32)

    fwd = jax.jit(functools.partial(simple_transformer_forward, heads=HEADS,
                                    dim_head=DIM_HEAD, causal=CAUSAL))
    logits = fwd(params, tokens)
    logits = jax.block_until_ready(logits)
    assert logits.shape == (B, S, VOCAB) and logits.dtype == jnp.float32
    print("KERNEL_OK")
</pallas_src>

<mosaic_0001>
module attributes {stable_mosaic.version = 11 : i64} {
  func.func @_mm_kernel(%arg0: i32, %arg1: i32, %arg2: i32, %arg3: memref<8x32xbf16, #tpu.memory_space<vmem>>, %arg4: memref<32x96xbf16, #tpu.memory_space<vmem>>, %arg5: memref<8x96xbf16, #tpu.memory_space<vmem>>, %arg6: memref<8x96xf32, #tpu.memory_space<vmem>>) attributes {dimension_semantics = [#tpu.dimension_semantics<parallel>, #tpu.dimension_semantics<parallel>, #tpu.dimension_semantics<arbitrary>], iteration_bounds = array<i64: 2, 1, 1>, scalar_prefetch = 0 : i64, scratch_operands = 1 : i64, tpu.core_type = #tpu.core_type<tc>, window_params = [{transform_indices = @transform_0, window_bounds = array<i64: 8, 32>}, {transform_indices = @transform_1, window_bounds = array<i64: 32, 96>}, {transform_indices = @transform_2, window_bounds = array<i64: 8, 96>}]} {
    %c0_i32 = arith.constant 0 : i32
    %0 = arith.cmpi eq, %arg2, %c0_i32 : i32
    %1 = arith.extui %0 : i1 to i32
    %c0_i32_0 = arith.constant 0 : i32
    %2 = arith.cmpi ne, %1, %c0_i32_0 : i32
    scf.if %2 {
      %cst_10 = arith.constant 0.000000e+00 : f32
      %12 = vector.broadcast %cst_10 : f32 to vector<8x96xf32>
      %c0_11 = arith.constant 0 : index
      %c0_12 = arith.constant 0 : index
      %13 = vector.load %arg6[%c0_11, %c0_12] : memref<8x96xf32, #tpu.memory_space<vmem>>, vector<8x96xf32>
      tpu.vector_store %arg6[%c0_11, %c0_12], %12 {strides = array<i32>} : memref<8x96xf32, #tpu.memory_space<vmem>>, vector<8x96xf32>,
    } else {
    }
    %c0 = arith.constant 0 : index
    %c0_1 = arith.constant 0 : index
    %3 = vector.load %arg6[%c0, %c0_1] : memref<8x96xf32, #tpu.memory_space<vmem>>, vector<8x96xf32>
    %c0_2 = arith.constant 0 : index
    %c0_3 = arith.constant 0 : index
    %4 = vector.load %arg3[%c0_2, %c0_3] : memref<8x32xbf16, #tpu.memory_space<vmem>>, vector<8x32xbf16>
    %c0_4 = arith.constant 0 : index
    %c0_5 = arith.constant 0 : index
    %5 = vector.load %arg4[%c0_4, %c0_5] : memref<32x96xbf16, #tpu.memory_space<vmem>>, vector<32x96xbf16>
    %cst = arith.constant dense<0.000000e+00> : vector<8x96xf32>
    %6 = tpu.matmul %4, %5, %cst {dimension_numbers = #tpu.dot_dimension_numbers<[1], [0], [0], [1], [0, 0, 1, 1], [], []>} : vector<8x32xbf16>, vector<32x96xbf16>, vector<8x96xf32> -> vector<8x96xf32>
    %7 = arith.addf %3, %6 : vector<8x96xf32>
    %c0_6 = arith.constant 0 : index
    %c0_7 = arith.constant 0 : index
    %8 = vector.load %arg6[%c0_6, %c0_7] : memref<8x96xf32, #tpu.memory_space<vmem>>, vector<8x96xf32>
    tpu.vector_store %arg6[%c0_6, %c0_7], %7 {strides = array<i32>} : memref<8x96xf32, #tpu.memory_space<vmem>>, vector<8x96xf32>,
    %c0_i32_8 = arith.constant 0 : i32
    %9 = arith.cmpi eq, %arg2, %c0_i32_8 : i32
    %10 = arith.extui %9 : i1 to i32
    %c0_i32_9 = arith.constant 0 : i32
    %11 = arith.cmpi ne, %10, %c0_i32_9 : i32
    scf.if %11 {
      %c0_10 = arith.constant 0 : index
      %c0_11 = arith.constant 0 : index
      %12 = vector.load %arg6[%c0_10, %c0_11] : memref<8x96xf32, #tpu.memory_space<vmem>>, vector<8x96xf32>
      %13 = arith.truncf %12 : vector<8x96xf32> to vector<8x96xbf16>
      %c0_12 = arith.constant 0 : index
      %c0_13 = arith.constant 0 : index
      %14 = vector.load %arg5[%c0_12, %c0_13] : memref<8x96xbf16, #tpu.memory_space<vmem>>, vector<8x96xbf16>
      tpu.vector_store %arg5[%c0_12, %c0_13], %13 {strides = array<i32>} : memref<8x96xbf16, #tpu.memory_space<vmem>>, vector<8x96xbf16>,
    } else {
    }
    return
  }
  func.func @transform_0(%arg0: i32, %arg1: i32, %arg2: i32) -> (i32, i32) {
    %c0_i32 = arith.constant 0 : i32
    return %arg0, %arg2 : i32, i32
  }
  func.func @transform_1(%arg0: i32, %arg1: i32, %arg2: i32) -> (i32, i32) {
    %c0_i32 = arith.constant 0 : i32
    return %arg2, %arg1 : i32, i32
  }
  func.func @transform_2(%arg0: i32, %arg1: i32, %arg2: i32) -> (i32, i32) {
    %c0_i32 = arith.constant 0 : i32
    return %arg0, %arg1 : i32, i32
  }
}

module attributes {stable_mosaic.version = 11 : i64} {
  func.func @_mm_res_ln_kernel(%arg0: i32, %arg1: i32, %arg2: memref<8x32xbf16, #tpu.memory_space<vmem>>, %arg3: memref<32x32xbf16, #tpu.memory_space<vmem>>, %arg4: memref<8x32xf32, #tpu.memory_space<vmem>>, %arg5: memref<1x32xf32, #tpu.memory_space<vmem>>, %arg6: memref<1x32xf32, #tpu.memory_space<vmem>>, %arg7: memref<8x32xf32, #tpu.memory_space<vmem>>, %arg8: memref<8x32xbf16, #tpu.memory_space<vmem>>, %arg9: memref<8x32xf32, #tpu.memory_space<vmem>>) attributes {dimension_semantics = [#tpu.dimension_semantics<parallel>, #tpu.dimension_semantics<arbitrary>], iteration_bounds = array<i64: 2, 1>, scalar_prefetch = 0 : i64, scratch_operands = 1 : i64, tpu.core_type = #tpu.core_type<tc>, window_params = [{transform_indices = @transform_0, window_bounds = array<i64: 8, 32>}, {transform_indices = @transform_1, window_bounds = array<i64: 32, 32>}, {transform_indices = @transform_2, window_bounds = array<i64: 8, 32>}, {pipeline_mode = #tpu.pipeline_mode<synchronous>, transform_indices = @transform_3, window_bounds = array<i64: 1, 32>}, {pipeline_mode = #tpu.pipeline_mode<synchronous>, transform_indices = @transform_4, window_bounds = array<i64: 1, 32>}, {transform_indices = @transform_5, window_bounds = array<i64: 8, 32>}, {transform_indices = @transform_6, window_bounds = array<i64: 8, 32>}]} {
    %c0_i32 = arith.constant 0 : i32
    %0 = arith.cmpi eq, %arg1, %c0_i32 : i32
    %1 = arith.extui %0 : i1 to i32
    %c0_i32_0 = arith.constant 0 : i32
    %2 = arith.cmpi ne, %1, %c0_i32_0 : i32
    scf.if %2 {
      %cst_10 = arith.constant 0.000000e+00 : f32
      %12 = vector.broadcast %cst_10 : f32 to vector<8x32xf32>
      %c0_11 = arith.constant 0 : index
      %c0_12 = arith.constant 0 : index
      %13 = vector.load %arg9[%c0_11, %c0_12] : memref<8x32xf32, #tpu.memory_space<vmem>>, vector<8x32xf32>
      tpu.vector_store %arg9[%c0_11, %c0_12], %12 {strides = array<i32>} : memref<8x32xf32, #tpu.memory_space<vmem>>, vector<8x32xf32>,
    } else {
    }
    %c0 = arith.constant 0 : index
    %c0_1 = arith.constant 0 : index
    %3 = vector.load %arg9[%c0, %c0_1] : memref<8x32xf32, #tpu.memory_space<vmem>>, vector<8x32xf32>
    %c0_2 = arith.constant 0 : index
    %c0_3 = arith.constant 0 : index
    %4 = vector.load %arg2[%c0_2, %c0_3] : memref<8x32xbf16, #tpu.memory_space<vmem>>, vector<8x32xbf16>
    %c0_4 = arith.constant 0 : index
    %c0_5 = arith.constant 0 : index
    %5 = vector.load %arg3[%c0_4, %c0_5] : memref<32x32xbf16, #tpu.memory_space<vmem>>, vector<32x32xbf16>
    %cst = arith.constant dense<0.000000e+00> : vector<8x32xf32>
    %6 = tpu.matmul %4, %5, %cst {dimension_numbers = #tpu.dot_dimension_numbers<[1], [0], [0], [1], [0, 0, 1, 1], [], []>} : vector<8x32xbf16>, vector<32x32xbf16>, vector<8x32xf32> -> vector<8x32xf32>
    %7 = arith.addf %3, %6 : vector<8x32xf32>
    %c0_6 = arith.constant 0 : index
    %c0_7 = arith.constant 0 : index
    %8 = vector.load %arg9[%c0_6, %c0_7] : memref<8x32xf32, #tpu.memory_space<vmem>>, vector<8x32xf32>
    tpu.vector_store %arg9[%c0_6, %c0_7], %7 {strides = array<i32>} : memref<8x32xf32, #tpu.memory_space<vmem>>, vector<8x32xf32>,
    %c0_i32_8 = arith.constant 0 : i32
    %9 = arith.cmpi eq, %arg1, %c0_i32_8 : i32
    %10 = arith.extui %9 : i1 to i32
    %c0_i32_9 = arith.constant 0 : i32
    %11 = arith.cmpi ne, %10, %c0_i32_9 : i32
    scf.if %11 {
      %c0_10 = arith.constant 0 : index
      %c0_11 = arith.constant 0 : index
      %12 = vector.load %arg9[%c0_10, %c0_11] : memref<8x32xf32, #tpu.memory_space<vmem>>, vector<8x32xf32>
      %c0_12 = arith.constant 0 : index
      %c0_13 = arith.constant 0 : index
      %13 = vector.load %arg4[%c0_12, %c0_13] : memref<8x32xf32, #tpu.memory_space<vmem>>, vector<8x32xf32>
      %14 = arith.addf %12, %13 : vector<8x32xf32>
      %cst_14 = arith.constant dense<0.000000e+00> : vector<8xf32>
      %15 = vector.multi_reduction <add>, %14, %cst_14 [1] : vector<8x32xf32> to vector<8xf32>
      %16 = vector.shape_cast %15 : vector<8xf32> to vector<8x1xf32>
      %cst_15 = arith.constant 3.200000e+01 : f32
      %17 = vector.broadcast %cst_15 : f32 to vector<8x1xf32>
      %18 = arith.divf %16, %17 : vector<8x1xf32>
      %19 = vector.broadcast %18 : vector<8x1xf32> to vector<8x32xf32>
      %20 = arith.subf %14, %19 : vector<8x32xf32>
      %21 = arith.mulf %20, %20 : vector<8x32xf32>
      %cst_16 = arith.constant dense<0.000000e+00> : vector<8xf32>
      %22 = vector.multi_reduction <add>, %21, %cst_16 [1] : vector<8x32xf32> to vector<8xf32>
      %23 = vector.shape_cast %22 : vector<8xf32> to vector<8x1xf32>
      %cst_17 = arith.constant 3.200000e+01 : f32
      %24 = vector.broadcast %cst_17 : f32 to vector<8x1xf32>
      %25 = arith.divf %23, %24 : vector<8x1xf32>
      %26 = vector.broadcast %18 : vector<8x1xf32> to vector<8x32xf32>
      %27 = arith.subf %14, %26 : vector<8x32xf32>
      %cst_18 = arith.constant 9.99999974E-6 : f32
      %28 = vector.broadcast %cst_18 : f32 to vector<8x1xf32>
      %29 = arith.addf %25, %28 : vector<8x1xf32>
      %30 = math.rsqrt %29 : vector<8x1xf32>
      %31 = vector.broadcast %30 : vector<8x1xf32> to vector<8x32xf32>
      %32 = arith.mulf %27, %31 : vector<8x32xf32>
      %c0_19 = arith.constant 0 : index
      %c0_20 = arith.constant 0 : index
      %33 = vector.load %arg5[%c0_19, %c0_20] : memref<1x32xf32, #tpu.memory_space<vmem>>, vector<1x32xf32>
      %34 = vector.broadcast %33 : vector<1x32xf32> to vector<8x32xf32>
      %35 = arith.mulf %32, %34 : vector<8x32xf32>
      %c0_21 = arith.constant 0 : index
      %c0_22 = arith.constant 0 : index
      %36 = vector.load %arg6[%c0_21, %c0_22] : memref<1x32xf32, #tpu.memory_space<vmem>>, vector<1x32xf32>
      %37 = vector.broadcast %36 : vector<1x32xf32> to vector<8x32xf32>
      %38 = arith.addf %35, %37 : vector<8x32xf32>
      %c0_23 = arith.constant 0 : index
      %c0_24 = arith.constant 0 : index
      %39 = vector.load %arg7[%c0_23, %c0_24] : memref<8x32xf32, #tpu.memory_space<vmem>>, vector<8x32xf32>
      tpu.vector_store %arg7[%c0_23, %c0_24], %38 {strides = array<i32>} : memref<8x32xf32, #tpu.memory_space<vmem>>, vector<8x32xf32>,
      %40 = arith.truncf %38 : vector<8x32xf32> to vector<8x32xbf16>
      %c0_25 = arith.constant 0 : index
      %c0_26 = arith.constant 0 : index
      %41 = vector.load %arg8[%c0_25, %c0_26] : memref<8x32xbf16, #tpu.memory_space<vmem>>, vector<8x32xbf16>
      tpu.vector_store %arg8[%c0_25, %c0_26], %40 {strides = array<i32>} : memref<8x32xbf16, #tpu.memory_space<vmem>>, vector<8x32xbf16>,
    } else {
    }
    return
  }
  func.func @transform_0(%arg0: i32, %arg1: i32) -> (i32, i32) {
    %c0_i32 = arith.constant 0 : i32
    return %arg0, %arg1 : i32, i32
  }
  func.func @transform_1(%arg0: i32, %arg1: i32) -> (i32, i32) {
    %c0_i32 = arith.constant 0 : i32
    %c0_i32_0 = arith.constant 0 : i32
    return %arg1, %c0_i32 : i32, i32
  }
  func.func @transform_2(%arg0: i32, %arg1: i32) -> (i32, i32) {
    %c0_i32 = arith.constant 0 : i32
    %c0_i32_0 = arith.constant 0 : i32
    return %arg0, %c0_i32 : i32, i32
  }
  func.func @transform_3(%arg0: i32, %arg1: i32) -> (i32, i32) {
    %c0_i32 = arith.constant 0 : i32
    %c0_i32_0 = arith.constant 0 : i32
    %c0_i32_1 = arith.constant 0 : i32
    return %c0_i32, %c0_i32_0 : i32, i32
  }
  func.func @transform_4(%arg0: i32, %arg1: i32) -> (i32, i32) {
    %c0_i32 = arith.constant 0 : i32
    %c0_i32_0 = arith.constant 0 : i32
    %c0_i32_1 = arith.constant 0 : i32
    return %c0_i32, %c0_i32_0 : i32, i32
  }
  func.func @transform_5(%arg0: i32, %arg1: i32) -> (i32, i32) {
    %c0_i32 = arith.constant 0 : i32
    %c0_i32_0 = arith.constant 0 : i32
    return %arg0, %c0_i32 : i32, i32
  }
  func.func @transform_6(%arg0: i32, %arg1: i32) -> (i32, i32) {
    %c0_i32 = arith.constant 0 : i32
    %c0_i32_0 = arith.constant 0 : i32
    return %arg0, %c0_i32 : i32, i32
  }
}

module attributes {stable_mosaic.version = 11 : i64} {
  func.func @_mm_kernel(%arg0: i32, %arg1: i32, %arg2: i32, %arg3: memref<8x32xbf16, #tpu.memory_space<vmem>>, %arg4: memref<32x64xbf16, #tpu.memory_space<vmem>>, %arg5: memref<1x64xf32, #tpu.memory_space<vmem>>, %arg6: memref<8x64xbf16, #tpu.memory_space<vmem>>, %arg7: memref<8x64xf32, #tpu.memory_space<vmem>>) attributes {dimension_semantics = [#tpu.dimension_semantics<parallel>, #tpu.dimension_semantics<parallel>, #tpu.dimension_semantics<arbitrary>], iteration_bounds = array<i64: 2, 1, 1>, scalar_prefetch = 0 : i64, scratch_operands = 1 : i64, tpu.core_type = #tpu.core_type<tc>, window_params = [{transform_indices = @transform_0, window_bounds = array<i64: 8, 32>}, {transform_indices = @transform_1, window_bounds = array<i64: 32, 64>}, {transform_indices = @transform_2, window_bounds = array<i64: 1, 64>}, {transform_indices = @transform_3, window_bounds = array<i64: 8, 64>}]} {
    %c0_i32 = arith.constant 0 : i32
    %0 = arith.cmpi eq, %arg2, %c0_i32 : i32
    %1 = arith.extui %0 : i1 to i32
    %c0_i32_0 = arith.constant 0 : i32
    %2 = arith.cmpi ne, %1, %c0_i32_0 : i32
    scf.if %2 {
      %cst_10 = arith.constant 0.000000e+00 : f32
      %12 = vector.broadcast %cst_10 : f32 to vector<8x64xf32>
      %c0_11 = arith.constant 0 : index
      %c0_12 = arith.constant 0 : index
      %13 = vector.load %arg7[%c0_11, %c0_12] : memref<8x64xf32, #tpu.memory_space<vmem>>, vector<8x64xf32>
      tpu.vector_store %arg7[%c0_11, %c0_12], %12 {strides = array<i32>} : memref<8x64xf32, #tpu.memory_space<vmem>>, vector<8x64xf32>,
    } else {
    }
    %c0 = arith.constant 0 : index
    %c0_1 = arith.constant 0 : index
    %3 = vector.load %arg7[%c0, %c0_1] : memref<8x64xf32, #tpu.memory_space<vmem>>, vector<8x64xf32>
    %c0_2 = arith.constant 0 : index
    %c0_3 = arith.constant 0 : index
    %4 = vector.load %arg3[%c0_2, %c0_3] : memref<8x32xbf16, #tpu.memory_space<vmem>>, vector<8x32xbf16>
    %c0_4 = arith.constant 0 : index
    %c0_5 = arith.constant 0 : index
    %5 = vector.load %arg4[%c0_4, %c0_5] : memref<32x64xbf16, #tpu.memory_space<vmem>>, vector<32x64xbf16>
    %cst = arith.constant dense<0.000000e+00> : vector<8x64xf32>
    %6 = tpu.matmul %4, %5, %cst {dimension_numbers = #tpu.dot_dimension_numbers<[1], [0], [0], [1], [0, 0, 1, 1], [], []>} : vector<8x32xbf16>, vector<32x64xbf16>, vector<8x64xf32> -> vector<8x64xf32>
    %7 = arith.addf %3, %6 : vector<8x64xf32>
    %c0_6 = arith.constant 0 : index
    %c0_7 = arith.constant 0 : index
    %8 = vector.load %arg7[%c0_6, %c0_7] : memref<8x64xf32, #tpu.memory_space<vmem>>, vector<8x64xf32>
    tpu.vector_store %arg7[%c0_6, %c0_7], %7 {strides = array<i32>} : memref<8x64xf32, #tpu.memory_space<vmem>>, vector<8x64xf32>,
    %c0_i32_8 = arith.constant 0 : i32
    %9 = arith.cmpi eq, %arg2, %c0_i32_8 : i32
    %10 = arith.extui %9 : i1 to i32
    %c0_i32_9 = arith.constant 0 : i32
    %11 = arith.cmpi ne, %10, %c0_i32_9 : i32
    scf.if %11 {
      %c0_10 = arith.constant 0 : index
      %c0_11 = arith.constant 0 : index
      %12 = vector.load %arg7[%c0_10, %c0_11] : memref<8x64xf32, #tpu.memory_space<vmem>>, vector<8x64xf32>
      %c0_12 = arith.constant 0 : index
      %c0_13 = arith.constant 0 : index
      %13 = vector.load %arg5[%c0_12, %c0_13] : memref<1x64xf32, #tpu.memory_space<vmem>>, vector<1x64xf32>
      %14 = vector.broadcast %13 : vector<1x64xf32> to vector<8x64xf32>
      %15 = arith.addf %12, %14 : vector<8x64xf32>
      %cst_14 = arith.constant 0.000000e+00 : f32
      %16 = vector.broadcast %cst_14 : f32 to vector<8x64xf32>
      %17 = arith.maximumf %15, %16 : vector<8x64xf32>
      %18 = arith.truncf %17 : vector<8x64xf32> to vector<8x64xbf16>
      %c0_15 = arith.constant 0 : index
      %c0_16 = arith.constant 0 : index
      %19 = vector.load %arg6[%c0_15, %c0_16] : memref<8x64xbf16, #tpu.memory_space<vmem>>, vector<8x64xbf16>
      tpu.vector_store %arg6[%c0_15, %c0_16], %18 {strides = array<i32>} : memref<8x64xbf16, #tpu.memory_space<vmem>>, vector<8x64xbf16>,
    } else {
    }
    return
  }
  func.func @transform_0(%arg0: i32, %arg1: i32, %arg2: i32) -> (i32, i32) {
    %c0_i32 = arith.constant 0 : i32
    return %arg0, %arg2 : i32, i32
  }
  func.func @transform_1(%arg0: i32, %arg1: i32, %arg2: i32) -> (i32, i32) {
    %c0_i32 = arith.constant 0 : i32
    return %arg2, %arg1 : i32, i32
  }
  func.func @transform_2(%arg0: i32, %arg1: i32, %arg2: i32) -> (i32, i32) {
    %c0_i32 = arith.constant 0 : i32
    %c0_i32_0 = arith.constant 0 : i32
    return %c0_i32, %arg1 : i32, i32
  }
  func.func @transform_3(%arg0: i32, %arg1: i32, %arg2: i32) -> (i32, i32) {
    %c0_i32 = arith.constant 0 : i32
    return %arg0, %arg1 : i32, i32
  }
}

module attributes {stable_mosaic.version = 11 : i64} {
  func.func @_attention_kernel(%arg0: i32, %arg1: memref<1x8x96xbf16, #tpu.memory_space<vmem>>, %arg2: memref<1x8x32xbf16, #tpu.memory_space<vmem>>) attributes {dimension_semantics = [#tpu.dimension_semantics<parallel>], iteration_bounds = array<i64: 2>, scalar_prefetch = 0 : i64, scratch_operands = 0 : i64, tpu.core_type = #tpu.core_type<tc>, window_params = [{transform_indices = @transform_0, window_bounds = array<i64: 1, 8, 96>}, {transform_indices = @transform_1, window_bounds = array<i64: 1, 8, 32>}]} {
    %c0 = arith.constant 0 : index
    %c0_0 = arith.constant 0 : index
    %c0_1 = arith.constant 0 : index
    %0 = vector.load %arg1[%c0, %c0_0, %c0_1] : memref<1x8x96xbf16, #tpu.memory_space<vmem>>, vector<1x8x96xbf16>
    %1 = vector.shape_cast %0 : vector<1x8x96xbf16> to vector<8x96xbf16>
    %2 = tpu.iota {dimensions = array<i32: 0>} : vector<8x8xi32>
    %3 = tpu.iota {dimensions = array<i32: 1>} : vector<8x8xi32>
    %4 = arith.cmpi sle, %3, %2 : vector<8x8xi32>
    %5 = vector.extract_strided_slice %1 {offsets = [0, 0], sizes = [8, 8], strides = [1, 1]} : vector<8x96xbf16> to vector<8x8xbf16>
    %6 = vector.extract_strided_slice %1 {offsets = [0, 32], sizes = [8, 8], strides = [1, 1]} : vector<8x96xbf16> to vector<8x8xbf16>
    %7 = vector.extract_strided_slice %1 {offsets = [0, 64], sizes = [8, 8], strides = [1, 1]} : vector<8x96xbf16> to vector<8x8xbf16>
    %cst = arith.constant dense<0.000000e+00> : vector<8x8xf32>
    %8 = tpu.matmul %5, %6, %cst {dimension_numbers = #tpu.dot_dimension_numbers<[1], [1], [0], [0], [0, 0, 1, 0], [], []>} : vector<8x8xbf16>, vector<8x8xbf16>, vector<8x8xf32> -> vector<8x8xf32>
    %cst_2 = arith.constant 0.353553385 : f32
    %9 = vector.broadcast %cst_2 : f32 to vector<8x8xf32>
    %10 = arith.mulf %8, %9 : vector<8x8xf32>
    %cst_3 = arith.constant -1.000000e+30 : f32
    %11 = vector.broadcast %cst_3 : f32 to vector<8x8xf32>
    %12 = arith.select %4, %10, %11 : vector<8x8xi1>, vector<8x8xf32>
    %cst_4 = arith.constant dense<0xFF800000> : vector<8xf32>
    %13 = vector.multi_reduction <maximumf>, %12, %cst_4 [1] : vector<8x8xf32> to vector<8xf32>
    %14 = vector.shape_cast %13 : vector<8xf32> to vector<8x1xf32>
    %15 = vector.broadcast %14 : vector<8x1xf32> to vector<8x8xf32>
    %16 = arith.subf %12, %15 : vector<8x8xf32>
    %17 = math.exp %16 : vector<8x8xf32>
    %cst_5 = arith.constant dense<0.000000e+00> : vector<8xf32>
    %18 = vector.multi_reduction <add>, %17, %cst_5 [1] : vector<8x8xf32> to vector<8xf32>
    %19 = vector.shape_cast %18 : vector<8xf32> to vector<8x1xf32>
    %20 = tpu.reciprocal %19 {approx = true} : vector<8x1xf32> -> vector<8x1xf32>
    %21 = vector.broadcast %20 : vector<8x1xf32> to vector<8x8xf32>
    %22 = arith.mulf %17, %21 : vector<8x8xf32>
    %23 = arith.truncf %22 : vector<8x8xf32> to vector<8x8xbf16>
    %cst_6 = arith.constant dense<0.000000e+00> : vector<8x8xf32>
    %24 = tpu.matmul %23, %7, %cst_6 {dimension_numbers = #tpu.dot_dimension_numbers<[1], [0], [0], [1], [0, 0, 1, 1], [], []>} : vector<8x8xbf16>, vector<8x8xbf16>, vector<8x8xf32> -> vector<8x8xf32>
    %25 = vector.extract_strided_slice %1 {offsets = [0, 8], sizes = [8, 8], strides = [1, 1]} : vector<8x96xbf16> to vector<8x8xbf16>
    %26 = vector.extract_strided_slice %1 {offsets = [0, 40], sizes = [8, 8], strides = [1, 1]} : vector<8x96xbf16> to vector<8x8xbf16>
    %27 = vector.extract_strided_slice %1 {offsets = [0, 72], sizes = [8, 8], strides = [1, 1]} : vector<8x96xbf16> to vector<8x8xbf16>
    %cst_7 = arith.constant dense<0.000000e+00> : vector<8x8xf32>
    %28 = tpu.matmul %25, %26, %cst_7 {dimension_numbers = #tpu.dot_dimension_numbers<[1], [1], [0], [0], [0, 0, 1, 0], [], []>} : vector<8x8xbf16>, vector<8x8xbf16>, vector<8x8xf32> -> vector<8x8xf32>
    %cst_8 = arith.constant 0.353553385 : f32
    %29 = vector.broadcast %cst_8 : f32 to vector<8x8xf32>
    %30 = arith.mulf %28, %29 : vector<8x8xf32>
    %cst_9 = arith.constant -1.000000e+30 : f32
    %31 = vector.broadcast %cst_9 : f32 to vector<8x8xf32>
    %32 = arith.select %4, %30, %31 : vector<8x8xi1>, vector<8x8xf32>
    %cst_10 = arith.constant dense<0xFF800000> : vector<8xf32>
    %33 = vector.multi_reduction <maximumf>, %32, %cst_10 [1] : vector<8x8xf32> to vector<8xf32>
    %34 = vector.shape_cast %33 : vector<8xf32> to vector<8x1xf32>
    %35 = vector.broadcast %34 : vector<8x1xf32> to vector<8x8xf32>
    %36 = arith.subf %32, %35 : vector<8x8xf32>
    %37 = math.exp %36 : vector<8x8xf32>
    %cst_11 = arith.constant dense<0.000000e+00> : vector<8xf32>
    %38 = vector.multi_reduction <add>, %37, %cst_11 [1] : vector<8x8xf32> to vector<8xf32>
    %39 = vector.shape_cast %38 : vector<8xf32> to vector<8x1xf32>
    %40 = tpu.reciprocal %39 {approx = true} : vector<8x1xf32> -> vector<8x1xf32>
    %41 = vector.broadcast %40 : vector<8x1xf32> to vector<8x8xf32>
    %42 = arith.mulf %37, %41 : vector<8x8xf32>
    %43 = arith.truncf %42 : vector<8x8xf32> to vector<8x8xbf16>
    %cst_12 = arith.constant dense<0.000000e+00> : vector<8x8xf32>
    %44 = tpu.matmul %43, %27, %cst_12 {dimension_numbers = #tpu.dot_dimension_numbers<[1], [0], [0], [1], [0, 0, 1, 1], [], []>} : vector<8x8xbf16>, vector<8x8xbf16>, vector<8x8xf32> -> vector<8x8xf32>
    %45 = vector.extract_strided_slice %1 {offsets = [0, 16], sizes = [8, 8], strides = [1, 1]} : vector<8x96xbf16> to vector<8x8xbf16>
    %46 = vector.extract_strided_slice %1 {offsets = [0, 48], sizes = [8, 8], strides = [1, 1]} : vector<8x96xbf16> to vector<8x8xbf16>
    %47 = vector.extract_strided_slice %1 {offsets = [0, 80], sizes = [8, 8], strides = [1, 1]} : vector<8x96xbf16> to vector<8x8xbf16>
    %cst_13 = arith.constant dense<0.000000e+00> : vector<8x8xf32>
    %48 = tpu.matmul %45, %46, %cst_13 {dimension_numbers = #tpu.dot_dimension_numbers<[1], [1], [0], [0], [0, 0, 1, 0], [], []>} : vector<8x8xbf16>, vector<8x8xbf16>, vector<8x8xf32> -> vector<8x8xf32>
    %cst_14 = arith.constant 0.353553385 : f32
    %49 = vector.broadcast %cst_14 : f32 to vector<8x8xf32>
    %50 = arith.mulf %48, %49 : vector<8x8xf32>
    %cst_15 = arith.constant -1.000000e+30 : f32
    %51 = vector.broadcast %cst_15 : f32 to vector<8x8xf32>
    %52 = arith.select %4, %50, %51 : vector<8x8xi1>, vector<8x8xf32>
    %cst_16 = arith.constant dense<0xFF800000> : vector<8xf32>
    %53 = vector.multi_reduction <maximumf>, %52, %cst_16 [1] : vector<8x8xf32> to vector<8xf32>
    %54 = vector.shape_cast %53 : vector<8xf32> to vector<8x1xf32>
    %55 = vector.broadcast %54 : vector<8x1xf32> to vector<8x8xf32>
    %56 = arith.subf %52, %55 : vector<8x8xf32>
    %57 = math.exp %56 : vector<8x8xf32>
    %cst_17 = arith.constant dense<0.000000e+00> : vector<8xf32>
    %58 = vector.multi_reduction <add>, %57, %cst_17 [1] : vector<8x8xf32> to vector<8xf32>
    %59 = vector.shape_cast %58 : vector<8xf32> to vector<8x1xf32>
    %60 = tpu.reciprocal %59 {approx = true} : vector<8x1xf32> -> vector<8x1xf32>
    %61 = vector.broadcast %60 : vector<8x1xf32> to vector<8x8xf32>
    %62 = arith.mulf %57, %61 : vector<8x8xf32>
    %63 = arith.truncf %62 : vector<8x8xf32> to vector<8x8xbf16>
    %cst_18 = arith.constant dense<0.000000e+00> : vector<8x8xf32>
    %64 = tpu.matmul %63, %47, %cst_18 {dimension_numbers = #tpu.dot_dimension_numbers<[1], [0], [0], [1], [0, 0, 1, 1], [], []>} : vector<8x8xbf16>, vector<8x8xbf16>, vector<8x8xf32> -> vector<8x8xf32>
    %65 = vector.extract_strided_slice %1 {offsets = [0, 24], sizes = [8, 8], strides = [1, 1]} : vector<8x96xbf16> to vector<8x8xbf16>
    %66 = vector.extract_strided_slice %1 {offsets = [0, 56], sizes = [8, 8], strides = [1, 1]} : vector<8x96xbf16> to vector<8x8xbf16>
    %67 = vector.extract_strided_slice %1 {offsets = [0, 88], sizes = [8, 8], strides = [1, 1]} : vector<8x96xbf16> to vector<8x8xbf16>
    %cst_19 = arith.constant dense<0.000000e+00> : vector<8x8xf32>
    %68 = tpu.matmul %65, %66, %cst_19 {dimension_numbers = #tpu.dot_dimension_numbers<[1], [1], [0], [0], [0, 0, 1, 0], [], []>} : vector<8x8xbf16>, vector<8x8xbf16>, vector<8x8xf32> -> vector<8x8xf32>
    %cst_20 = arith.constant 0.353553385 : f32
    %69 = vector.broadcast %cst_20 : f32 to vector<8x8xf32>
    %70 = arith.mulf %68, %69 : vector<8x8xf32>
    %cst_21 = arith.constant -1.000000e+30 : f32
    %71 = vector.broadcast %cst_21 : f32 to vector<8x8xf32>
    %72 = arith.select %4, %70, %71 : vector<8x8xi1>, vector<8x8xf32>
    %cst_22 = arith.constant dense<0xFF800000> : vector<8xf32>
    %73 = vector.multi_reduction <maximumf>, %72, %cst_22 [1] : vector<8x8xf32> to vector<8xf32>
    %74 = vector.shape_cast %73 : vector<8xf32> to vector<8x1xf32>
    %75 = vector.broadcast %74 : vector<8x1xf32> to vector<8x8xf32>
    %76 = arith.subf %72, %75 : vector<8x8xf32>
    %77 = math.exp %76 : vector<8x8xf32>
    %cst_23 = arith.constant dense<0.000000e+00> : vector<8xf32>
    %78 = vector.multi_reduction <add>, %77, %cst_23 [1] : vector<8x8xf32> to vector<8xf32>
    %79 = vector.shape_cast %78 : vector<8xf32> to vector<8x1xf32>
    %80 = tpu.reciprocal %79 {approx = true} : vector<8x1xf32> -> vector<8x1xf32>
    %81 = vector.broadcast %80 : vector<8x1xf32> to vector<8x8xf32>
    %82 = arith.mulf %77, %81 : vector<8x8xf32>
    %83 = arith.truncf %82 : vector<8x8xf32> to vector<8x8xbf16>
    %cst_24 = arith.constant dense<0.000000e+00> : vector<8x8xf32>
    %84 = tpu.matmul %83, %67, %cst_24 {dimension_numbers = #tpu.dot_dimension_numbers<[1], [0], [0], [1], [0, 0, 1, 1], [], []>} : vector<8x8xbf16>, vector<8x8xbf16>, vector<8x8xf32> -> vector<8x8xf32>
    %85 = tpu.concatenate %24, %44, %64, %84 in 1 : vector<8x8xf32>, vector<8x8xf32>, vector<8x8xf32>, vector<8x8xf32> -> vector<8x32xf32>
    %86 = arith.truncf %85 : vector<8x32xf32> to vector<8x32xbf16>
    %c0_25 = arith.constant 0 : index
    %c0_26 = arith.constant 0 : index
    %c0_27 = arith.constant 0 : index
    %87 = vector.load %arg2[%c0_25, %c0_26, %c0_27] : memref<1x8x32xbf16, #tpu.memory_space<vmem>>, vector<1x8x32xbf16>
    %88 = vector.shape_cast %87 : vector<1x8x32xbf16> to vector<8x32xbf16>
    %89 = vector.shape_cast %86 : vector<8x32xbf16> to vector<1x8x32xbf16>
    tpu.vector_store %arg2[%c0_25, %c0_26, %c0_27], %89 {strides = array<i32>} : memref<1x8x32xbf16, #tpu.memory_space<vmem>>, vector<1x8x32xbf16>,
    return
  }
  func.func @transform_0(%arg0: i32) -> (i32, i32, i32) {
    %c0_i32 = arith.constant 0 : i32
    %c0_i32_0 = arith.constant 0 : i32
    %c0_i32_1 = arith.constant 0 : i32
    return %arg0, %c0_i32, %c0_i32_0 : i32, i32, i32
  }
  func.func @transform_1(%arg0: i32) -> (i32, i32, i32) {
    %c0_i32 = arith.constant 0 : i32
    %c0_i32_0 = arith.constant 0 : i32
    %c0_i32_1 = arith.constant 0 : i32
    return %arg0, %c0_i32, %c0_i32_0 : i32, i32, i32
  }
}

module attributes {stable_mosaic.version = 11 : i64} {
  func.func @_mm_res_ln_kernel(%arg0: i32, %arg1: i32, %arg2: memref<8x64xbf16, #tpu.memory_space<vmem>>, %arg3: memref<64x32xbf16, #tpu.memory_space<vmem>>, %arg4: memref<1x32xf32, #tpu.memory_space<vmem>>, %arg5: memref<8x32xf32, #tpu.memory_space<vmem>>, %arg6: memref<1x32xf32, #tpu.memory_space<vmem>>, %arg7: memref<1x32xf32, #tpu.memory_space<vmem>>, %arg8: memref<8x32xf32, #tpu.memory_space<vmem>>, %arg9: memref<8x32xbf16, #tpu.memory_space<vmem>>, %arg10: memref<8x32xf32, #tpu.memory_space<vmem>>) attributes {dimension_semantics = [#tpu.dimension_semantics<parallel>, #tpu.dimension_semantics<arbitrary>], iteration_bounds = array<i64: 2, 1>, scalar_prefetch = 0 : i64, scratch_operands = 1 : i64, tpu.core_type = #tpu.core_type<tc>, window_params = [{transform_indices = @transform_0, window_bounds = array<i64: 8, 64>}, {transform_indices = @transform_1, window_bounds = array<i64: 64, 32>}, {pipeline_mode = #tpu.pipeline_mode<synchronous>, transform_indices = @transform_2, window_bounds = array<i64: 1, 32>}, {transform_indices = @transform_3, window_bounds = array<i64: 8, 32>}, {pipeline_mode = #tpu.pipeline_mode<synchronous>, transform_indices = @transform_4, window_bounds = array<i64: 1, 32>}, {pipeline_mode = #tpu.pipeline_mode<synchronous>, transform_indices = @transform_5, window_bounds = array<i64: 1, 32>}, {transform_indices = @transform_6, window_bounds = array<i64: 8, 32>}, {transform_indices = @transform_7, window_bounds = array<i64: 8, 32>}]} {
    %c0_i32 = arith.constant 0 : i32
    %0 = arith.cmpi eq, %arg1, %c0_i32 : i32
    %1 = arith.extui %0 : i1 to i32
    %c0_i32_0 = arith.constant 0 : i32
    %2 = arith.cmpi ne, %1, %c0_i32_0 : i32
    scf.if %2 {
      %cst_10 = arith.constant 0.000000e+00 : f32
      %12 = vector.broadcast %cst_10 : f32 to vector<8x32xf32>
      %c0_11 = arith.constant 0 : index
      %c0_12 = arith.constant 0 : index
      %13 = vector.load %arg10[%c0_11, %c0_12] : memref<8x32xf32, #tpu.memory_space<vmem>>, vector<8x32xf32>
      tpu.vector_store %arg10[%c0_11, %c0_12], %12 {strides = array<i32>} : memref<8x32xf32, #tpu.memory_space<vmem>>, vector<8x32xf32>,
    } else {
    }
    %c0 = arith.constant 0 : index
    %c0_1 = arith.constant 0 : index
    %3 = vector.load %arg10[%c0, %c0_1] : memref<8x32xf32, #tpu.memory_space<vmem>>, vector<8x32xf32>
    %c0_2 = arith.constant 0 : index
    %c0_3 = arith.constant 0 : index
    %4 = vector.load %arg2[%c0_2, %c0_3] : memref<8x64xbf16, #tpu.memory_space<vmem>>, vector<8x64xbf16>
    %c0_4 = arith.constant 0 : index
    %c0_5 = arith.constant 0 : index
    %5 = vector.load %arg3[%c0_4, %c0_5] : memref<64x32xbf16, #tpu.memory_space<vmem>>, vector<64x32xbf16>
    %cst = arith.constant dense<0.000000e+00> : vector<8x32xf32>
    %6 = tpu.matmul %4, %5, %cst {dimension_numbers = #tpu.dot_dimension_numbers<[1], [0], [0], [1], [0, 0, 1, 1], [], []>} : vector<8x64xbf16>, vector<64x32xbf16>, vector<8x32xf32> -> vector<8x32xf32>
    %7 = arith.addf %3, %6 : vector<8x32xf32>
    %c0_6 = arith.constant 0 : index
    %c0_7 = arith.constant 0 : index
    %8 = vector.load %arg10[%c0_6, %c0_7] : memref<8x32xf32, #tpu.memory_space<vmem>>, vector<8x32xf32>
    tpu.vector_store %arg10[%c0_6, %c0_7], %7 {strides = array<i32>} : memref<8x32xf32, #tpu.memory_space<vmem>>, vector<8x32xf32>,
    %c0_i32_8 = arith.constant 0 : i32
    %9 = arith.cmpi eq, %arg1, %c0_i32_8 : i32
    %10 = arith.extui %9 : i1 to i32
    %c0_i32_9 = arith.constant 0 : i32
    %11 = arith.cmpi ne, %10, %c0_i32_9 : i32
    scf.if %11 {
      %c0_10 = arith.constant 0 : index
      %c0_11 = arith.constant 0 : index
      %12 = vector.load %arg10[%c0_10, %c0_11] : memref<8x32xf32, #tpu.memory_space<vmem>>, vector<8x32xf32>
      %c0_12 = arith.constant 0 : index
      %c0_13 = arith.constant 0 : index
      %13 = vector.load %arg4[%c0_12, %c0_13] : memref<1x32xf32, #tpu.memory_space<vmem>>, vector<1x32xf32>
      %14 = vector.broadcast %13 : vector<1x32xf32> to vector<8x32xf32>
      %15 = arith.addf %12, %14 : vector<8x32xf32>
      %c0_14 = arith.constant 0 : index
      %c0_15 = arith.constant 0 : index
      %16 = vector.load %arg5[%c0_14, %c0_15] : memref<8x32xf32, #tpu.memory_space<vmem>>, vector<8x32xf32>
      %17 = arith.addf %15, %16 : vector<8x32xf32>
      %cst_16 = arith.constant dense<0.000000e+00> : vector<8xf32>
      %18 = vector.multi_reduction <add>, %17, %cst_16 [1] : vector<8x32xf32> to vector<8xf32>
      %19 = vector.shape_cast %18 : vector<8xf32> to vector<8x1xf32>
      %cst_17 = arith.constant 3.200000e+01 : f32
      %20 = vector.broadcast %cst_17 : f32 to vector<8x1xf32>
      %21 = arith.divf %19, %20 : vector<8x1xf32>
      %22 = vector.broadcast %21 : vector<8x1xf32> to vector<8x32xf32>
      %23 = arith.subf %17, %22 : vector<8x32xf32>
      %24 = arith.mulf %23, %23 : vector<8x32xf32>
      %cst_18 = arith.constant dense<0.000000e+00> : vector<8xf32>
      %25 = vector.multi_reduction <add>, %24, %cst_18 [1] : vector<8x32xf32> to vector<8xf32>
      %26 = vector.shape_cast %25 : vector<8xf32> to vector<8x1xf32>
      %cst_19 = arith.constant 3.200000e+01 : f32
      %27 = vector.broadcast %cst_19 : f32 to vector<8x1xf32>
      %28 = arith.divf %26, %27 : vector<8x1xf32>
      %29 = vector.broadcast %21 : vector<8x1xf32> to vector<8x32xf32>
      %30 = arith.subf %17, %29 : vector<8x32xf32>
      %cst_20 = arith.constant 9.99999974E-6 : f32
      %31 = vector.broadcast %cst_20 : f32 to vector<8x1xf32>
      %32 = arith.addf %28, %31 : vector<8x1xf32>
      %33 = math.rsqrt %32 : vector<8x1xf32>
      %34 = vector.broadcast %33 : vector<8x1xf32> to vector<8x32xf32>
      %35 = arith.mulf %30, %34 : vector<8x32xf32>
      %c0_21 = arith.constant 0 : index
      %c0_22 = arith.constant 0 : index
      %36 = vector.load %arg6[%c0_21, %c0_22] : memref<1x32xf32, #tpu.memory_space<vmem>>, vector<1x32xf32>
      %37 = vector.broadcast %36 : vector<1x32xf32> to vector<8x32xf32>
      %38 = arith.mulf %35, %37 : vector<8x32xf32>
      %c0_23 = arith.constant 0 : index
      %c0_24 = arith.constant 0 : index
      %39 = vector.load %arg7[%c0_23, %c0_24] : memref<1x32xf32, #tpu.memory_space<vmem>>, vector<1x32xf32>
      %40 = vector.broadcast %39 : vector<1x32xf32> to vector<8x32xf32>
      %41 = arith.addf %38, %40 : vector<8x32xf32>
      %c0_25 = arith.constant 0 : index
      %c0_26 = arith.constant 0 : index
      %42 = vector.load %arg8[%c0_25, %c0_26] : memref<8x32xf32, #tpu.memory_space<vmem>>, vector<8x32xf32>
      tpu.vector_store %arg8[%c0_25, %c0_26], %41 {strides = array<i32>} : memref<8x32xf32, #tpu.memory_space<vmem>>, vector<8x32xf32>,
      %43 = arith.truncf %41 : vector<8x32xf32> to vector<8x32xbf16>
      %c0_27 = arith.constant 0 : index
      %c0_28 = arith.constant 0 : index
      %44 = vector.load %arg9[%c0_27, %c0_28] : memref<8x32xbf16, #tpu.memory_space<vmem>>, vector<8x32xbf16>
      tpu.vector_store %arg9[%c0_27, %c0_28], %43 {strides = array<i32>} : memref<8x32xbf16, #tpu.memory_space<vmem>>, vector<8x32xbf16>,
    } else {
    }
    return
  }
  func.func @transform_0(%arg0: i32, %arg1: i32) -> (i32, i32) {
    %c0_i32 = arith.constant 0 : i32
    return %arg0, %arg1 : i32, i32
  }
  func.func @transform_1(%arg0: i32, %arg1: i32) -> (i32, i32) {
    %c0_i32 = arith.constant 0 : i32
    %c0_i32_0 = arith.constant 0 : i32
    return %arg1, %c0_i32 : i32, i32
  }
  func.func @transform_2(%arg0: i32, %arg1: i32) -> (i32, i32) {
    %c0_i32 = arith.constant 0 : i32
    %c0_i32_0 = arith.constant 0 : i32
    %c0_i32_1 = arith.constant 0 : i32
    return %c0_i32, %c0_i32_0 : i32, i32
  }
  func.func @transform_3(%arg0: i32, %arg1: i32) -> (i32, i32) {
    %c0_i32 = arith.constant 0 : i32
    %c0_i32_0 = arith.constant 0 : i32
    return %arg0, %c0_i32 : i32, i32
  }
  func.func @transform_4(%arg0: i32, %arg1: i32) -> (i32, i32) {
    %c0_i32 = arith.constant 0 : i32
    %c0_i32_0 = arith.constant 0 : i32
    %c0_i32_1 = arith.constant 0 : i32
    return %c0_i32, %c0_i32_0 : i32, i32
  }
  func.func @transform_5(%arg0: i32, %arg1: i32) -> (i32, i32) {
    %c0_i32 = arith.constant 0 : i32
    %c0_i32_0 = arith.constant 0 : i32
    %c0_i32_1 = arith.constant 0 : i32
    return %c0_i32, %c0_i32_0 : i32, i32
  }
  func.func @transform_6(%arg0: i32, %arg1: i32) -> (i32, i32) {
    %c0_i32 = arith.constant 0 : i32
    %c0_i32_0 = arith.constant 0 : i32
    return %arg0, %c0_i32 : i32, i32
  }
  func.func @transform_7(%arg0: i32, %arg1: i32) -> (i32, i32) {
    %c0_i32 = arith.constant 0 : i32
    %c0_i32_0 = arith.constant 0 : i32
    return %arg0, %c0_i32 : i32, i32
  }
}

module attributes {stable_mosaic.version = 11 : i64} {
  func.func @_ln_mm_kernel(%arg0: i32, %arg1: i32, %arg2: memref<8x32xbf16, #tpu.memory_space<vmem>>, %arg3: memref<1x32xf32, #tpu.memory_space<vmem>>, %arg4: memref<1x32xf32, #tpu.memory_space<vmem>>, %arg5: memref<32x256xbf16, #tpu.memory_space<vmem>>, %arg6: memref<1x256xf32, #tpu.memory_space<vmem>>, %arg7: memref<8x256xf32, #tpu.memory_space<vmem>>) attributes {dimension_semantics = [#tpu.dimension_semantics<parallel>, #tpu.dimension_semantics<parallel>], iteration_bounds = array<i64: 2, 1>, scalar_prefetch = 0 : i64, scratch_operands = 0 : i64, tpu.core_type = #tpu.core_type<tc>, window_params = [{transform_indices = @transform_0, window_bounds = array<i64: 8, 32>}, {pipeline_mode = #tpu.pipeline_mode<synchronous>, transform_indices = @transform_1, window_bounds = array<i64: 1, 32>}, {pipeline_mode = #tpu.pipeline_mode<synchronous>, transform_indices = @transform_2, window_bounds = array<i64: 1, 32>}, {transform_indices = @transform_3, window_bounds = array<i64: 32, 256>}, {transform_indices = @transform_4, window_bounds = array<i64: 1, 256>}, {transform_indices = @transform_5, window_bounds = array<i64: 8, 256>}]} {
    %c0 = arith.constant 0 : index
    %c0_0 = arith.constant 0 : index
    %0 = vector.load %arg2[%c0, %c0_0] : memref<8x32xbf16, #tpu.memory_space<vmem>>, vector<8x32xbf16>
    %1 = arith.extf %0 : vector<8x32xbf16> to vector<8x32xf32>
    %cst = arith.constant dense<0.000000e+00> : vector<8xf32>
    %2 = vector.multi_reduction <add>, %1, %cst [1] : vector<8x32xf32> to vector<8xf32>
    %3 = vector.shape_cast %2 : vector<8xf32> to vector<8x1xf32>
    %cst_1 = arith.constant 3.200000e+01 : f32
    %4 = vector.broadcast %cst_1 : f32 to vector<8x1xf32>
    %5 = arith.divf %3, %4 : vector<8x1xf32>
    %6 = vector.broadcast %5 : vector<8x1xf32> to vector<8x32xf32>
    %7 = arith.subf %1, %6 : vector<8x32xf32>
    %8 = arith.mulf %7, %7 : vector<8x32xf32>
    %cst_2 = arith.constant dense<0.000000e+00> : vector<8xf32>
    %9 = vector.multi_reduction <add>, %8, %cst_2 [1] : vector<8x32xf32> to vector<8xf32>
    %10 = vector.shape_cast %9 : vector<8xf32> to vector<8x1xf32>
    %cst_3 = arith.constant 3.200000e+01 : f32
    %11 = vector.broadcast %cst_3 : f32 to vector<8x1xf32>
    %12 = arith.divf %10, %11 : vector<8x1xf32>
    %13 = vector.broadcast %5 : vector<8x1xf32> to vector<8x32xf32>
    %14 = arith.subf %1, %13 : vector<8x32xf32>
    %cst_4 = arith.constant 9.99999974E-6 : f32
    %15 = vector.broadcast %cst_4 : f32 to vector<8x1xf32>
    %16 = arith.addf %12, %15 : vector<8x1xf32>
    %17 = math.rsqrt %16 : vector<8x1xf32>
    %18 = vector.broadcast %17 : vector<8x1xf32> to vector<8x32xf32>
    %19 = arith.mulf %14, %18 : vector<8x32xf32>
    %c0_5 = arith.constant 0 : index
    %c0_6 = arith.constant 0 : index
    %20 = vector.load %arg3[%c0_5, %c0_6] : memref<1x32xf32, #tpu.memory_space<vmem>>, vector<1x32xf32>
    %21 = vector.broadcast %20 : vector<1x32xf32> to vector<8x32xf32>
    %22 = arith.mulf %19, %21 : vector<8x32xf32>
    %c0_7 = arith.constant 0 : index
    %c0_8 = arith.constant 0 : index
    %23 = vector.load %arg4[%c0_7, %c0_8] : memref<1x32xf32, #tpu.memory_space<vmem>>, vector<1x32xf32>
    %24 = vector.broadcast %23 : vector<1x32xf32> to vector<8x32xf32>
    %25 = arith.addf %22, %24 : vector<8x32xf32>
    %26 = arith.truncf %25 : vector<8x32xf32> to vector<8x32xbf16>
    %c0_9 = arith.constant 0 : index
    %c0_10 = arith.constant 0 : index
    %27 = vector.load %arg5[%c0_9, %c0_10] : memref<32x256xbf16, #tpu.memory_space<vmem>>, vector<32x256xbf16>
    %cst_11 = arith.constant dense<0.000000e+00> : vector<8x256xf32>
    %28 = tpu.matmul %26, %27, %cst_11 {dimension_numbers = #tpu.dot_dimension_numbers<[1], [0], [0], [1], [0, 0, 1, 1], [], []>} : vector<8x32xbf16>, vector<32x256xbf16>, vector<8x256xf32> -> vector<8x256xf32>
    %c0_12 = arith.constant 0 : index
    %c0_13 = arith.constant 0 : index
    %29 = vector.load %arg6[%c0_12, %c0_13] : memref<1x256xf32, #tpu.memory_space<vmem>>, vector<1x256xf32>
    %30 = vector.broadcast %29 : vector<1x256xf32> to vector<8x256xf32>
    %31 = arith.addf %28, %30 : vector<8x256xf32>
    %c0_14 = arith.constant 0 : index
    %c0_15 = arith.constant 0 : index
    %32 = vector.load %arg7[%c0_14, %c0_15] : memref<8x256xf32, #tpu.memory_space<vmem>>, vector<8x256xf32>
    tpu.vector_store %arg7[%c0_14, %c0_15], %31 {strides = array<i32>} : memref<8x256xf32, #tpu.memory_space<vmem>>, vector<8x256xf32>,
    return
  }
  func.func @transform_0(%arg0: i32, %arg1: i32) -> (i32, i32) {
    %c0_i32 = arith.constant 0 : i32
    %c0_i32_0 = arith.constant 0 : i32
    return %arg0, %c0_i32 : i32, i32
  }
  func.func @transform_1(%arg0: i32, %arg1: i32) -> (i32, i32) {
    %c0_i32 = arith.constant 0 : i32
    %c0_i32_0 = arith.constant 0 : i32
    %c0_i32_1 = arith.constant 0 : i32
    return %c0_i32, %c0_i32_0 : i32, i32
  }
  func.func @transform_2(%arg0: i32, %arg1: i32) -> (i32, i32) {
    %c0_i32 = arith.constant 0 : i32
    %c0_i32_0 = arith.constant 0 : i32
    %c0_i32_1 = arith.constant 0 : i32
    return %c0_i32, %c0_i32_0 : i32, i32
  }
  func.func @transform_3(%arg0: i32, %arg1: i32) -> (i32, i32) {
    %c0_i32 = arith.constant 0 : i32
    %c0_i32_0 = arith.constant 0 : i32
    return %c0_i32, %arg1 : i32, i32
  }
  func.func @transform_4(%arg0: i32, %arg1: i32) -> (i32, i32) {
    %c0_i32 = arith.constant 0 : i32
    %c0_i32_0 = arith.constant 0 : i32
    return %c0_i32, %arg1 : i32, i32
  }
  func.func @transform_5(%arg0: i32, %arg1: i32) -> (i32, i32) {
    %c0_i32 = arith.constant 0 : i32
    return %arg0, %arg1 : i32, i32
  }
}

module attributes {stable_mosaic.version = 11 : i64} {
  func.func @_mm_res_ln_kernel(%arg0: i32, %arg1: i32, %arg2: memref<8x64xbf16, #tpu.memory_space<vmem>>, %arg3: memref<64x32xbf16, #tpu.memory_space<vmem>>, %arg4: memref<1x32xf32, #tpu.memory_space<vmem>>, %arg5: memref<8x32xf32, #tpu.memory_space<vmem>>, %arg6: memref<1x32xf32, #tpu.memory_space<vmem>>, %arg7: memref<1x32xf32, #tpu.memory_space<vmem>>, %arg8: memref<8x32xf32, #tpu.memory_space<vmem>>, %arg9: memref<8x32xbf16, #tpu.memory_space<vmem>>, %arg10: memref<8x32xf32, #tpu.memory_space<vmem>>) attributes {dimension_semantics = [#tpu.dimension_semantics<parallel>, #tpu.dimension_semantics<arbitrary>], iteration_bounds = array<i64: 2, 1>, scalar_prefetch = 0 : i64, scratch_operands = 1 : i64, tpu.core_type = #tpu.core_type<tc>, window_params = [{transform_indices = @transform_0, window_bounds = array<i64: 8, 64>}, {transform_indices = @transform_1, window_bounds = array<i64: 64, 32>}, {pipeline_mode = #tpu.pipeline_mode<synchronous>, transform_indices = @transform_2, window_bounds = array<i64: 1, 32>}, {transform_indices = @transform_3, window_bounds = array<i64: 8, 32>}, {pipeline_mode = #tpu.pipeline_mode<synchronous>, transform_indices = @transform_4, window_bounds = array<i64: 1, 32>}, {pipeline_mode = #tpu.pipeline_mode<synchronous>, transform_indices = @transform_5, window_bounds = array<i64: 1, 32>}, {transform_indices = @transform_6, window_bounds = array<i64: 8, 32>}, {transform_indices = @transform_7, window_bounds = array<i64: 8, 32>}]} {
    %c0_i32 = arith.constant 0 : i32
    %0 = arith.cmpi eq, %arg1, %c0_i32 : i32
    %1 = arith.extui %0 : i1 to i32
    %c0_i32_0 = arith.constant 0 : i32
    %2 = arith.cmpi ne, %1, %c0_i32_0 : i32
    scf.if %2 {
      %cst_10 = arith.constant 0.000000e+00 : f32
      %12 = vector.broadcast %cst_10 : f32 to vector<8x32xf32>
      %c0_11 = arith.constant 0 : index
      %c0_12 = arith.constant 0 : index
      %13 = vector.load %arg10[%c0_11, %c0_12] : memref<8x32xf32, #tpu.memory_space<vmem>>, vector<8x32xf32>
      tpu.vector_store %arg10[%c0_11, %c0_12], %12 {strides = array<i32>} : memref<8x32xf32, #tpu.memory_space<vmem>>, vector<8x32xf32>,
    } else {
    }
    %c0 = arith.constant 0 : index
    %c0_1 = arith.constant 0 : index
    %3 = vector.load %arg10[%c0, %c0_1] : memref<8x32xf32, #tpu.memory_space<vmem>>, vector<8x32xf32>
    %c0_2 = arith.constant 0 : index
    %c0_3 = arith.constant 0 : index
    %4 = vector.load %arg2[%c0_2, %c0_3] : memref<8x64xbf16, #tpu.memory_space<vmem>>, vector<8x64xbf16>
    %c0_4 = arith.constant 0 : index
    %c0_5 = arith.constant 0 : index
    %5 = vector.load %arg3[%c0_4, %c0_5] : memref<64x32xbf16, #tpu.memory_space<vmem>>, vector<64x32xbf16>
    %cst = arith.constant dense<0.000000e+00> : vector<8x32xf32>
    %6 = tpu.matmul %4, %5, %cst {dimension_numbers = #tpu.dot_dimension_numbers<[1], [0], [0], [1], [0, 0, 1, 1], [], []>} : vector<8x64xbf16>, vector<64x32xbf16>, vector<8x32xf32> -> vector<8x32xf32>
    %7 = arith.addf %3, %6 : vector<8x32xf32>
    %c0_6 = arith.constant 0 : index
    %c0_7 = arith.constant 0 : index
    %8 = vector.load %arg10[%c0_6, %c0_7] : memref<8x32xf32, #tpu.memory_space<vmem>>, vector<8x32xf32>
    tpu.vector_store %arg10[%c0_6, %c0_7], %7 {strides = array<i32>} : memref<8x32xf32, #tpu.memory_space<vmem>>, vector<8x32xf32>,
    %c0_i32_8 = arith.constant 0 : i32
    %9 = arith.cmpi eq, %arg1, %c0_i32_8 : i32
    %10 = arith.extui %9 : i1 to i32
    %c0_i32_9 = arith.constant 0 : i32
    %11 = arith.cmpi ne, %10, %c0_i32_9 : i32
    scf.if %11 {
      %c0_10 = arith.constant 0 : index
      %c0_11 = arith.constant 0 : index
      %12 = vector.load %arg10[%c0_10, %c0_11] : memref<8x32xf32, #tpu.memory_space<vmem>>, vector<8x32xf32>
      %c0_12 = arith.constant 0 : index
      %c0_13 = arith.constant 0 : index
      %13 = vector.load %arg4[%c0_12, %c0_13] : memref<1x32xf32, #tpu.memory_space<vmem>>, vector<1x32xf32>
      %14 = vector.broadcast %13 : vector<1x32xf32> to vector<8x32xf32>
      %15 = arith.addf %12, %14 : vector<8x32xf32>
      %c0_14 = arith.constant 0 : index
      %c0_15 = arith.constant 0 : index
      %16 = vector.load %arg5[%c0_14, %c0_15] : memref<8x32xf32, #tpu.memory_space<vmem>>, vector<8x32xf32>
      %17 = arith.addf %15, %16 : vector<8x32xf32>
      %cst_16 = arith.constant dense<0.000000e+00> : vector<8xf32>
      %18 = vector.multi_reduction <add>, %17, %cst_16 [1] : vector<8x32xf32> to vector<8xf32>
      %19 = vector.shape_cast %18 : vector<8xf32> to vector<8x1xf32>
      %cst_17 = arith.constant 3.200000e+01 : f32
      %20 = vector.broadcast %cst_17 : f32 to vector<8x1xf32>
      %21 = arith.divf %19, %20 : vector<8x1xf32>
      %22 = vector.broadcast %21 : vector<8x1xf32> to vector<8x32xf32>
      %23 = arith.subf %17, %22 : vector<8x32xf32>
      %24 = arith.mulf %23, %23 : vector<8x32xf32>
      %cst_18 = arith.constant dense<0.000000e+00> : vector<8xf32>
      %25 = vector.multi_reduction <add>, %24, %cst_18 [1] : vector<8x32xf32> to vector<8xf32>
      %26 = vector.shape_cast %25 : vector<8xf32> to vector<8x1xf32>
      %cst_19 = arith.constant 3.200000e+01 : f32
      %27 = vector.broadcast %cst_19 : f32 to vector<8x1xf32>
      %28 = arith.divf %26, %27 : vector<8x1xf32>
      %29 = vector.broadcast %21 : vector<8x1xf32> to vector<8x32xf32>
      %30 = arith.subf %17, %29 : vector<8x32xf32>
      %cst_20 = arith.constant 9.99999974E-6 : f32
      %31 = vector.broadcast %cst_20 : f32 to vector<8x1xf32>
      %32 = arith.addf %28, %31 : vector<8x1xf32>
      %33 = math.rsqrt %32 : vector<8x1xf32>
      %34 = vector.broadcast %33 : vector<8x1xf32> to vector<8x32xf32>
      %35 = arith.mulf %30, %34 : vector<8x32xf32>
      %c0_21 = arith.constant 0 : index
      %c0_22 = arith.constant 0 : index
      %36 = vector.load %arg6[%c0_21, %c0_22] : memref<1x32xf32, #tpu.memory_space<vmem>>, vector<1x32xf32>
      %37 = vector.broadcast %36 : vector<1x32xf32> to vector<8x32xf32>
      %38 = arith.mulf %35, %37 : vector<8x32xf32>
      %c0_23 = arith.constant 0 : index
      %c0_24 = arith.constant 0 : index
      %39 = vector.load %arg7[%c0_23, %c0_24] : memref<1x32xf32, #tpu.memory_space<vmem>>, vector<1x32xf32>
      %40 = vector.broadcast %39 : vector<1x32xf32> to vector<8x32xf32>
      %41 = arith.addf %38, %40 : vector<8x32xf32>
      %c0_25 = arith.constant 0 : index
      %c0_26 = arith.constant 0 : index
      %42 = vector.load %arg8[%c0_25, %c0_26] : memref<8x32xf32, #tpu.memory_space<vmem>>, vector<8x32xf32>
      tpu.vector_store %arg8[%c0_25, %c0_26], %41 {strides = array<i32>} : memref<8x32xf32, #tpu.memory_space<vmem>>, vector<8x32xf32>,
      %43 = arith.truncf %41 : vector<8x32xf32> to vector<8x32xbf16>
      %c0_27 = arith.constant 0 : index
      %c0_28 = arith.constant 0 : index
      %44 = vector.load %arg9[%c0_27, %c0_28] : memref<8x32xbf16, #tpu.memory_space<vmem>>, vector<8x32xbf16>
      tpu.vector_store %arg9[%c0_27, %c0_28], %43 {strides = array<i32>} : memref<8x32xbf16, #tpu.memory_space<vmem>>, vector<8x32xbf16>,
    } else {
    }
    return
  }
  func.func @transform_0(%arg0: i32, %arg1: i32) -> (i32, i32) {
    %c0_i32 = arith.constant 0 : i32
    return %arg0, %arg1 : i32, i32
  }
  func.func @transform_1(%arg0: i32, %arg1: i32) -> (i32, i32) {
    %c0_i32 = arith.constant 0 : i32
    %c0_i32_0 = arith.constant 0 : i32
    return %arg1, %c0_i32 : i32, i32
  }
  func.func @transform_2(%arg0: i32, %arg1: i32) -> (i32, i32) {
    %c0_i32 = arith.constant 0 : i32
    %c0_i32_0 = arith.constant 0 : i32
    %c0_i32_1 = arith.constant 0 : i32
    return %c0_i32, %c0_i32_0 : i32, i32
  }
  func.func @transform_3(%arg0: i32, %arg1: i32) -> (i32, i32) {
    %c0_i32 = arith.constant 0 : i32
    %c0_i32_0 = arith.constant 0 : i32
    return %arg0, %c0_i32 : i32, i32
  }
  func.func @transform_4(%arg0: i32, %arg1: i32) -> (i32, i32) {
    %c0_i32 = arith.constant 0 : i32
    %c0_i32_0 = arith.constant 0 : i32
    %c0_i32_1 = arith.constant 0 : i32
    return %c0_i32, %c0_i32_0 : i32, i32
  }
  func.func @transform_5(%arg0: i32, %arg1: i32) -> (i32, i32) {
    %c0_i32 = arith.constant 0 : i32
    %c0_i32_0 = arith.constant 0 : i32
    %c0_i32_1 = arith.constant 0 : i32
    return %c0_i32, %c0_i32_0 : i32, i32
  }
  func.func @transform_6(%arg0: i32, %arg1: i32) -> (i32, i32) {
    %c0_i32 = arith.constant 0 : i32
    %c0_i32_0 = arith.constant 0 : i32
    return %arg0, %c0_i32 : i32, i32
  }
  func.func @transform_7(%arg0: i32, %arg1: i32) -> (i32, i32) {
    %c0_i32 = arith.constant 0 : i32
    %c0_i32_0 = arith.constant 0 : i32
    return %arg0, %c0_i32 : i32, i32
  }
}

</mosaic_0001>

<llo_original>
// kernel: simple_transformer_forward.11
$region0: #{simple_transformer_forward.11}
  #allocation0 [shape = 'u32[]', space=smem, size = 0x4, offset = 0x4, fixed_abs, tag = 'smem constant byte address 0x4 - core index']
  #allocation1 [shape = 'u32[144,128]{1,0:T(1,128)}', space=vmem, size = 0x12000, scoped, tag = 'internal scratch']
  #allocation2 [shape = 'f32[8,96]{1,0:T(8,128)}', space=vmem, size = 0x1000, scoped, tag = 'scratch operand']
  %s0 = inlined_call_operand.vmem [shape: bf16[16,32], index: 0, kind: input, shape index: {}]
  %s1 = inlined_call_operand.vmem [shape: bf16[32,96], index: 1, kind: input, shape index: {}]
  %s2 = inlined_call_operand.vmem [shape: bf16[16,96], index: 2, kind: output, shape index: {}]
  %s3 = sld [smem:[#allocation0]]
  $region49: #{simple_transformer_forward.11} parent=0
    _
  %s5 = ssub.s32 1, %s3
  %s6 = scalar_select 0, %s5, %s3
  loop: start=0, step=1, limit=4
  $region2: #{simple_transformer_forward.11} parent=0 // loop_pre_header
    _
  $region3: #{simple_transformer_forward.11} parent=0 // loop_header
    %s8 = sphi 0, %s12
    %p9 = scmp.ge.s32.totalorder %s8, 4
    %s15 = sphi 0, %s34
    %s16 = sphi 0, %s30
    %s17 = sphi 0, %s26
    %s18 = sphi 0, %s15
    %s19 = sphi 0, %s16
    %s20 = sphi 0, %s17
    %s21 = sphi 0, %s18
    %s22 = sphi 0, %s19
    %s23 = sphi 0, %s20
    %s39 = sphi 0, %s41
    %s42 = sphi 0, %s39
    %s43 = sphi 0, %s42
    %s59 = sphi 0, %s43
    %s67 = sphi 0, %s69
    %s70 = sphi 0, %s67
    %s71 = sphi 0, %s70
    %s87 = sphi 0, %s71
    %s95 = sphi 0, %s97
    %s98 = sphi 0, %s95
    %s99 = sphi 0, %s98
    %s115 = sphi 0, %s99
  $region4: #{simple_transformer_forward.11} parent=0 // loop_header_branch
    %11 = sbr.rel (%p9) target = $region8
  $region5: #{simple_transformer_forward.11} parent=0 // loop_body
    %s13 = ssub.s32 %s8, 1
    %s14 = ssub.s32 %s8, 2
    %s24 = sadd.s32 1, %s17
    %p25 = scmp.ge.s32.totalorder %s24, 1
    %s26 = scalar_select %p25, 0, %s24
    %s27 = sadd.s32 1, %s16
    %s28 = scalar_select %p25, %s27, %s16
    %p29 = scmp.ge.s32.totalorder %s28, 1
    %s30 = scalar_select %p29, 0, %s28
    %s31 = sadd.s32 1, %s15
    %s32 = scalar_select %p29, %s31, %s15
    %p33 = scmp.ge.s32.totalorder %s32, 2
    %s34 = scalar_select %p33, 0, %s32
    %s35 = ssub.s32 %s15, %s34
    %s36 = ssub.s32 %s17, %s26
    %s37 = sor.u32 %s35, %s36
    %p38 = scmp.eq.s32.totalorder %s37, 0
    %s40 = sadd.s32 %s39, 1
    %s41 = scalar_select %p38, %s39, %s40
    %p44 = pneg %p38
    %p45 = scmp.eq.s32.totalorder %s8, 1
    %p46 = por %p44, %p45
    %p47 = scmp.ne.s32.totalorder %s39, %s42
    %p48 = scmp.eq.s32.totalorder %s8, 0
    %p49 = por %p47, %p48
    %p50 = scmp.ne.s32.totalorder %s39, %s42
    %p51 = scmp.eq.s32.totalorder %s13, 1
    %p52 = por %p50, %p51
    %p53 = scmp.ne.s32.totalorder %s42, %s43
    %p54 = scmp.eq.s32.totalorder %s13, 0
    %p55 = por %p53, %p54
    %p56 = scmp.ne.s32.totalorder %s42, %s43
    %p57 = scmp.eq.s32.totalorder %s14, 1
    %p58 = por %p56, %p57
    %p60 = scmp.ne.s32.totalorder %s43, %s59
    %p61 = scmp.eq.s32.totalorder %s14, 0
    %p62 = por %p60, %p61
    %s63 = ssub.s32 %s17, %s26
    %s64 = ssub.s32 %s16, %s30
    %s65 = sor.u32 %s63, %s64
    %p66 = scmp.eq.s32.totalorder %s65, 0
    %s68 = sadd.s32 %s67, 1
    %s69 = scalar_select %p66, %s67, %s68
    %p72 = pneg %p66
    %p73 = scmp.eq.s32.totalorder %s8, 1
    %p74 = por %p72, %p73
    %p75 = scmp.ne.s32.totalorder %s67, %s70
    %p76 = scmp.eq.s32.totalorder %s8, 0
    %p77 = por %p75, %p76
    %p78 = scmp.ne.s32.totalorder %s67, %s70
    %p79 = scmp.eq.s32.totalorder %s13, 1
    %p80 = por %p78, %p79
    %p81 = scmp.ne.s32.totalorder %s70, %s71
    %p82 = scmp.eq.s32.totalorder %s13, 0
    %p83 = por %p81, %p82
    %p84 = scmp.ne.s32.totalorder %s70, %s71
    %p85 = scmp.eq.s32.totalorder %s14, 1
    %p86 = por %p84, %p85
    %p88 = scmp.ne.s32.totalorder %s71, %s87
    %p89 = scmp.eq.s32.totalorder %s14, 0
    %p90 = por %p88, %p89
    %s91 = ssub.s32 %s15, %s34
    %s92 = ssub.s32 %s16, %s30
    %s93 = sor.u32 %s91, %s92
    %p94 = scmp.eq.s32.totalorder %s93, 0
    %s96 = sadd.s32 %s95, 1
    %s97 = scalar_select %p94, %s95, %s96
    %p100 = pneg %p94
    %p101 = scmp.eq.s32.totalorder %s8, 1
    %p102 = por %p100, %p101
    %p103 = scmp.ne.s32.totalorder %s95, %s98
    %p104 = scmp.eq.s32.totalorder %s8, 0
    %p105 = por %p103, %p104
    %p106 = scmp.ne.s32.totalorder %s95, %s98
    %p107 = scmp.eq.s32.totalorder %s13, 1
    %p108 = por %p106, %p107
    %p109 = scmp.ne.s32.totalorder %s98, %s99
    %p110 = scmp.eq.s32.totalorder %s13, 0
    %p111 = por %p109, %p110
    %p112 = scmp.ne.s32.totalorder %s98, %s99
    %p113 = scmp.eq.s32.totalorder %s14, 1
    %p114 = por %p112, %p113
    %p116 = scmp.ne.s32.totalorder %s99, %s115
    %p117 = scmp.eq.s32.totalorder %s14, 0
    %p118 = por %p116, %p117
    %p119 = scmp.le.s32.totalorder 1, %s8
    %p120 = scmp.lt.s32.totalorder %s8, 3
    %p121 = pnand %p119, %p120
    %p122 = pneg %p121
    // Predicated region
    $region9: #{simple_transformer_forward.11} parent=5 // pred_check
      _
    $region10: #{simple_transformer_forward.11} parent=5 // pred_check_branch
      %124 = sbr.rel (%p121) target = $region12
    $region11: #{simple_transformer_forward.11} parent=5 // pred_region
      %s125 = ssub.s32 %s8, 1
      // Predicated region
      $region13: #{simple_transformer_forward.11} parent=11 // pred_check
        %p126 = pneg %p83
      $region14: #{simple_transformer_forward.11} parent=11 // pred_check_branch
        %128 = sbr.rel (%p126) target = $region16
      $region15: #{simple_transformer_forward.11} parent=11 // pred_region
        %s129 = smul.u32 4, %s20
        %p130 = scmp.lt.s32.totalorder %s129, 3
        %s131 = scalar_select %p130, %s129, 3
        %p132 = scmp.lt.s32.totalorder %s19, 0
        %s133 = scalar_select %p132, %s19, 0
        %s134 = sadd.s32 %s133, %s131
        %s135 = smul.addr %s134, 4
        %s136 = scalar_lea.vmem %s1, %s135
        %s137 = smul.u32 4, %s20
      $region16: #{simple_transformer_forward.11} parent=11 // pred_fallthru
        _
    $region12: #{simple_transformer_forward.11} parent=5 // pred_fallthru
      _
    %p138 = scmp.lt.s32.totalorder %s8, 2
    // Predicated region
    $region17: #{simple_transformer_forward.11} parent=5 // pred_check
      %p139 = pneg %p138
    $region18: #{simple_transformer_forward.11} parent=5 // pred_check_branch
      %141 = sbr.rel (%p139) target = $region20
    $region19: #{simple_transformer_forward.11} parent=5 // pred_region
      // Predicated region
      $region21: #{simple_transformer_forward.11} parent=19 // pred_check
        %p142 = pneg %p49
      $region22: #{simple_transformer_forward.11} parent=19 // pred_check_branch
        %144 = sbr.rel (%p142) target = $region24
      $region23: #{simple_transformer_forward.11} parent=19 // pred_region
        %p145 = scmp.lt.s32.totalorder %s15, 1
        %s146 = scalar_select %p145, %s15, 1
        %p147 = scmp.lt.s32.totalorder %s17, 0
        %s148 = scalar_select %p147, %s17, 0
        %s149 = sadd.s32 %s148, %s146
        %s150 = smul.addr %s149, 4
        %s151 = scalar_lea.vmem %s0, %s150
      $region24: #{simple_transformer_forward.11} parent=19 // pred_fallthru
        _
    $region20: #{simple_transformer_forward.11} parent=5 // pred_fallthru
      _
    %p152 = scmp.le.s32.totalorder 1, %s8
    %p153 = scmp.lt.s32.totalorder %s8, 3
    %p154 = pnand %p152, %p153
    %p155 = pneg %p154
    // Predicated region
    $region25: #{simple_transformer_forward.11} parent=5 // pred_check
      _
    $region26: #{simple_transformer_forward.11} parent=5 // pred_check_branch
      %157 = sbr.rel (%p154) target = $region28
    $region27: #{simple_transformer_forward.11} parent=5 // pred_region
      %s158 = ssub.s32 %s8, 1
      %p159 = scmp.lt.s32.totalorder %s18, 1
      %s160 = scalar_select %p159, %s18, 1
      %p161 = scmp.lt.s32.totalorder %s20, 0
      %s162 = scalar_select %p161, %s20, 0
      %s163 = sadd.s32 %s162, %s160
      %s164 = smul.addr %s163, 4
      %s165 = scalar_lea.vmem %s0, %s164
      %p166 = pneg %p55
      %p167 = pneg %p52
      %s168 = smul.u32 4, %s20
      %p169 = scmp.lt.s32.totalorder %s168, 3
      %s170 = scalar_select %p169, %s168, 3
      %p171 = scmp.lt.s32.totalorder %s19, 0
      %s172 = scalar_select %p171, %s19, 0
      %s173 = sadd.s32 %s172, %s170
      %s174 = smul.addr %s173, 4
      %s175 = scalar_lea.vmem %s1, %s174
      %p176 = pneg %p83
      %p177 = pneg %p80
      %p178 = pneg %p111
      %p179 = pneg %p108
      %p180 = scmp.lt.s32.totalorder %s18, 1
      %s181 = scalar_select %p180, %s18, 1
      %p182 = scmp.lt.s32.totalorder %s19, 0
      %s183 = scalar_select %p182, %s19, 0
      %s184 = sadd.s32 %s183, %s181
      %s185 = smul.addr %s184, 4
      %s186 = scalar_lea.vmem %s2, %s185
      %p187 = scmp.lt.s32.totalorder %s18, 1
      %s188 = scalar_select %p187, %s18, 1
      %p189 = scmp.lt.s32.totalorder %s20, 0
      %s190 = scalar_select %p189, %s20, 0
      %s191 = sadd.s32 %s190, %s188
      %s192 = smul.addr %s191, 4
      %s193 = scalar_lea.vmem %s0, %s192
      %s194 = smul.u32 4, %s20
      %p195 = scmp.lt.s32.totalorder %s194, 3
      %s196 = scalar_select %p195, %s194, 3
      %p197 = scmp.lt.s32.totalorder %s19, 0
      %s198 = scalar_select %p197, %s19, 0
      %s199 = sadd.s32 %s198, %s196
      %s200 = smul.addr %s199, 4
      %s201 = scalar_lea.vmem %s1, %s200
      %s202 = smul.u32 4, %s20
      %p203 = scmp.lt.s32.totalorder %s18, 1
      %s204 = scalar_select %p203, %s18, 1
      %p205 = scmp.lt.s32.totalorder %s19, 0
      %s206 = scalar_select %p205, %s19, 0
      %s207 = sadd.s32 %s206, %s204
      %s208 = smul.addr %s207, 4
      %s209 = scalar_lea.vmem %s2, %s208
      %p211 = scmp.eq.s32.totalorder %s20, 0
      // Predicated region
      $region29: #{simple_transformer_forward.11} parent=27 // pred_check
        %p212 = pneg %p211
      $region30: #{simple_transformer_forward.11} parent=27 // pred_check_branch
        %214 = sbr.rel (%p212) target = $region32
      $region31: #{simple_transformer_forward.11} parent=27 // pred_region
        %vm215 = vcmask 785408
        %216 = vst.msk [vmem:[#allocation2] sm:$0xff] %vm215, 0.0
      $region32: #{simple_transformer_forward.11} parent=27 // pred_fallthru
        _
      %v217 = vld [vmem:[#allocation2] sm:$0xff]
      %v218 = vld [vmem:[%s193] sm:$0xf]
      %v219 = vld [vmem:[%s201] sm:$0xf]
      %v220 = vld [vmem:[%s201 + $0x4] sm:$0xf]
      %v221 = vld [vmem:[%s201 + $0x8] sm:$0xf]
      %v222 = vld [vmem:[%s201 + $0xc] sm:$0xf]
      %v227 = vunpack.c.l.b16 %v219
      %v228 = vunpack.c.l.b16 %v220
      %v229 = vunpack.c.l.b16 %v221
      %v230 = vunpack.c.l.b16 %v222
      %v231 = vpack.c.b16 %v228, %v227
      %v232 = vpack.c.b16 %v230, %v229
      %vm235 = vcmask 261120
      %v237 = vsel %vm235, %v218, 0
      %239 = vmatprep.subr.bf16.mxu0 0
      %240 = vmatpush1.bf16.msra.mxu0 %v231
      %241 = vmatprep.subr.bf16.mxu0 0
      %242 = vmatpush1.bf16.msra.mxu0 %v232
      %243 = vmatprep.subr.bf16.mxu0 0
      %244 = vmatpush1.bf16.msra.mxu0 0
      %245 = vmatprep.subr.bf16.mxu0 0
      %246 = vmatpush1.bf16.msra.mxu0 0
      %247 = vmatprep.subr.bf16.mxu0 0
      %248 = vmatpush1.bf16.msra.mxu0 0
      %249 = vmatprep.subr.bf16.mxu0 0
      %250 = vmatpush1.bf16.msra.mxu0 0
      %251 = vmatprep.subr.bf16.mxu0 0
      %252 = vmatpush1.bf16.msra.mxu0 0
      %253 = vmatprep.subr.bf16.mxu0 0
      %254 = vmatpush1.bf16.msra.mxu0 0
      %255 = vmatprep.subr.bf16.mxu0 0
      %256 = vmatpush1.bf16.msra.mxu0 0
      %257 = vmatprep.subr.bf16.mxu0 0
      %258 = vmatpush1.bf16.msra.mxu0 0
      %259 = vmatprep.subr.bf16.mxu0 0
      %260 = vmatpush1.bf16.msra.mxu0 0
      %261 = vmatprep.subr.bf16.mxu0 0
      %262 = vmatpush1.bf16.msra.mxu0 0
      %263 = vmatprep.subr.bf16.mxu0 0
      %264 = vmatpush1.bf16.msra.mxu0 0
      %265 = vmatprep.subr.bf16.mxu0 0
      %266 = vmatpush1.bf16.msra.mxu0 0
      %267 = vmatprep.subr.bf16.mxu0 0
      %268 = vmatpush1.bf16.msra.mxu0 0
      %269 = vmatprep.subr.bf16.mxu0 0
      %270 = vmatpush1.bf16.msra.mxu0 0
      %271 = vmatprep.mubr.bf16.mxu0 0
      %272 = vmatmul.mubr.bf16.gmra.mrb[0].mxu0 %v237
      %v273 = vpop.f32.mrb[0].mxu0
      %v274 = vadd.f32 0.0, %v273
      %v275 = vpop.f32.mrb[0].mxu0
      %v276 = vpop.f32.mrb[0].mxu0
      %v277 = vpop.f32.mrb[0].mxu0
      %278 = vdwg.mxu0
      %v279 = vadd.f32 %v217, %v274
      %vm280 = vcmask 785408
      %281 = vst.msk [vmem:[#allocation2] sm:$0xff] %vm280, %v279
      // Predicated region
      $region33: #{simple_transformer_forward.11} parent=27 // pred_check
        %p282 = pneg %p211
      $region34: #{simple_transformer_forward.11} parent=27 // pred_check_branch
        %284 = sbr.rel (%p282) target = $region36
      $region35: #{simple_transformer_forward.11} parent=27 // pred_region
        %v285 = vld [vmem:[#allocation2] sm:$0xff]
        %v286 = vpack.c.bf16 %v285, %v285
        %vm287 = vcmask 781312
        %288 = vst.msk [vmem:[%s209] sm:$0xf] %vm287, %v286
      $region36: #{simple_transformer_forward.11} parent=27 // pred_fallthru
        _
      %p289 = scmp.lt.s32.totalorder %s18, 1
      %s290 = scalar_select %p289, %s18, 1
      %p291 = scmp.lt.s32.totalorder %s19, 0
      %s292 = scalar_select %p291, %s19, 0
      %s293 = sadd.s32 %s292, %s290
      %s294 = smul.addr %s293, 4
      %s295 = scalar_lea.vmem %s2, %s294
      // Predicated region
      $region37: #{simple_transformer_forward.11} parent=27 // pred_check
        %p296 = pneg %p108
      $region38: #{simple_transformer_forward.11} parent=27 // pred_check_branch
        %298 = sbr.rel (%p296) target = $region40
      $region39: #{simple_transformer_forward.11} parent=27 // pred_region
        _
      $region40: #{simple_transformer_forward.11} parent=27 // pred_fallthru
        _
    $region28: #{simple_transformer_forward.11} parent=5 // pred_fallthru
      _
    %p299 = scmp.le.s32.totalorder 2, %s8
    // Predicated region
    $region41: #{simple_transformer_forward.11} parent=5 // pred_check
      %p300 = pneg %p299
    $region42: #{simple_transformer_forward.11} parent=5 // pred_check_branch
      %302 = sbr.rel (%p300) target = $region44
    $region43: #{simple_transformer_forward.11} parent=5 // pred_region
      %s303 = ssub.s32 %s8, 2
      // Predicated region
      $region45: #{simple_transformer_forward.11} parent=43 // pred_check
        %p304 = pneg %p114
      $region46: #{simple_transformer_forward.11} parent=43 // pred_check_branch
        %306 = sbr.rel (%p304) target = $region48
      $region47: #{simple_transformer_forward.11} parent=43 // pred_region
        %p307 = scmp.lt.s32.totalorder %s21, 1
        %s308 = scalar_select %p307, %s21, 1
        %p309 = scmp.lt.s32.totalorder %s22, 0
        %s310 = scalar_select %p309, %s22, 0
        %s311 = sadd.s32 %s310, %s308
        %s312 = smul.addr %s311, 4
        %s313 = scalar_lea.vmem %s2, %s312
      $region48: #{simple_transformer_forward.11} parent=43 // pred_fallthru
        _
    $region44: #{simple_transformer_forward.11} parent=5 // pred_fallthru
      _
  $region6: #{simple_transformer_forward.11} parent=0 // loop_footer
    %s12 = sadd.s32 1, %s8
  $region7: #{simple_transformer_forward.11} parent=0 // loop_footer_branch
    %7 = sbr.rel target = $region3
  $region8: #{simple_transformer_forward.11} parent=0 // loop_exit
    _

// kernel: simple_transformer_forward.14
$region0: #{simple_transformer_forward.14}
  #allocation0 [shape = 'u32[]', space=smem, size = 0x4, offset = 0x4, fixed_abs, tag = 'smem constant byte address 0x4 - core index']
  #allocation1 [shape = 'u32[144,128]{1,0:T(1,128)}', space=vmem, size = 0x12000, scoped, tag = 'internal scratch']
  #allocation2 [shape = 'f32[8,64]{1,0:T(8,128)}', space=vmem, size = 0x1000, scoped, tag = 'scratch operand']
  %s0 = inlined_call_operand.vmem [shape: bf16[16,32], index: 0, kind: input, shape index: {}]
  %s1 = inlined_call_operand.vmem [shape: bf16[32,64], index: 1, kind: input, shape index: {}]
  %s2 = inlined_call_operand.vmem [shape: f32[1,64], index: 2, kind: input, shape index: {}]
  %s3 = inlined_call_operand.vmem [shape: bf16[16,64], index: 3, kind: output, shape index: {}]
  %s4 = sld [smem:[#allocation0]]
  $region53: #{simple_transformer_forward.14} parent=0
    _
  %s6 = ssub.s32 1, %s4
  %s7 = scalar_select 0, %s6, %s4
  loop: start=0, step=1, limit=4
  $region2: #{simple_transformer_forward.14} parent=0 // loop_pre_header
    _
  $region3: #{simple_transformer_forward.14} parent=0 // loop_header
    %s9 = sphi 0, %s13
    %p10 = scmp.ge.s32.totalorder %s9, 4
    %s16 = sphi 0, %s35
    %s17 = sphi 0, %s31
    %s18 = sphi 0, %s27
    %s19 = sphi 0, %s16
    %s20 = sphi 0, %s17
    %s21 = sphi 0, %s18
    %s22 = sphi 0, %s19
    %s23 = sphi 0, %s20
    %s24 = sphi 0, %s21
    %s40 = sphi 0, %s42
    %s43 = sphi 0, %s40
    %s44 = sphi 0, %s43
    %s60 = sphi 0, %s44
    %s68 = sphi 0, %s70
    %s71 = sphi 0, %s68
    %s72 = sphi 0, %s71
    %s88 = sphi 0, %s72
    %s94 = sphi 0, %s96
    %s97 = sphi 0, %s94
    %s98 = sphi 0, %s97
    %s114 = sphi 0, %s98
    %s122 = sphi 0, %s124
    %s125 = sphi 0, %s122
    %s126 = sphi 0, %s125
    %s142 = sphi 0, %s126
  $region4: #{simple_transformer_forward.14} parent=0 // loop_header_branch
    %12 = sbr.rel (%p10) target = $region8
  $region5: #{simple_transformer_forward.14} parent=0 // loop_body
    %s14 = ssub.s32 %s9, 1
    %s15 = ssub.s32 %s9, 2
    %s25 = sadd.s32 1, %s18
    %p26 = scmp.ge.s32.totalorder %s25, 1
    %s27 = scalar_select %p26, 0, %s25
    %s28 = sadd.s32 1, %s17
    %s29 = scalar_select %p26, %s28, %s17
    %p30 = scmp.ge.s32.totalorder %s29, 1
    %s31 = scalar_select %p30, 0, %s29
    %s32 = sadd.s32 1, %s16
    %s33 = scalar_select %p30, %s32, %s16
    %p34 = scmp.ge.s32.totalorder %s33, 2
    %s35 = scalar_select %p34, 0, %s33
    %s36 = ssub.s32 %s16, %s35
    %s37 = ssub.s32 %s18, %s27
    %s38 = sor.u32 %s36, %s37
    %p39 = scmp.eq.s32.totalorder %s38, 0
    %s41 = sadd.s32 %s40, 1
    %s42 = scalar_select %p39, %s40, %s41
    %p45 = pneg %p39
    %p46 = scmp.eq.s32.totalorder %s9, 1
    %p47 = por %p45, %p46
    %p48 = scmp.ne.s32.totalorder %s40, %s43
    %p49 = scmp.eq.s32.totalorder %s9, 0
    %p50 = por %p48, %p49
    %p51 = scmp.ne.s32.totalorder %s40, %s43
    %p52 = scmp.eq.s32.totalorder %s14, 1
    %p53 = por %p51, %p52
    %p54 = scmp.ne.s32.totalorder %s43, %s44
    %p55 = scmp.eq.s32.totalorder %s14, 0
    %p56 = por %p54, %p55
    %p57 = scmp.ne.s32.totalorder %s43, %s44
    %p58 = scmp.eq.s32.totalorder %s15, 1
    %p59 = por %p57, %p58
    %p61 = scmp.ne.s32.totalorder %s44, %s60
    %p62 = scmp.eq.s32.totalorder %s15, 0
    %p63 = por %p61, %p62
    %s64 = ssub.s32 %s18, %s27
    %s65 = ssub.s32 %s17, %s31
    %s66 = sor.u32 %s64, %s65
    %p67 = scmp.eq.s32.totalorder %s66, 0
    %s69 = sadd.s32 %s68, 1
    %s70 = scalar_select %p67, %s68, %s69
    %p73 = pneg %p67
    %p74 = scmp.eq.s32.totalorder %s9, 1
    %p75 = por %p73, %p74
    %p76 = scmp.ne.s32.totalorder %s68, %s71
    %p77 = scmp.eq.s32.totalorder %s9, 0
    %p78 = por %p76, %p77
    %p79 = scmp.ne.s32.totalorder %s68, %s71
    %p80 = scmp.eq.s32.totalorder %s14, 1
    %p81 = por %p79, %p80
    %p82 = scmp.ne.s32.totalorder %s71, %s72
    %p83 = scmp.eq.s32.totalorder %s14, 0
    %p84 = por %p82, %p83
    %p85 = scmp.ne.s32.totalorder %s71, %s72
    %p86 = scmp.eq.s32.totalorder %s15, 1
    %p87 = por %p85, %p86
    %p89 = scmp.ne.s32.totalorder %s72, %s88
    %p90 = scmp.eq.s32.totalorder %s15, 0
    %p91 = por %p89, %p90
    %s92 = ssub.s32 %s17, %s31
    %p93 = scmp.eq.s32.totalorder %s92, 0
    %s95 = sadd.s32 %s94, 1
    %s96 = scalar_select %p93, %s94, %s95
    %p99 = pneg %p93
    %p100 = scmp.eq.s32.totalorder %s9, 1
    %p101 = por %p99, %p100
    %p102 = scmp.ne.s32.totalorder %s94, %s97
    %p103 = scmp.eq.s32.totalorder %s9, 0
    %p104 = por %p102, %p103
    %p105 = scmp.ne.s32.totalorder %s94, %s97
    %p106 = scmp.eq.s32.totalorder %s14, 1
    %p107 = por %p105, %p106
    %p108 = scmp.ne.s32.totalorder %s97, %s98
    %p109 = scmp.eq.s32.totalorder %s14, 0
    %p110 = por %p108, %p109
    %p111 = scmp.ne.s32.totalorder %s97, %s98
    %p112 = scmp.eq.s32.totalorder %s15, 1
    %p113 = por %p111, %p112
    %p115 = scmp.ne.s32.totalorder %s98, %s114
    %p116 = scmp.eq.s32.totalorder %s15, 0
    %p117 = por %p115, %p116
    %s118 = ssub.s32 %s16, %s35
    %s119 = ssub.s32 %s17, %s31
    %s120 = sor.u32 %s118, %s119
    %p121 = scmp.eq.s32.totalorder %s120, 0
    %s123 = sadd.s32 %s122, 1
    %s124 = scalar_select %p121, %s122, %s123
    %p127 = pneg %p121
    %p128 = scmp.eq.s32.totalorder %s9, 1
    %p129 = por %p127, %p128
    %p130 = scmp.ne.s32.totalorder %s122, %s125
    %p131 = scmp.eq.s32.totalorder %s9, 0
    %p132 = por %p130, %p131
    %p133 = scmp.ne.s32.totalorder %s122, %s125
    %p134 = scmp.eq.s32.totalorder %s14, 1
    %p135 = por %p133, %p134
    %p136 = scmp.ne.s32.totalorder %s125, %s126
    %p137 = scmp.eq.s32.totalorder %s14, 0
    %p138 = por %p136, %p137
    %p139 = scmp.ne.s32.totalorder %s125, %s126
    %p140 = scmp.eq.s32.totalorder %s15, 1
    %p141 = por %p139, %p140
    %p143 = scmp.ne.s32.totalorder %s126, %s142
    %p144 = scmp.eq.s32.totalorder %s15, 0
    %p145 = por %p143, %p144
    %p146 = scmp.le.s32.totalorder 1, %s9
    %p147 = scmp.lt.s32.totalorder %s9, 3
    %p148 = pnand %p146, %p147
    %p149 = pneg %p148
    // Predicated region
    $region9: #{simple_transformer_forward.14} parent=5 // pred_check
      _
    $region10: #{simple_transformer_forward.14} parent=5 // pred_check_branch
      %151 = sbr.rel (%p148) target = $region12
    $region11: #{simple_transformer_forward.14} parent=5 // pred_region
      %s152 = ssub.s32 %s9, 1
      // Predicated region
      $region13: #{simple_transformer_forward.14} parent=11 // pred_check
        %p153 = pneg %p84
      $region14: #{simple_transformer_forward.14} parent=11 // pred_check_branch
        %155 = sbr.rel (%p153) target = $region16
      $region15: #{simple_transformer_forward.14} parent=11 // pred_region
        %s156 = smul.u32 4, %s21
        %p157 = scmp.lt.s32.totalorder %s156, 3
        %s158 = scalar_select %p157, %s156, 3
        %p159 = scmp.lt.s32.totalorder %s20, 0
        %s160 = scalar_select %p159, %s20, 0
        %s161 = sadd.s32 %s160, %s158
        %s162 = smul.addr %s161, 4
        %s163 = scalar_lea.vmem %s1, %s162
        %s164 = smul.u32 4, %s21
      $region16: #{simple_transformer_forward.14} parent=11 // pred_fallthru
        _
      // Predicated region
      $region17: #{simple_transformer_forward.14} parent=11 // pred_check
        %p165 = pneg %p110
      $region18: #{simple_transformer_forward.14} parent=11 // pred_check_branch
        %167 = sbr.rel (%p165) target = $region20
      $region19: #{simple_transformer_forward.14} parent=11 // pred_region
        %p168 = scmp.lt.s32.totalorder %s20, 0
        %s169 = scalar_select %p168, %s20, 0
        %s170 = scalar_lea.vmem %s2, %s169
      $region20: #{simple_transformer_forward.14} parent=11 // pred_fallthru
        _
    $region12: #{simple_transformer_forward.14} parent=5 // pred_fallthru
      _
    %p171 = scmp.lt.s32.totalorder %s9, 2
    // Predicated region
    $region21: #{simple_transformer_forward.14} parent=5 // pred_check
      %p172 = pneg %p171
    $region22: #{simple_transformer_forward.14} parent=5 // pred_check_branch
      %174 = sbr.rel (%p172) target = $region24
    $region23: #{simple_transformer_forward.14} parent=5 // pred_region
      // Predicated region
      $region25: #{simple_transformer_forward.14} parent=23 // pred_check
        %p175 = pneg %p50
      $region26: #{simple_transformer_forward.14} parent=23 // pred_check_branch
        %177 = sbr.rel (%p175) target = $region28
      $region27: #{simple_transformer_forward.14} parent=23 // pred_region
        %p178 = scmp.lt.s32.totalorder %s16, 1
        %s179 = scalar_select %p178, %s16, 1
        %p180 = scmp.lt.s32.totalorder %s18, 0
        %s181 = scalar_select %p180, %s18, 0
        %s182 = sadd.s32 %s181, %s179
        %s183 = smul.addr %s182, 4
        %s184 = scalar_lea.vmem %s0, %s183
      $region28: #{simple_transformer_forward.14} parent=23 // pred_fallthru
        _
    $region24: #{simple_transformer_forward.14} parent=5 // pred_fallthru
      _
    %p185 = scmp.le.s32.totalorder 1, %s9
    %p186 = scmp.lt.s32.totalorder %s9, 3
    %p187 = pnand %p185, %p186
    %p188 = pneg %p187
    // Predicated region
    $region29: #{simple_transformer_forward.14} parent=5 // pred_check
      _
    $region30: #{simple_transformer_forward.14} parent=5 // pred_check_branch
      %190 = sbr.rel (%p187) target = $region32
    $region31: #{simple_transformer_forward.14} parent=5 // pred_region
      %s191 = ssub.s32 %s9, 1
      %p192 = scmp.lt.s32.totalorder %s19, 1
      %s193 = scalar_select %p192, %s19, 1
      %p194 = scmp.lt.s32.totalorder %s21, 0
      %s195 = scalar_select %p194, %s21, 0
      %s196 = sadd.s32 %s195, %s193
      %s197 = smul.addr %s196, 4
      %s198 = scalar_lea.vmem %s0, %s197
      %p199 = pneg %p56
      %p200 = pneg %p53
      %s201 = smul.u32 4, %s21
      %p202 = scmp.lt.s32.totalorder %s201, 3
      %s203 = scalar_select %p202, %s201, 3
      %p204 = scmp.lt.s32.totalorder %s20, 0
      %s205 = scalar_select %p204, %s20, 0
      %s206 = sadd.s32 %s205, %s203
      %s207 = smul.addr %s206, 4
      %s208 = scalar_lea.vmem %s1, %s207
      %p209 = pneg %p84
      %p210 = pneg %p81
      %p211 = scmp.lt.s32.totalorder %s20, 0
      %s212 = scalar_select %p211, %s20, 0
      %s213 = scalar_lea.vmem %s2, %s212
      %p214 = pneg %p110
      %p215 = pneg %p107
      %p216 = pneg %p138
      %p217 = pneg %p135
      %p218 = scmp.lt.s32.totalorder %s19, 1
      %s219 = scalar_select %p218, %s19, 1
      %p220 = scmp.lt.s32.totalorder %s20, 0
      %s221 = scalar_select %p220, %s20, 0
      %s222 = sadd.s32 %s221, %s219
      %s223 = smul.addr %s222, 4
      %s224 = scalar_lea.vmem %s3, %s223
      %p225 = scmp.lt.s32.totalorder %s19, 1
      %s226 = scalar_select %p225, %s19, 1
      %p227 = scmp.lt.s32.totalorder %s21, 0
      %s228 = scalar_select %p227, %s21, 0
      %s229 = sadd.s32 %s228, %s226
      %s230 = smul.addr %s229, 4
      %s231 = scalar_lea.vmem %s0, %s230
      %s232 = smul.u32 4, %s21
      %p233 = scmp.lt.s32.totalorder %s232, 3
      %s234 = scalar_select %p233, %s232, 3
      %p235 = scmp.lt.s32.totalorder %s20, 0
      %s236 = scalar_select %p235, %s20, 0
      %s237 = sadd.s32 %s236, %s234
      %s238 = smul.addr %s237, 4
      %s239 = scalar_lea.vmem %s1, %s238
      %s240 = smul.u32 4, %s21
      %p241 = scmp.lt.s32.totalorder %s20, 0
      %s242 = scalar_select %p241, %s20, 0
      %s243 = scalar_lea.vmem %s2, %s242
      %p244 = scmp.lt.s32.totalorder %s19, 1
      %s245 = scalar_select %p244, %s19, 1
      %p246 = scmp.lt.s32.totalorder %s20, 0
      %s247 = scalar_select %p246, %s20, 0
      %s248 = sadd.s32 %s247, %s245
      %s249 = smul.addr %s248, 4
      %s250 = scalar_lea.vmem %s3, %s249
      %p252 = scmp.eq.s32.totalorder %s21, 0
      // Predicated region
      $region33: #{simple_transformer_forward.14} parent=31 // pred_check
        %p253 = pneg %p252
      $region34: #{simple_transformer_forward.14} parent=31 // pred_check_branch
        %255 = sbr.rel (%p253) target = $region36
      $region35: #{simple_transformer_forward.14} parent=31 // pred_region
        %vm256 = vcmask 523264
        %257 = vst.msk [vmem:[#allocation2] sm:$0xff] %vm256, 0.0
      $region36: #{simple_transformer_forward.14} parent=31 // pred_fallthru
        _
      %v258 = vld [vmem:[#allocation2] sm:$0xff]
      %v259 = vld [vmem:[%s231] sm:$0xf]
      %v260 = vld [vmem:[%s239] sm:$0xf]
      %v261 = vld [vmem:[%s239 + $0x4] sm:$0xf]
      %v262 = vld [vmem:[%s239 + $0x8] sm:$0xf]
      %v263 = vld [vmem:[%s239 + $0xc] sm:$0xf]
      %v268 = vunpack.c.l.b16 %v260
      %v269 = vunpack.c.l.b16 %v261
      %v270 = vunpack.c.l.b16 %v262
      %v271 = vunpack.c.l.b16 %v263
      %v272 = vpack.c.b16 %v269, %v268
      %v273 = vpack.c.b16 %v271, %v270
      %vm276 = vcmask 261120
      %v278 = vsel %vm276, %v259, 0
      %280 = vmatprep.subr.bf16.mxu0 0
      %281 = vmatpush1.bf16.msra.mxu0 %v272
      %282 = vmatprep.subr.bf16.mxu0 0
      %283 = vmatpush1.bf16.msra.mxu0 %v273
      %284 = vmatprep.subr.bf16.mxu0 0
      %285 = vmatpush1.bf16.msra.mxu0 0
      %286 = vmatprep.subr.bf16.mxu0 0
      %287 = vmatpush1.bf16.msra.mxu0 0
      %288 = vmatprep.subr.bf16.mxu0 0
      %289 = vmatpush1.bf16.msra.mxu0 0
      %290 = vmatprep.subr.bf16.mxu0 0
      %291 = vmatpush1.bf16.msra.mxu0 0
      %292 = vmatprep.subr.bf16.mxu0 0
      %293 = vmatpush1.bf16.msra.mxu0 0
      %294 = vmatprep.subr.bf16.mxu0 0
      %295 = vmatpush1.bf16.msra.mxu0 0
      %296 = vmatprep.subr.bf16.mxu0 0
      %297 = vmatpush1.bf16.msra.mxu0 0
      %298 = vmatprep.subr.bf16.mxu0 0
      %299 = vmatpush1.bf16.msra.mxu0 0
      %300 = vmatprep.subr.bf16.mxu0 0
      %301 = vmatpush1.bf16.msra.mxu0 0
      %302 = vmatprep.subr.bf16.mxu0 0
      %303 = vmatpush1.bf16.msra.mxu0 0
      %304 = vmatprep.subr.bf16.mxu0 0
      %305 = vmatpush1.bf16.msra.mxu0 0
      %306 = vmatprep.subr.bf16.mxu0 0
      %307 = vmatpush1.bf16.msra.mxu0 0
      %308 = vmatprep.subr.bf16.mxu0 0
      %309 = vmatpush1.bf16.msra.mxu0 0
      %310 = vmatprep.subr.bf16.mxu0 0
      %311 = vmatpush1.bf16.msra.mxu0 0
      %312 = vmatprep.mubr.bf16.mxu0 0
      %313 = vmatmul.mubr.bf16.gmra.mrb[0].mxu0 %v278
      %v314 = vpop.f32.mrb[0].mxu0
      %v315 = vadd.f32 0.0, %v314
      %v316 = vpop.f32.mrb[0].mxu0
      %v317 = vpop.f32.mrb[0].mxu0
      %v318 = vpop.f32.mrb[0].mxu0
      %319 = vdwg.mxu0
      %v320 = vadd.f32 %v258, %v315
      %vm321 = vcmask 523264
      %322 = vst.msk [vmem:[#allocation2] sm:$0xff] %vm321, %v320
      // Predicated region
      $region37: #{simple_transformer_forward.14} parent=31 // pred_check
        %p323 = pneg %p252
      $region38: #{simple_transformer_forward.14} parent=31 // pred_check_branch
        %325 = sbr.rel (%p323) target = $region40
      $region39: #{simple_transformer_forward.14} parent=31 // pred_region
        %v326 = vld [vmem:[#allocation2] sm:$0xff]
        %v327 = vld [vmem:[%s243] sm:$0x1]
        %v329 = vlaneseq
        %v330 = vshrl.u32 %v329, 7
        %v331 = vsub.s32 0, %v330
        %v332 = vrot.slane %v327, %v331
        %v334 = vadd.f32 %v326, %v332
        %v335 = vmax.f32 %v334, 0.0
        %v336 = vpack.c.bf16 %v335, %v335
        %vm337 = vcmask 519168
        %338 = vst.msk [vmem:[%s250] sm:$0xf] %vm337, %v336
      $region40: #{simple_transformer_forward.14} parent=31 // pred_fallthru
        _
      %p339 = scmp.lt.s32.totalorder %s19, 1
      %s340 = scalar_select %p339, %s19, 1
      %p341 = scmp.lt.s32.totalorder %s20, 0
      %s342 = scalar_select %p341, %s20, 0
      %s343 = sadd.s32 %s342, %s340
      %s344 = smul.addr %s343, 4
      %s345 = scalar_lea.vmem %s3, %s344
      // Predicated region
      $region41: #{simple_transformer_forward.14} parent=31 // pred_check
        %p346 = pneg %p135
      $region42: #{simple_transformer_forward.14} parent=31 // pred_check_branch
        %348 = sbr.rel (%p346) target = $region44
      $region43: #{simple_transformer_forward.14} parent=31 // pred_region
        _
      $region44: #{simple_transformer_forward.14} parent=31 // pred_fallthru
        _
    $region32: #{simple_transformer_forward.14} parent=5 // pred_fallthru
      _
    %p349 = scmp.le.s32.totalorder 2, %s9
    // Predicated region
    $region45: #{simple_transformer_forward.14} parent=5 // pred_check
      %p350 = pneg %p349
    $region46: #{simple_transformer_forward.14} parent=5 // pred_check_branch
      %352 = sbr.rel (%p350) target = $region48
    $region47: #{simple_transformer_forward.14} parent=5 // pred_region
      %s353 = ssub.s32 %s9, 2
      // Predicated region
      $region49: #{simple_transformer_forward.14} parent=47 // pred_check
        %p354 = pneg %p141
      $region50: #{simple_transformer_forward.14} parent=47 // pred_check_branch
        %356 = sbr.rel (%p354) target = $region52
      $region51: #{simple_transformer_forward.14} parent=47 // pred_region
        %p357 = scmp.lt.s32.totalorder %s22, 1
        %s358 = scalar_select %p357, %s22, 1
        %p359 = scmp.lt.s32.totalorder %s23, 0
        %s360 = scalar_select %p359, %s23, 0
        %s361 = sadd.s32 %s360, %s358
        %s362 = smul.addr %s361, 4
        %s363 = scalar_lea.vmem %s3, %s362
      $region52: #{simple_transformer_forward.14} parent=47 // pred_fallthru
        _
    $region48: #{simple_transformer_forward.14} parent=5 // pred_fallthru
      _
  $region6: #{simple_transformer_forward.14} parent=0 // loop_footer
    %s13 = sadd.s32 1, %s9
  $region7: #{simple_transformer_forward.14} parent=0 // loop_footer_branch
    %8 = sbr.rel target = $region3
  $region8: #{simple_transformer_forward.14} parent=0 // loop_exit
    _

// kernel: simple_transformer_forward.13
$region0: #{simple_transformer_forward.13}
  #allocation0 [shape = 'u32[]', space=smem, size = 0x4, offset = 0x4, fixed_abs, tag = 'smem constant byte address 0x4 - core index']
  #allocation1 [shape = 'u32[144,128]{1,0:T(1,128)}', space=vmem, size = 0x12000, scoped, tag = 'internal scratch']
  #allocation2 [shape = 'f32[8,32]{1,0:T(8,128)}', space=vmem, size = 0x1000, scoped, tag = 'scratch operand']
  %s0 = inlined_call_operand.vmem [shape: bf16[16,32], index: 0, kind: input, shape index: {}]
  %s1 = inlined_call_operand.vmem [shape: bf16[32,32], index: 1, kind: input, shape index: {}]
  %s2 = inlined_call_operand.vmem [shape: f32[16,32], index: 2, kind: input, shape index: {}]
  %s3 = inlined_call_operand.vmem [shape: f32[1,32], index: 3, kind: input, shape index: {}]
  %s4 = inlined_call_operand.vmem [shape: f32[1,32], index: 4, kind: input, shape index: {}]
  %s5 = inlined_call_operand.vmem [shape: f32[16,32], index: 5, kind: output, shape index: {0}]
  %s6 = inlined_call_operand.vmem [shape: bf16[16,32], index: 6, kind: output, shape index: {1}]
  %7 = xla_tuple %s5, %s6
  %s8 = sld [smem:[#allocation0]]
  $region69: #{simple_transformer_forward.13} parent=0
    _
  %s10 = ssub.s32 1, %s8
  %s11 = scalar_select 0, %s10, %s8
  loop: start=0, step=1, limit=4
  $region2: #{simple_transformer_forward.13} parent=0 // loop_pre_header
    _
  $region3: #{simple_transformer_forward.13} parent=0 // loop_header
    %s13 = sphi 0, %s17
    %p14 = scmp.ge.s32.totalorder %s13, 4
    %s20 = sphi 0, %s32
    %s21 = sphi 0, %s28
    %s22 = sphi 0, %s20
    %s23 = sphi 0, %s21
    %s24 = sphi 0, %s22
    %s25 = sphi 0, %s23
    %s37 = sphi 0, %s39
    %s40 = sphi 0, %s37
    %s41 = sphi 0, %s40
    %s57 = sphi 0, %s41
    %s63 = sphi 0, %s65
    %s66 = sphi 0, %s63
    %s67 = sphi 0, %s66
    %s83 = sphi 0, %s67
    %s89 = sphi 0, %s91
    %s92 = sphi 0, %s89
    %s93 = sphi 0, %s92
    %s109 = sphi 0, %s93
    %s113 = sphi 0, %s113
    %s115 = sphi 0, %s113
    %s116 = sphi 0, %s115
    %s130 = sphi 0, %s116
    %s134 = sphi 0, %s134
    %s136 = sphi 0, %s134
    %s137 = sphi 0, %s136
    %s151 = sphi 0, %s137
    %s157 = sphi 0, %s159
    %s160 = sphi 0, %s157
    %s161 = sphi 0, %s160
    %s177 = sphi 0, %s161
    %s183 = sphi 0, %s185
    %s186 = sphi 0, %s183
    %s187 = sphi 0, %s186
    %s203 = sphi 0, %s187
  $region4: #{simple_transformer_forward.13} parent=0 // loop_header_branch
    %16 = sbr.rel (%p14) target = $region8
  $region5: #{simple_transformer_forward.13} parent=0 // loop_body
    %s18 = ssub.s32 %s13, 1
    %s19 = ssub.s32 %s13, 2
    %s26 = sadd.s32 1, %s21
    %p27 = scmp.ge.s32.totalorder %s26, 1
    %s28 = scalar_select %p27, 0, %s26
    %s29 = sadd.s32 1, %s20
    %s30 = scalar_select %p27, %s29, %s20
    %p31 = scmp.ge.s32.totalorder %s30, 2
    %s32 = scalar_select %p31, 0, %s30
    %s33 = ssub.s32 %s20, %s32
    %s34 = ssub.s32 %s21, %s28
    %s35 = sor.u32 %s33, %s34
    %p36 = scmp.eq.s32.totalorder %s35, 0
    %s38 = sadd.s32 %s37, 1
    %s39 = scalar_select %p36, %s37, %s38
    %p42 = pneg %p36
    %p43 = scmp.eq.s32.totalorder %s13, 1
    %p44 = por %p42, %p43
    %p45 = scmp.ne.s32.totalorder %s37, %s40
    %p46 = scmp.eq.s32.totalorder %s13, 0
    %p47 = por %p45, %p46
    %p48 = scmp.ne.s32.totalorder %s37, %s40
    %p49 = scmp.eq.s32.totalorder %s18, 1
    %p50 = por %p48, %p49
    %p51 = scmp.ne.s32.totalorder %s40, %s41
    %p52 = scmp.eq.s32.totalorder %s18, 0
    %p53 = por %p51, %p52
    %p54 = scmp.ne.s32.totalorder %s40, %s41
    %p55 = scmp.eq.s32.totalorder %s19, 1
    %p56 = por %p54, %p55
    %p58 = scmp.ne.s32.totalorder %s41, %s57
    %p59 = scmp.eq.s32.totalorder %s19, 0
    %p60 = por %p58, %p59
    %s61 = ssub.s32 %s21, %s28
    %p62 = scmp.eq.s32.totalorder %s61, 0
    %s64 = sadd.s32 %s63, 1
    %s65 = scalar_select %p62, %s63, %s64
    %p68 = pneg %p62
    %p69 = scmp.eq.s32.totalorder %s13, 1
    %p70 = por %p68, %p69
    %p71 = scmp.ne.s32.totalorder %s63, %s66
    %p72 = scmp.eq.s32.totalorder %s13, 0
    %p73 = por %p71, %p72
    %p74 = scmp.ne.s32.totalorder %s63, %s66
    %p75 = scmp.eq.s32.totalorder %s18, 1
    %p76 = por %p74, %p75
    %p77 = scmp.ne.s32.totalorder %s66, %s67
    %p78 = scmp.eq.s32.totalorder %s18, 0
    %p79 = por %p77, %p78
    %p80 = scmp.ne.s32.totalorder %s66, %s67
    %p81 = scmp.eq.s32.totalorder %s19, 1
    %p82 = por %p80, %p81
    %p84 = scmp.ne.s32.totalorder %s67, %s83
    %p85 = scmp.eq.s32.totalorder %s19, 0
    %p86 = por %p84, %p85
    %s87 = ssub.s32 %s20, %s32
    %p88 = scmp.eq.s32.totalorder %s87, 0
    %s90 = sadd.s32 %s89, 1
    %s91 = scalar_select %p88, %s89, %s90
    %p94 = pneg %p88
    %p95 = scmp.eq.s32.totalorder %s13, 1
    %p96 = por %p94, %p95
    %p97 = scmp.ne.s32.totalorder %s89, %s92
    %p98 = scmp.eq.s32.totalorder %s13, 0
    %p99 = por %p97, %p98
    %p100 = scmp.ne.s32.totalorder %s89, %s92
    %p101 = scmp.eq.s32.totalorder %s18, 1
    %p102 = por %p100, %p101
    %p103 = scmp.ne.s32.totalorder %s92, %s93
    %p104 = scmp.eq.s32.totalorder %s18, 0
    %p105 = por %p103, %p104
    %p106 = scmp.ne.s32.totalorder %s92, %s93
    %p107 = scmp.eq.s32.totalorder %s19, 1
    %p108 = por %p106, %p107
    %p110 = scmp.ne.s32.totalorder %s93, %s109
    %p111 = scmp.eq.s32.totalorder %s19, 0
    %p112 = por %p110, %p111
    %s114 = sadd.s32 %s113, 1
    %p117 = scmp.eq.s32.totalorder %s13, 1
    %p118 = scmp.ne.s32.totalorder %s113, %s115
    %p119 = scmp.eq.s32.totalorder %s13, 0
    %p120 = por %p118, %p119
    %p121 = scmp.ne.s32.totalorder %s113, %s115
    %p122 = scmp.eq.s32.totalorder %s18, 1
    %p123 = por %p121, %p122
    %p124 = scmp.ne.s32.totalorder %s115, %s116
    %p125 = scmp.eq.s32.totalorder %s18, 0
    %p126 = por %p124, %p125
    %p127 = scmp.ne.s32.totalorder %s115, %s116
    %p128 = scmp.eq.s32.totalorder %s19, 1
    %p129 = por %p127, %p128
    %p131 = scmp.ne.s32.totalorder %s116, %s130
    %p132 = scmp.eq.s32.totalorder %s19, 0
    %p133 = por %p131, %p132
    %s135 = sadd.s32 %s134, 1
    %p138 = scmp.eq.s32.totalorder %s13, 1
    %p139 = scmp.ne.s32.totalorder %s134, %s136
    %p140 = scmp.eq.s32.totalorder %s13, 0
    %p141 = por %p139, %p140
    %p142 = scmp.ne.s32.totalorder %s134, %s136
    %p143 = scmp.eq.s32.totalorder %s18, 1
    %p144 = por %p142, %p143
    %p145 = scmp.ne.s32.totalorder %s136, %s137
    %p146 = scmp.eq.s32.totalorder %s18, 0
    %p147 = por %p145, %p146
    %p148 = scmp.ne.s32.totalorder %s136, %s137
    %p149 = scmp.eq.s32.totalorder %s19, 1
    %p150 = por %p148, %p149
    %p152 = scmp.ne.s32.totalorder %s137, %s151
    %p153 = scmp.eq.s32.totalorder %s19, 0
    %p154 = por %p152, %p153
    %s155 = ssub.s32 %s20, %s32
    %p156 = scmp.eq.s32.totalorder %s155, 0
    %s158 = sadd.s32 %s157, 1
    %s159 = scalar_select %p156, %s157, %s158
    %p162 = pneg %p156
    %p163 = scmp.eq.s32.totalorder %s13, 1
    %p164 = por %p162, %p163
    %p165 = scmp.ne.s32.totalorder %s157, %s160
    %p166 = scmp.eq.s32.totalorder %s13, 0
    %p167 = por %p165, %p166
    %p168 = scmp.ne.s32.totalorder %s157, %s160
    %p169 = scmp.eq.s32.totalorder %s18, 1
    %p170 = por %p168, %p169
    %p171 = scmp.ne.s32.totalorder %s160, %s161
    %p172 = scmp.eq.s32.totalorder %s18, 0
    %p173 = por %p171, %p172
    %p174 = scmp.ne.s32.totalorder %s160, %s161
    %p175 = scmp.eq.s32.totalorder %s19, 1
    %p176 = por %p174, %p175
    %p178 = scmp.ne.s32.totalorder %s161, %s177
    %p179 = scmp.eq.s32.totalorder %s19, 0
    %p180 = por %p178, %p179
    %s181 = ssub.s32 %s20, %s32
    %p182 = scmp.eq.s32.totalorder %s181, 0
    %s184 = sadd.s32 %s183, 1
    %s185 = scalar_select %p182, %s183, %s184
    %p188 = pneg %p182
    %p189 = scmp.eq.s32.totalorder %s13, 1
    %p190 = por %p188, %p189
    %p191 = scmp.ne.s32.totalorder %s183, %s186
    %p192 = scmp.eq.s32.totalorder %s13, 0
    %p193 = por %p191, %p192
    %p194 = scmp.ne.s32.totalorder %s183, %s186
    %p195 = scmp.eq.s32.totalorder %s18, 1
    %p196 = por %p194, %p195
    %p197 = scmp.ne.s32.totalorder %s186, %s187
    %p198 = scmp.eq.s32.totalorder %s18, 0
    %p199 = por %p197, %p198
    %p200 = scmp.ne.s32.totalorder %s186, %s187
    %p201 = scmp.eq.s32.totalorder %s19, 1
    %p202 = por %p200, %p201
    %p204 = scmp.ne.s32.totalorder %s187, %s203
    %p205 = scmp.eq.s32.totalorder %s19, 0
    %p206 = por %p204, %p205
    %p207 = scmp.le.s32.totalorder 1, %s13
    %p208 = scmp.lt.s32.totalorder %s13, 3
    %p209 = pnand %p207, %p208
    %p210 = pneg %p209
    // Predicated region
    $region9: #{simple_transformer_forward.13} parent=5 // pred_check
      _
    $region10: #{simple_transformer_forward.13} parent=5 // pred_check_branch
      %212 = sbr.rel (%p209) target = $region12
    $region11: #{simple_transformer_forward.13} parent=5 // pred_region
      %s213 = ssub.s32 %s13, 1
      // Predicated region
      $region13: #{simple_transformer_forward.13} parent=11 // pred_check
        %p214 = pneg %p79
      $region14: #{simple_transformer_forward.13} parent=11 // pred_check_branch
        %216 = sbr.rel (%p214) target = $region16
      $region15: #{simple_transformer_forward.13} parent=11 // pred_region
        %s217 = smul.u32 4, %s23
        %p218 = scmp.lt.s32.totalorder %s217, 3
        %s219 = scalar_select %p218, %s217, 3
        %s220 = smul.addr %s219, 4
        %s221 = scalar_lea.vmem %s1, %s220
        %s222 = smul.u32 4, %s23
      $region16: #{simple_transformer_forward.13} parent=11 // pred_fallthru
        _
      // Predicated region
      $region17: #{simple_transformer_forward.13} parent=11 // pred_check
        %p223 = pneg %p126
      $region18: #{simple_transformer_forward.13} parent=11 // pred_check_branch
        %225 = sbr.rel (%p223) target = $region20
      $region19: #{simple_transformer_forward.13} parent=11 // pred_region
        _
      $region20: #{simple_transformer_forward.13} parent=11 // pred_fallthru
        _
      // Predicated region
      $region21: #{simple_transformer_forward.13} parent=11 // pred_check
        %p226 = pneg %p147
      $region22: #{simple_transformer_forward.13} parent=11 // pred_check_branch
        %228 = sbr.rel (%p226) target = $region24
      $region23: #{simple_transformer_forward.13} parent=11 // pred_region
        _
      $region24: #{simple_transformer_forward.13} parent=11 // pred_fallthru
        _
    $region12: #{simple_transformer_forward.13} parent=5 // pred_fallthru
      _
    %p229 = scmp.lt.s32.totalorder %s13, 2
    // Predicated region
    $region25: #{simple_transformer_forward.13} parent=5 // pred_check
      %p230 = pneg %p229
    $region26: #{simple_transformer_forward.13} parent=5 // pred_check_branch
      %232 = sbr.rel (%p230) target = $region28
    $region27: #{simple_transformer_forward.13} parent=5 // pred_region
      // Predicated region
      $region29: #{simple_transformer_forward.13} parent=27 // pred_check
        %p233 = pneg %p47
      $region30: #{simple_transformer_forward.13} parent=27 // pred_check_branch
        %235 = sbr.rel (%p233) target = $region32
      $region31: #{simple_transformer_forward.13} parent=27 // pred_region
        %p236 = scmp.lt.s32.totalorder %s20, 1
        %s237 = scalar_select %p236, %s20, 1
        %p238 = scmp.lt.s32.totalorder %s21, 0
        %s239 = scalar_select %p238, %s21, 0
        %s240 = sadd.s32 %s239, %s237
        %s241 = smul.addr %s240, 4
        %s242 = scalar_lea.vmem %s0, %s241
      $region32: #{simple_transformer_forward.13} parent=27 // pred_fallthru
        _
      // Predicated region
      $region33: #{simple_transformer_forward.13} parent=27 // pred_check
        %p243 = pneg %p99
      $region34: #{simple_transformer_forward.13} parent=27 // pred_check_branch
        %245 = sbr.rel (%p243) target = $region36
      $region35: #{simple_transformer_forward.13} parent=27 // pred_region
        %p246 = scmp.lt.s32.totalorder %s20, 1
        %s247 = scalar_select %p246, %s20, 1
        %s248 = smul.addr %s247, 8
        %s249 = scalar_lea.vmem %s2, %s248
      $region36: #{simple_transformer_forward.13} parent=27 // pred_fallthru
        _
    $region28: #{simple_transformer_forward.13} parent=5 // pred_fallthru
      _
    %p250 = scmp.le.s32.totalorder 1, %s13
    %p251 = scmp.lt.s32.totalorder %s13, 3
    %p252 = pnand %p250, %p251
    %p253 = pneg %p252
    // Predicated region
    $region37: #{simple_transformer_forward.13} parent=5 // pred_check
      _
    $region38: #{simple_transformer_forward.13} parent=5 // pred_check_branch
      %255 = sbr.rel (%p252) target = $region40
    $region39: #{simple_transformer_forward.13} parent=5 // pred_region
      %s256 = ssub.s32 %s13, 1
      %p257 = scmp.lt.s32.totalorder %s22, 1
      %s258 = scalar_select %p257, %s22, 1
      %p259 = scmp.lt.s32.totalorder %s23, 0
      %s260 = scalar_select %p259, %s23, 0
      %s261 = sadd.s32 %s260, %s258
      %s262 = smul.addr %s261, 4
      %s263 = scalar_lea.vmem %s0, %s262
      %p264 = pneg %p53
      %p265 = pneg %p50
      %s266 = smul.u32 4, %s23
      %p267 = scmp.lt.s32.totalorder %s266, 3
      %s268 = scalar_select %p267, %s266, 3
      %s269 = smul.addr %s268, 4
      %s270 = scalar_lea.vmem %s1, %s269
      %p271 = pneg %p79
      %p272 = pneg %p76
      %p273 = scmp.lt.s32.totalorder %s22, 1
      %s274 = scalar_select %p273, %s22, 1
      %s275 = smul.addr %s274, 8
      %s276 = scalar_lea.vmem %s2, %s275
      %p277 = pneg %p105
      %p278 = pneg %p102
      %p279 = pneg %p126
      %p280 = pneg %p123
      %p281 = pneg %p147
      %p282 = pneg %p144
      %p283 = pneg %p173
      %p284 = pneg %p170
      %p285 = scmp.lt.s32.totalorder %s22, 1
      %s286 = scalar_select %p285, %s22, 1
      %s287 = smul.addr %s286, 8
      %s288 = scalar_lea.vmem %s5, %s287
      %p289 = pneg %p199
      %p290 = pneg %p196
      %p291 = scmp.lt.s32.totalorder %s22, 1
      %s292 = scalar_select %p291, %s22, 1
      %s293 = smul.addr %s292, 4
      %s294 = scalar_lea.vmem %s6, %s293
      %p295 = scmp.lt.s32.totalorder %s22, 1
      %s296 = scalar_select %p295, %s22, 1
      %p297 = scmp.lt.s32.totalorder %s23, 0
      %s298 = scalar_select %p297, %s23, 0
      %s299 = sadd.s32 %s298, %s296
      %s300 = smul.addr %s299, 4
      %s301 = scalar_lea.vmem %s0, %s300
      %s302 = smul.u32 4, %s23
      %p303 = scmp.lt.s32.totalorder %s302, 3
      %s304 = scalar_select %p303, %s302, 3
      %s305 = smul.addr %s304, 4
      %s306 = scalar_lea.vmem %s1, %s305
      %s307 = smul.u32 4, %s23
      %p308 = scmp.lt.s32.totalorder %s22, 1
      %s309 = scalar_select %p308, %s22, 1
      %s310 = smul.addr %s309, 8
      %s311 = scalar_lea.vmem %s2, %s310
      %p312 = scmp.lt.s32.totalorder %s22, 1
      %s313 = scalar_select %p312, %s22, 1
      %s314 = smul.addr %s313, 8
      %s315 = scalar_lea.vmem %s5, %s314
      %p316 = scmp.lt.s32.totalorder %s22, 1
      %s317 = scalar_select %p316, %s22, 1
      %s318 = smul.addr %s317, 4
      %s319 = scalar_lea.vmem %s6, %s318
      %p321 = scmp.eq.s32.totalorder %s23, 0
      // Predicated region
      $region41: #{simple_transformer_forward.13} parent=39 // pred_check
        %p322 = pneg %p321
      $region42: #{simple_transformer_forward.13} parent=39 // pred_check_branch
        %324 = sbr.rel (%p322) target = $region44
      $region43: #{simple_transformer_forward.13} parent=39 // pred_region
        %vm325 = vcmask 261120
        %326 = vst.msk [vmem:[#allocation2] sm:$0xff] %vm325, 0.0
      $region44: #{simple_transformer_forward.13} parent=39 // pred_fallthru
        _
      %v327 = vld [vmem:[#allocation2] sm:$0xff]
      %v328 = vld [vmem:[%s301] sm:$0xf]
      %v329 = vld [vmem:[%s306] sm:$0xf]
      %v330 = vld [vmem:[%s306 + $0x4] sm:$0xf]
      %v331 = vld [vmem:[%s306 + $0x8] sm:$0xf]
      %v332 = vld [vmem:[%s306 + $0xc] sm:$0xf]
      %v337 = vunpack.c.l.b16 %v329
      %v338 = vunpack.c.l.b16 %v330
      %v339 = vunpack.c.l.b16 %v331
      %v340 = vunpack.c.l.b16 %v332
      %v341 = vpack.c.b16 %v338, %v337
      %v342 = vpack.c.b16 %v340, %v339
      %vm345 = vcmask 261120
      %v347 = vsel %vm345, %v328, 0
      %349 = vmatprep.subr.bf16.mxu0 0
      %350 = vmatpush1.bf16.msra.mxu0 %v341
      %351 = vmatprep.subr.bf16.mxu0 0
      %352 = vmatpush1.bf16.msra.mxu0 %v342
      %353 = vmatprep.subr.bf16.mxu0 0
      %354 = vmatpush1.bf16.msra.mxu0 0
      %355 = vmatprep.subr.bf16.mxu0 0
      %356 = vmatpush1.bf16.msra.mxu0 0
      %357 = vmatprep.subr.bf16.mxu0 0
      %358 = vmatpush1.bf16.msra.mxu0 0
      %359 = vmatprep.subr.bf16.mxu0 0
      %360 = vmatpush1.bf16.msra.mxu0 0
      %361 = vmatprep.subr.bf16.mxu0 0
      %362 = vmatpush1.bf16.msra.mxu0 0
      %363 = vmatprep.subr.bf16.mxu0 0
      %364 = vmatpush1.bf16.msra.mxu0 0
      %365 = vmatprep.subr.bf16.mxu0 0
      %366 = vmatpush1.bf16.msra.mxu0 0
      %367 = vmatprep.subr.bf16.mxu0 0
      %368 = vmatpush1.bf16.msra.mxu0 0
      %369 = vmatprep.subr.bf16.mxu0 0
      %370 = vmatpush1.bf16.msra.mxu0 0
      %371 = vmatprep.subr.bf16.mxu0 0
      %372 = vmatpush1.bf16.msra.mxu0 0
      %373 = vmatprep.subr.bf16.mxu0 0
      %374 = vmatpush1.bf16.msra.mxu0 0
      %375 = vmatprep.subr.bf16.mxu0 0
      %376 = vmatpush1.bf16.msra.mxu0 0
      %377 = vmatprep.subr.bf16.mxu0 0
      %378 = vmatpush1.bf16.msra.mxu0 0
      %379 = vmatprep.subr.bf16.mxu0 0
      %380 = vmatpush1.bf16.msra.mxu0 0
      %381 = vmatprep.mubr.bf16.mxu0 0
      %382 = vmatmul.mubr.bf16.gmra.mrb[0].mxu0 %v347
      %v383 = vpop.f32.mrb[0].mxu0
      %v384 = vadd.f32 0.0, %v383
      %v385 = vpop.f32.mrb[0].mxu0
      %v386 = vpop.f32.mrb[0].mxu0
      %v387 = vpop.f32.mrb[0].mxu0
      %388 = vdwg.mxu0
      %v389 = vadd.f32 %v327, %v384
      %390 = vst.msk [vmem:[#allocation2] sm:$0xff] %vm345, %v389
      // Predicated region
      $region45: #{simple_transformer_forward.13} parent=39 // pred_check
        %p391 = pneg %p321
      $region46: #{simple_transformer_forward.13} parent=39 // pred_check_branch
        %393 = sbr.rel (%p391) target = $region48
      $region47: #{simple_transformer_forward.13} parent=39 // pred_region
        %v394 = vld [vmem:[#allocation2] sm:$0xff]
        %v395 = vld [vmem:[%s311] sm:$0xff]
        %v396 = vadd.f32 %v394, %v395
        %v397 = vsel %vm345, %v396, 0.0
        %398 = vadd.xlane.f32.xlu0 %v397
        %v399 = vpop.xlane.xlu0 %398
        %v400 = vrcp.pop 32.0
        %v401 = vmul.f32 %v399, %v400
        %v402 = vsub.f32 %v396, %v401
        %v403 = vmul.f32 %v402, %v402
        %v404 = vsel %vm345, %v403, 0.0
        %405 = vadd.xlane.f32.xlu0 %v404
        %v406 = vpop.xlane.xlu0 %405
        %v407 = vmul.f32 %v406, %v400
        %v408 = vadd.f32 %v407, 1e-05
        %v409 = vrsqrt.pop %v408
        %v410 = vmul.f32 %v402, %v409
        %v411 = vld [vmem:[%s3] sm:$0x1]
        %v413 = vlaneseq
        %v414 = vshrl.u32 %v413, 7
        %v415 = vsub.s32 0, %v414
        %v416 = vrot.slane %v411, %v415
        %v418 = vmul.f32 %v410, %v416
        %v419 = vld [vmem:[%s4] sm:$0x1]
        %v421 = vlaneseq
        %v422 = vshrl.u32 %v421, 7
        %v423 = vsub.s32 0, %v422
        %v424 = vrot.slane %v419, %v423
        %v426 = vadd.f32 %v418, %v424
        %427 = vst.msk [vmem:[%s315] sm:$0xff] %vm345, %v426
        %v428 = vpack.c.bf16 %v426, %v426
        %vm429 = vcmask 257024
        %430 = vst.msk [vmem:[%s319] sm:$0xf] %vm429, %v428
      $region48: #{simple_transformer_forward.13} parent=39 // pred_fallthru
        _
      %p431 = scmp.lt.s32.totalorder %s22, 1
      %s432 = scalar_select %p431, %s22, 1
      %s433 = smul.addr %s432, 8
      %s434 = scalar_lea.vmem %s5, %s433
      %p435 = scmp.lt.s32.totalorder %s22, 1
      %s436 = scalar_select %p435, %s22, 1
      %s437 = smul.addr %s436, 4
      %s438 = scalar_lea.vmem %s6, %s437
      // Predicated region
      $region49: #{simple_transformer_forward.13} parent=39 // pred_check
        %p439 = pneg %p170
      $region50: #{simple_transformer_forward.13} parent=39 // pred_check_branch
        %441 = sbr.rel (%p439) target = $region52
      $region51: #{simple_transformer_forward.13} parent=39 // pred_region
        _
      $region52: #{simple_transformer_forward.13} parent=39 // pred_fallthru
        _
      // Predicated region
      $region53: #{simple_transformer_forward.13} parent=39 // pred_check
        %p442 = pneg %p196
      $region54: #{simple_transformer_forward.13} parent=39 // pred_check_branch
        %444 = sbr.rel (%p442) target = $region56
      $region55: #{simple_transformer_forward.13} parent=39 // pred_region
        _
      $region56: #{simple_transformer_forward.13} parent=39 // pred_fallthru
        _
    $region40: #{simple_transformer_forward.13} parent=5 // pred_fallthru
      _
    %p445 = scmp.le.s32.totalorder 2, %s13
    // Predicated region
    $region57: #{simple_transformer_forward.13} parent=5 // pred_check
      %p446 = pneg %p445
    $region58: #{simple_transformer_forward.13} parent=5 // pred_check_branch
      %448 = sbr.rel (%p446) target = $region60
    $region59: #{simple_transformer_forward.13} parent=5 // pred_region
      %s449 = ssub.s32 %s13, 2
      // Predicated region
      $region61: #{simple_transformer_forward.13} parent=59 // pred_check
        %p450 = pneg %p176
      $region62: #{simple_transformer_forward.13} parent=59 // pred_check_branch
        %452 = sbr.rel (%p450) target = $region64
      $region63: #{simple_transformer_forward.13} parent=59 // pred_region
        %p453 = scmp.lt.s32.totalorder %s24, 1
        %s454 = scalar_select %p453, %s24, 1
        %s455 = smul.addr %s454, 8
        %s456 = scalar_lea.vmem %s5, %s455
      $region64: #{simple_transformer_forward.13} parent=59 // pred_fallthru
        _
      // Predicated region
      $region65: #{simple_transformer_forward.13} parent=59 // pred_check
        %p457 = pneg %p202
      $region66: #{simple_transformer_forward.13} parent=59 // pred_check_branch
        %459 = sbr.rel (%p457) target = $region68
      $region67: #{simple_transformer_forward.13} parent=59 // pred_region
        %p460 = scmp.lt.s32.totalorder %s24, 1
        %s461 = scalar_select %p460, %s24, 1
        %s462 = smul.addr %s461, 4
        %s463 = scalar_lea.vmem %s6, %s462
      $region68: #{simple_transformer_forward.13} parent=59 // pred_fallthru
        _
    $region60: #{simple_transformer_forward.13} parent=5 // pred_fallthru
      _
  $region6: #{simple_transformer_forward.13} parent=0 // loop_footer
    %s17 = sadd.s32 1, %s13
  $region7: #{simple_transformer_forward.13} parent=0 // loop_footer_branch
    %12 = sbr.rel target = $region3
  $region8: #{simple_transformer_forward.13} parent=0 // loop_exit
    _

// kernel: simple_transformer_forward.12
$region0: #{simple_transformer_forward.12}
  #allocation0 [shape = 'u32[]', space=smem, size = 0x4, offset = 0x4, fixed_abs, tag = 'smem constant byte address 0x4 - core index']
  #allocation1 [shape = 'u32[144,128]{1,0:T(1,128)}', space=vmem, size = 0x12000, scoped, tag = 'internal scratch']
  %s0 = inlined_call_operand.vmem [shape: bf16[2,8,96], index: 0, kind: input, shape index: {}]
  %s1 = inlined_call_operand.vmem [shape: bf16[2,8,32], index: 1, kind: output, shape index: {}]
  %s2 = sld [smem:[#allocation0]]
  $region37: #{simple_transformer_forward.12} parent=0
    _
  %s4 = ssub.s32 1, %s2
  %s5 = scalar_select 0, %s4, %s2
  loop: start=0, step=1, limit=4
  $region2: #{simple_transformer_forward.12} parent=0 // loop_pre_header
    _
  $region3: #{simple_transformer_forward.12} parent=0 // loop_header
    %s7 = sphi 0, %s11
    %p8 = scmp.ge.s32.totalorder %s7, 4
    %s17 = sphi 0, %s19
    %s20 = sphi 0, %s17
    %s21 = sphi 0, %s20
    %s37 = sphi 0, %s21
    %s43 = sphi 0, %s45
    %s46 = sphi 0, %s43
    %s47 = sphi 0, %s46
    %s63 = sphi 0, %s47
  $region4: #{simple_transformer_forward.12} parent=0 // loop_header_branch
    %10 = sbr.rel (%p8) target = $region8
  $region5: #{simple_transformer_forward.12} parent=0 // loop_body
    %s12 = ssub.s32 %s7, 1
    %s13 = ssub.s32 %s7, 2
    %s14 = sadd.s32 %s7, 1
    %s15 = ssub.s32 %s7, %s14
    %p16 = scmp.eq.s32.totalorder %s15, 0
    %s18 = sadd.s32 %s17, 1
    %s19 = scalar_select %p16, %s17, %s18
    %p22 = pneg %p16
    %p23 = scmp.eq.s32.totalorder %s7, 1
    %p24 = por %p22, %p23
    %p25 = scmp.ne.s32.totalorder %s17, %s20
    %p26 = scmp.eq.s32.totalorder %s7, 0
    %p27 = por %p25, %p26
    %p28 = scmp.ne.s32.totalorder %s17, %s20
    %p29 = scmp.eq.s32.totalorder %s12, 1
    %p30 = por %p28, %p29
    %p31 = scmp.ne.s32.totalorder %s20, %s21
    %p32 = scmp.eq.s32.totalorder %s12, 0
    %p33 = por %p31, %p32
    %p34 = scmp.ne.s32.totalorder %s20, %s21
    %p35 = scmp.eq.s32.totalorder %s13, 1
    %p36 = por %p34, %p35
    %p38 = scmp.ne.s32.totalorder %s21, %s37
    %p39 = scmp.eq.s32.totalorder %s13, 0
    %p40 = por %p38, %p39
    %s41 = ssub.s32 %s7, %s14
    %p42 = scmp.eq.s32.totalorder %s41, 0
    %s44 = sadd.s32 %s43, 1
    %s45 = scalar_select %p42, %s43, %s44
    %p48 = pneg %p42
    %p49 = scmp.eq.s32.totalorder %s7, 1
    %p50 = por %p48, %p49
    %p51 = scmp.ne.s32.totalorder %s43, %s46
    %p52 = scmp.eq.s32.totalorder %s7, 0
    %p53 = por %p51, %p52
    %p54 = scmp.ne.s32.totalorder %s43, %s46
    %p55 = scmp.eq.s32.totalorder %s12, 1
    %p56 = por %p54, %p55
    %p57 = scmp.ne.s32.totalorder %s46, %s47
    %p58 = scmp.eq.s32.totalorder %s12, 0
    %p59 = por %p57, %p58
    %p60 = scmp.ne.s32.totalorder %s46, %s47
    %p61 = scmp.eq.s32.totalorder %s13, 1
    %p62 = por %p60, %p61
    %p64 = scmp.ne.s32.totalorder %s47, %s63
    %p65 = scmp.eq.s32.totalorder %s13, 0
    %p66 = por %p64, %p65
    %p67 = scmp.le.s32.totalorder 1, %s7
    %p68 = scmp.lt.s32.totalorder %s7, 3
    %p69 = pnand %p67, %p68
    %p70 = pneg %p69
    // Predicated region
    $region9: #{simple_transformer_forward.12} parent=5 // pred_check
      _
    $region10: #{simple_transformer_forward.12} parent=5 // pred_check_branch
      %72 = sbr.rel (%p69) target = $region12
    $region11: #{simple_transformer_forward.12} parent=5 // pred_region
      %s73 = ssub.s32 %s7, 1
    $region12: #{simple_transformer_forward.12} parent=5 // pred_fallthru
      _
    %p74 = scmp.lt.s32.totalorder %s7, 2
    // Predicated region
    $region13: #{simple_transformer_forward.12} parent=5 // pred_check
      %p75 = pneg %p74
    $region14: #{simple_transformer_forward.12} parent=5 // pred_check_branch
      %77 = sbr.rel (%p75) target = $region16
    $region15: #{simple_transformer_forward.12} parent=5 // pred_region
      // Predicated region
      $region17: #{simple_transformer_forward.12} parent=15 // pred_check
        %p78 = pneg %p27
      $region18: #{simple_transformer_forward.12} parent=15 // pred_check_branch
        %80 = sbr.rel (%p78) target = $region20
      $region19: #{simple_transformer_forward.12} parent=15 // pred_region
        %p81 = scmp.lt.s32.totalorder %s7, 1
        %s82 = scalar_select %p81, %s7, 1
        %s83 = smul.addr %s82, 4
        %s84 = scalar_lea.vmem %s0, %s83
      $region20: #{simple_transformer_forward.12} parent=15 // pred_fallthru
        _
    $region16: #{simple_transformer_forward.12} parent=5 // pred_fallthru
      _
    %p85 = scmp.le.s32.totalorder 1, %s7
    %p86 = scmp.lt.s32.totalorder %s7, 3
    %p87 = pnand %p85, %p86
    %p88 = pneg %p87
    // Predicated region
    $region21: #{simple_transformer_forward.12} parent=5 // pred_check
      _
    $region22: #{simple_transformer_forward.12} parent=5 // pred_check_branch
      %90 = sbr.rel (%p87) target = $region24
    $region23: #{simple_transformer_forward.12} parent=5 // pred_region
      %s91 = ssub.s32 %s7, 1
      %p92 = scmp.lt.s32.totalorder %s12, 1
      %s93 = scalar_select %p92, %s12, 1
      %s94 = smul.addr %s93, 4
      %s95 = scalar_lea.vmem %s0, %s94
      %p96 = pneg %p33
      %p97 = pneg %p30
      %p98 = pneg %p59
      %p99 = pneg %p56
      %p100 = scmp.lt.s32.totalorder %s12, 1
      %s101 = scalar_select %p100, %s12, 1
      %s102 = smul.addr %s101, 4
      %s103 = scalar_lea.vmem %s1, %s102
      %p104 = scmp.lt.s32.totalorder %s12, 1
      %s105 = scalar_select %p104, %s12, 1
      %s106 = smul.addr %s105, 4
      %s107 = scalar_lea.vmem %s0, %s106
      %p108 = scmp.lt.s32.totalorder %s12, 1
      %s109 = scalar_select %p108, %s12, 1
      %s110 = smul.addr %s109, 4
      %s111 = scalar_lea.vmem %s1, %s110
      %v113 = vld [vmem:[%s107] sm:$0xf]
      %v114 = vlaneseq
      %v115 = vshrl.u32 %v114, 7
      %v116 = vlaneseq
      %v117 = vand.u32 %v116, 127
      %vm118 = vcmp.le.s32.totalorder %v117, %v115
      %v120 = vunpack.c.l.b16 %v113
      %v121 = vpack.c.b16 %v120, %v120
      %122 = vrot.lane.b32.xlu0 %v121, 96
      %v123 = vpop.permute.xlu0 %122
      %vm124 = vcmask 64512
      %v126 = vsel %vm124, %v113, 0
      %v129 = vsel %vm124, %v123, 0
      %131 = vmatprep.subr.bf16.mxu0 0
      %132 = vmatpush1.bf16.xpose.msra.mxu0 %v129
      %133 = vmatprep.subr.bf16.mxu0 0
      %134 = vmatpush1.bf16.xpose.msra.mxu0 0
      %135 = vmatprep.subr.bf16.mxu0 0
      %136 = vmatpush1.bf16.xpose.msra.mxu0 0
      %137 = vmatprep.subr.bf16.mxu0 0
      %138 = vmatpush1.bf16.xpose.msra.mxu0 0
      %139 = vmatprep.subr.bf16.mxu0 0
      %140 = vmatpush1.bf16.xpose.msra.mxu0 0
      %141 = vmatprep.subr.bf16.mxu0 0
      %142 = vmatpush1.bf16.xpose.msra.mxu0 0
      %143 = vmatprep.subr.bf16.mxu0 0
      %144 = vmatpush1.bf16.xpose.msra.mxu0 0
      %145 = vmatprep.subr.bf16.mxu0 0
      %146 = vmatpush1.bf16.xpose.msra.mxu0 0
      %147 = vmatprep.subr.bf16.mxu0 0
      %148 = vmatpush1.bf16.xpose.msra.mxu0 0
      %149 = vmatprep.subr.bf16.mxu0 0
      %150 = vmatpush1.bf16.xpose.msra.mxu0 0
      %151 = vmatprep.subr.bf16.mxu0 0
      %152 = vmatpush1.bf16.xpose.msra.mxu0 0
      %153 = vmatprep.subr.bf16.mxu0 0
      %154 = vmatpush1.bf16.xpose.msra.mxu0 0
      %155 = vmatprep.subr.bf16.mxu0 0
      %156 = vmatpush1.bf16.xpose.msra.mxu0 0
      %157 = vmatprep.subr.bf16.mxu0 0
      %158 = vmatpush1.bf16.xpose.msra.mxu0 0
      %159 = vmatprep.subr.bf16.mxu0 0
      %160 = vmatpush1.bf16.xpose.msra.mxu0 0
      %161 = vmatprep.subr.bf16.mxu0 0
      %162 = vmatpush1.bf16.xpose.msra.mxu0 0
      %163 = vmatprep.mubr.bf16.mxu0 0
      %164 = vmatmul.mubr.bf16.gmra.mrb[0].mxu0 %v126
      %v165 = vpop.f32.mrb[0].mxu0
      %v166 = vadd.f32 0.0, %v165
      %v167 = vpop.f32.mrb[0].mxu0
      %v168 = vpop.f32.mrb[0].mxu0
      %v169 = vpop.f32.mrb[0].mxu0
      %170 = vdwg.mxu0
      %v171 = vmul.f32 %v166, 0.35355338
      %v172 = vsel %vm118, %v171, -1e+30
      %v173 = vsel %vm124, %v172, -inf
      %174 = vmax.xlane.f32.xlu0 %v173
      %v175 = vpop.xlane.xlu0 %174
      %v176 = vsub.f32 %v172, %v175
      %v177 = vmul.f32 %v176, 1.442695
      %v178 = vpow.pop %v177
      %v179 = vsel %vm124, %v178, 0.0
      %180 = vadd.xlane.f32.xlu0 %v179
      %v181 = vpop.xlane.xlu0 %180
      %v182 = vrcp.pop %v181
      %v183 = vmul.f32 %v178, %v182
      %v184 = vpack.c.bf16 %v183, %v183
      %185 = vrot.lane.b32.xlu0 %v121, 64
      %v186 = vpop.permute.xlu0 %185
      %v188 = vsel %vm124, %v184, 0
      %vm190 = vcmask 1043456
      %v192 = vsel %vm190, %v186, 0
      %194 = vmatprep.subr.bf16.mxu0 0
      %195 = vmatpush1.bf16.msra.mxu0 %v192
      %196 = vmatprep.subr.bf16.mxu0 0
      %197 = vmatpush1.bf16.msra.mxu0 0
      %198 = vmatprep.subr.bf16.mxu0 0
      %199 = vmatpush1.bf16.msra.mxu0 0
      %200 = vmatprep.subr.bf16.mxu0 0
      %201 = vmatpush1.bf16.msra.mxu0 0
      %202 = vmatprep.subr.bf16.mxu0 0
      %203 = vmatpush1.bf16.msra.mxu0 0
      %204 = vmatprep.subr.bf16.mxu0 0
      %205 = vmatpush1.bf16.msra.mxu0 0
      %206 = vmatprep.subr.bf16.mxu0 0
      %207 = vmatpush1.bf16.msra.mxu0 0
      %208 = vmatprep.subr.bf16.mxu0 0
      %209 = vmatpush1.bf16.msra.mxu0 0
      %210 = vmatprep.subr.bf16.mxu0 0
      %211 = vmatpush1.bf16.msra.mxu0 0
      %212 = vmatprep.subr.bf16.mxu0 0
      %213 = vmatpush1.bf16.msra.mxu0 0
      %214 = vmatprep.subr.bf16.mxu0 0
      %215 = vmatpush1.bf16.msra.mxu0 0
      %216 = vmatprep.subr.bf16.mxu0 0
      %217 = vmatpush1.bf16.msra.mxu0 0
      %218 = vmatprep.subr.bf16.mxu0 0
      %219 = vmatpush1.bf16.msra.mxu0 0
      %220 = vmatprep.subr.bf16.mxu0 0
      %221 = vmatpush1.bf16.msra.mxu0 0
      %222 = vmatprep.subr.bf16.mxu0 0
      %223 = vmatpush1.bf16.msra.mxu0 0
      %224 = vmatprep.subr.bf16.mxu0 0
      %225 = vmatpush1.bf16.msra.mxu0 0
      %226 = vmatprep.mubr.bf16.mxu0 0
      %227 = vmatmul.mubr.bf16.gmra.mrb[0].mxu0 %v188
      %v228 = vpop.f32.mrb[0].mxu0
      %v229 = vadd.f32 0.0, %v228
      %v230 = vpop.f32.mrb[0].mxu0
      %v231 = vpop.f32.mrb[0].mxu0
      %v232 = vpop.f32.mrb[0].mxu0
      %233 = vdwg.mxu0
      %234 = vrot.lane.b32.xlu0 %v121, 120
      %v235 = vpop.permute.xlu0 %234
      %236 = vrot.lane.b32.xlu0 %v121, 88
      %v237 = vpop.permute.xlu0 %236
      %v239 = vsel %vm124, %v235, 0
      %v242 = vsel %vm124, %v237, 0
      %244 = vmatprep.subr.bf16.mxu0 0
      %245 = vmatpush1.bf16.xpose.msra.mxu0 %v242
      %246 = vmatprep.subr.bf16.mxu0 0
      %247 = vmatpush1.bf16.xpose.msra.mxu0 0
      %248 = vmatprep.subr.bf16.mxu0 0
      %249 = vmatpush1.bf16.xpose.msra.mxu0 0
      %250 = vmatprep.subr.bf16.mxu0 0
      %251 = vmatpush1.bf16.xpose.msra.mxu0 0
      %252 = vmatprep.subr.bf16.mxu0 0
      %253 = vmatpush1.bf16.xpose.msra.mxu0 0
      %254 = vmatprep.subr.bf16.mxu0 0
      %255 = vmatpush1.bf16.xpose.msra.mxu0 0
      %256 = vmatprep.subr.bf16.mxu0 0
      %257 = vmatpush1.bf16.xpose.msra.mxu0 0
      %258 = vmatprep.subr.bf16.mxu0 0
      %259 = vmatpush1.bf16.xpose.msra.mxu0 0
      %260 = vmatprep.subr.bf16.mxu0 0
      %261 = vmatpush1.bf16.xpose.msra.mxu0 0
      %262 = vmatprep.subr.bf16.mxu0 0
      %263 = vmatpush1.bf16.xpose.msra.mxu0 0
      %264 = vmatprep.subr.bf16.mxu0 0
      %265 = vmatpush1.bf16.xpose.msra.mxu0 0
      %266 = vmatprep.subr.bf16.mxu0 0
      %267 = vmatpush1.bf16.xpose.msra.mxu0 0
      %268 = vmatprep.subr.bf16.mxu0 0
      %269 = vmatpush1.bf16.xpose.msra.mxu0 0
      %270 = vmatprep.subr.bf16.mxu0 0
      %271 = vmatpush1.bf16.xpose.msra.mxu0 0
      %272 = vmatprep.subr.bf16.mxu0 0
      %273 = vmatpush1.bf16.xpose.msra.mxu0 0
      %274 = vmatprep.subr.bf16.mxu0 0
      %275 = vmatpush1.bf16.xpose.msra.mxu0 0
      %276 = vmatprep.mubr.bf16.mxu0 0
      %277 = vmatmul.mubr.bf16.gmra.mrb[0].mxu0 %v239
      %v278 = vpop.f32.mrb[0].mxu0
      %v279 = vadd.f32 0.0, %v278
      %v280 = vpop.f32.mrb[0].mxu0
      %v281 = vpop.f32.mrb[0].mxu0
      %v282 = vpop.f32.mrb[0].mxu0
      %283 = vdwg.mxu0
      %v284 = vmul.f32 %v279, 0.35355338
      %v285 = vsel %vm118, %v284, -1e+30
      %v286 = vsel %vm124, %v285, -inf
      %287 = vmax.xlane.f32.xlu0 %v286
      %v288 = vpop.xlane.xlu0 %287
      %v289 = vsub.f32 %v285, %v288
      %v290 = vmul.f32 %v289, 1.442695
      %v291 = vpow.pop %v290
      %v292 = vsel %vm124, %v291, 0.0
      %293 = vadd.xlane.f32.xlu0 %v292
      %v294 = vpop.xlane.xlu0 %293
      %v295 = vrcp.pop %v294
      %v296 = vmul.f32 %v291, %v295
      %v297 = vpack.c.bf16 %v296, %v296
      %298 = vrot.lane.b32.xlu0 %v121, 56
      %v299 = vpop.permute.xlu0 %298
      %v301 = vsel %vm124, %v297, 0
      %v304 = vsel %vm190, %v299, 0
      %306 = vmatprep.subr.bf16.mxu0 0
      %307 = vmatpush1.bf16.msra.mxu0 %v304
      %308 = vmatprep.subr.bf16.mxu0 0
      %309 = vmatpush1.bf16.msra.mxu0 0
      %310 = vmatprep.subr.bf16.mxu0 0
      %311 = vmatpush1.bf16.msra.mxu0 0
      %312 = vmatprep.subr.bf16.mxu0 0
      %313 = vmatpush1.bf16.msra.mxu0 0
      %314 = vmatprep.subr.bf16.mxu0 0
      %315 = vmatpush1.bf16.msra.mxu0 0
      %316 = vmatprep.subr.bf16.mxu0 0
      %317 = vmatpush1.bf16.msra.mxu0 0
      %318 = vmatprep.subr.bf16.mxu0 0
      %319 = vmatpush1.bf16.msra.mxu0 0
      %320 = vmatprep.subr.bf16.mxu0 0
      %321 = vmatpush1.bf16.msra.mxu0 0
      %322 = vmatprep.subr.bf16.mxu0 0
      %323 = vmatpush1.bf16.msra.mxu0 0
      %324 = vmatprep.subr.bf16.mxu0 0
      %325 = vmatpush1.bf16.msra.mxu0 0
      %326 = vmatprep.subr.bf16.mxu0 0
      %327 = vmatpush1.bf16.msra.mxu0 0
      %328 = vmatprep.subr.bf16.mxu0 0
      %329 = vmatpush1.bf16.msra.mxu0 0
      %330 = vmatprep.subr.bf16.mxu0 0
      %331 = vmatpush1.bf16.msra.mxu0 0
      %332 = vmatprep.subr.bf16.mxu0 0
      %333 = vmatpush1.bf16.msra.mxu0 0
      %334 = vmatprep.subr.bf16.mxu0 0
      %335 = vmatpush1.bf16.msra.mxu0 0
      %336 = vmatprep.subr.bf16.mxu0 0
      %337 = vmatpush1.bf16.msra.mxu0 0
      %338 = vmatprep.mubr.bf16.mxu0 0
      %339 = vmatmul.mubr.bf16.gmra.mrb[0].mxu0 %v301
      %v340 = vpop.f32.mrb[0].mxu0
      %v341 = vadd.f32 0.0, %v340
      %v342 = vpop.f32.mrb[0].mxu0
      %v343 = vpop.f32.mrb[0].mxu0
      %v344 = vpop.f32.mrb[0].mxu0
      %345 = vdwg.mxu0
      %346 = vrot.lane.b32.xlu0 %v121, 112
      %v347 = vpop.permute.xlu0 %346
      %348 = vrot.lane.b32.xlu0 %v121, 80
      %v349 = vpop.permute.xlu0 %348
      %v351 = vsel %vm124, %v347, 0
      %v354 = vsel %vm124, %v349, 0
      %356 = vmatprep.subr.bf16.mxu0 0
      %357 = vmatpush1.bf16.xpose.msra.mxu0 %v354
      %358 = vmatprep.subr.bf16.mxu0 0
      %359 = vmatpush1.bf16.xpose.msra.mxu0 0
      %360 = vmatprep.subr.bf16.mxu0 0
      %361 = vmatpush1.bf16.xpose.msra.mxu0 0
      %362 = vmatprep.subr.bf16.mxu0 0
      %363 = vmatpush1.bf16.xpose.msra.mxu0 0
      %364 = vmatprep.subr.bf16.mxu0 0
      %365 = vmatpush1.bf16.xpose.msra.mxu0 0
      %366 = vmatprep.subr.bf16.mxu0 0
      %367 = vmatpush1.bf16.xpose.msra.mxu0 0
      %368 = vmatprep.subr.bf16.mxu0 0
      %369 = vmatpush1.bf16.xpose.msra.mxu0 0
      %370 = vmatprep.subr.bf16.mxu0 0
      %371 = vmatpush1.bf16.xpose.msra.mxu0 0
      %372 = vmatprep.subr.bf16.mxu0 0
      %373 = vmatpush1.bf16.xpose.msra.mxu0 0
      %374 = vmatprep.subr.bf16.mxu0 0
      %375 = vmatpush1.bf16.xpose.msra.mxu0 0
      %376 = vmatprep.subr.bf16.mxu0 0
      %377 = vmatpush1.bf16.xpose.msra.mxu0 0
      %378 = vmatprep.subr.bf16.mxu0 0
      %379 = vmatpush1.bf16.xpose.msra.mxu0 0
      %380 = vmatprep.subr.bf16.mxu0 0
      %381 = vmatpush1.bf16.xpose.msra.mxu0 0
      %382 = vmatprep.subr.bf16.mxu0 0
      %383 = vmatpush1.bf16.xpose.msra.mxu0 0
      %384 = vmatprep.subr.bf16.mxu0 0
      %385 = vmatpush1.bf16.xpose.msra.mxu0 0
      %386 = vmatprep.subr.bf16.mxu0 0
      %387 = vmatpush1.bf16.xpose.msra.mxu0 0
      %388 = vmatprep.mubr.bf16.mxu0 0
      %389 = vmatmul.mubr.bf16.gmra.mrb[0].mxu0 %v351
      %v390 = vpop.f32.mrb[0].mxu0
      %v391 = vadd.f32 0.0, %v390
      %v392 = vpop.f32.mrb[0].mxu0
      %v393 = vpop.f32.mrb[0].mxu0
      %v394 = vpop.f32.mrb[0].mxu0
      %395 = vdwg.mxu0
      %v396 = vmul.f32 %v391, 0.35355338
      %v397 = vsel %vm118, %v396, -1e+30
      %v398 = vsel %vm124, %v397, -inf
      %399 = vmax.xlane.f32.xlu0 %v398
      %v400 = vpop.xlane.xlu0 %399
      %v401 = vsub.f32 %v397, %v400
      %v402 = vmul.f32 %v401, 1.442695
      %v403 = vpow.pop %v402
      %v404 = vsel %vm124, %v403, 0.0
      %405 = vadd.xlane.f32.xlu0 %v404
      %v406 = vpop.xlane.xlu0 %405
      %v407 = vrcp.pop %v406
      %v408 = vmul.f32 %v403, %v407
      %v409 = vpack.c.bf16 %v408, %v408
      %410 = vrot.lane.b32.xlu0 %v121, 48
      %v411 = vpop.permute.xlu0 %410
      %v413 = vsel %vm124, %v409, 0
      %v416 = vsel %vm190, %v411, 0
      %418 = vmatprep.subr.bf16.mxu0 0
      %419 = vmatpush1.bf16.msra.mxu0 %v416
      %420 = vmatprep.subr.bf16.mxu0 0
      %421 = vmatpush1.bf16.msra.mxu0 0
      %422 = vmatprep.subr.bf16.mxu0 0
      %423 = vmatpush1.bf16.msra.mxu0 0
      %424 = vmatprep.subr.bf16.mxu0 0
      %425 = vmatpush1.bf16.msra.mxu0 0
      %426 = vmatprep.subr.bf16.mxu0 0
      %427 = vmatpush1.bf16.msra.mxu0 0
      %428 = vmatprep.subr.bf16.mxu0 0
      %429 = vmatpush1.bf16.msra.mxu0 0
      %430 = vmatprep.subr.bf16.mxu0 0
      %431 = vmatpush1.bf16.msra.mxu0 0
      %432 = vmatprep.subr.bf16.mxu0 0
      %433 = vmatpush1.bf16.msra.mxu0 0
      %434 = vmatprep.subr.bf16.mxu0 0
      %435 = vmatpush1.bf16.msra.mxu0 0
      %436 = vmatprep.subr.bf16.mxu0 0
      %437 = vmatpush1.bf16.msra.mxu0 0
      %438 = vmatprep.subr.bf16.mxu0 0
      %439 = vmatpush1.bf16.msra.mxu0 0
      %440 = vmatprep.subr.bf16.mxu0 0
      %441 = vmatpush1.bf16.msra.mxu0 0
      %442 = vmatprep.subr.bf16.mxu0 0
      %443 = vmatpush1.bf16.msra.mxu0 0
      %444 = vmatprep.subr.bf16.mxu0 0
      %445 = vmatpush1.bf16.msra.mxu0 0
      %446 = vmatprep.subr.bf16.mxu0 0
      %447 = vmatpush1.bf16.msra.mxu0 0
      %448 = vmatprep.subr.bf16.mxu0 0
      %449 = vmatpush1.bf16.msra.mxu0 0
      %450 = vmatprep.mubr.bf16.mxu0 0
      %451 = vmatmul.mubr.bf16.gmra.mrb[0].mxu0 %v413
      %v452 = vpop.f32.mrb[0].mxu0
      %v453 = vadd.f32 0.0, %v452
      %v454 = vpop.f32.mrb[0].mxu0
      %v455 = vpop.f32.mrb[0].mxu0
      %v456 = vpop.f32.mrb[0].mxu0
      %457 = vdwg.mxu0
      %458 = vrot.lane.b32.xlu0 %v121, 104
      %v459 = vpop.permute.xlu0 %458
      %460 = vrot.lane.b32.xlu0 %v121, 72
      %v461 = vpop.permute.xlu0 %460
      %v463 = vsel %vm124, %v459, 0
      %v466 = vsel %vm124, %v461, 0
      %468 = vmatprep.subr.bf16.mxu0 0
      %469 = vmatpush1.bf16.xpose.msra.mxu0 %v466
      %470 = vmatprep.subr.bf16.mxu0 0
      %471 = vmatpush1.bf16.xpose.msra.mxu0 0
      %472 = vmatprep.subr.bf16.mxu0 0
      %473 = vmatpush1.bf16.xpose.msra.mxu0 0
      %474 = vmatprep.subr.bf16.mxu0 0
      %475 = vmatpush1.bf16.xpose.msra.mxu0 0
      %476 = vmatprep.subr.bf16.mxu0 0
      %477 = vmatpush1.bf16.xpose.msra.mxu0 0
      %478 = vmatprep.subr.bf16.mxu0 0
      %479 = vmatpush1.bf16.xpose.msra.mxu0 0
      %480 = vmatprep.subr.bf16.mxu0 0
      %481 = vmatpush1.bf16.xpose.msra.mxu0 0
      %482 = vmatprep.subr.bf16.mxu0 0
      %483 = vmatpush1.bf16.xpose.msra.mxu0 0
      %484 = vmatprep.subr.bf16.mxu0 0
      %485 = vmatpush1.bf16.xpose.msra.mxu0 0
      %486 = vmatprep.subr.bf16.mxu0 0
      %487 = vmatpush1.bf16.xpose.msra.mxu0 0
      %488 = vmatprep.subr.bf16.mxu0 0
      %489 = vmatpush1.bf16.xpose.msra.mxu0 0
      %490 = vmatprep.subr.bf16.mxu0 0
      %491 = vmatpush1.bf16.xpose.msra.mxu0 0
      %492 = vmatprep.subr.bf16.mxu0 0
      %493 = vmatpush1.bf16.xpose.msra.mxu0 0
      %494 = vmatprep.subr.bf16.mxu0 0
      %495 = vmatpush1.bf16.xpose.msra.mxu0 0
      %496 = vmatprep.subr.bf16.mxu0 0
      %497 = vmatpush1.bf16.xpose.msra.mxu0 0
      %498 = vmatprep.subr.bf16.mxu0 0
      %499 = vmatpush1.bf16.xpose.msra.mxu0 0
      %500 = vmatprep.mubr.bf16.mxu0 0
      %501 = vmatmul.mubr.bf16.gmra.mrb[0].mxu0 %v463
      %v502 = vpop.f32.mrb[0].mxu0
      %v503 = vadd.f32 0.0, %v502
      %v504 = vpop.f32.mrb[0].mxu0
      %v505 = vpop.f32.mrb[0].mxu0
      %v506 = vpop.f32.mrb[0].mxu0
      %507 = vdwg.mxu0
      %v508 = vmul.f32 %v503, 0.35355338
      %v509 = vsel %vm118, %v508, -1e+30
      %v510 = vsel %vm124, %v509, -inf
      %511 = vmax.xlane.f32.xlu0 %v510
      %v512 = vpop.xlane.xlu0 %511
      %v513 = vsub.f32 %v509, %v512
      %v514 = vmul.f32 %v513, 1.442695
      %v515 = vpow.pop %v514
      %v516 = vsel %vm124, %v515, 0.0
      %517 = vadd.xlane.f32.xlu0 %v516
      %v518 = vpop.xlane.xlu0 %517
      %v519 = vrcp.pop %v518
      %v520 = vmul.f32 %v515, %v519
      %v521 = vpack.c.bf16 %v520, %v520
      %522 = vrot.lane.b32.xlu0 %v121, 40
      %v523 = vpop.permute.xlu0 %522
      %v525 = vsel %vm124, %v521, 0
      %v528 = vsel %vm190, %v523, 0
      %530 = vmatprep.subr.bf16.mxu0 0
      %531 = vmatpush1.bf16.msra.mxu0 %v528
      %532 = vmatprep.subr.bf16.mxu0 0
      %533 = vmatpush1.bf16.msra.mxu0 0
      %534 = vmatprep.subr.bf16.mxu0 0
      %535 = vmatpush1.bf16.msra.mxu0 0
      %536 = vmatprep.subr.bf16.mxu0 0
      %537 = vmatpush1.bf16.msra.mxu0 0
      %538 = vmatprep.subr.bf16.mxu0 0
      %539 = vmatpush1.bf16.msra.mxu0 0
      %540 = vmatprep.subr.bf16.mxu0 0
      %541 = vmatpush1.bf16.msra.mxu0 0
      %542 = vmatprep.subr.bf16.mxu0 0
      %543 = vmatpush1.bf16.msra.mxu0 0
      %544 = vmatprep.subr.bf16.mxu0 0
      %545 = vmatpush1.bf16.msra.mxu0 0
      %546 = vmatprep.subr.bf16.mxu0 0
      %547 = vmatpush1.bf16.msra.mxu0 0
      %548 = vmatprep.subr.bf16.mxu0 0
      %549 = vmatpush1.bf16.msra.mxu0 0
      %550 = vmatprep.subr.bf16.mxu0 0
      %551 = vmatpush1.bf16.msra.mxu0 0
      %552 = vmatprep.subr.bf16.mxu0 0
      %553 = vmatpush1.bf16.msra.mxu0 0
      %554 = vmatprep.subr.bf16.mxu0 0
      %555 = vmatpush1.bf16.msra.mxu0 0
      %556 = vmatprep.subr.bf16.mxu0 0
      %557 = vmatpush1.bf16.msra.mxu0 0
      %558 = vmatprep.subr.bf16.mxu0 0
      %559 = vmatpush1.bf16.msra.mxu0 0
      %560 = vmatprep.subr.bf16.mxu0 0
      %561 = vmatpush1.bf16.msra.mxu0 0
      %562 = vmatprep.mubr.bf16.mxu0 0
      %563 = vmatmul.mubr.bf16.gmra.mrb[0].mxu0 %v525
      %v564 = vpop.f32.mrb[0].mxu0
      %v565 = vadd.f32 0.0, %v564
      %v566 = vpop.f32.mrb[0].mxu0
      %v567 = vpop.f32.mrb[0].mxu0
      %v568 = vpop.f32.mrb[0].mxu0
      %569 = vdwg.mxu0
      %571 = vrot.lane.b32.xlu0 %v341, 8
      %v572 = vpop.permute.xlu0 %571
      %575 = vrot.lane.b32.xlu0 %v453, 16
      %v576 = vpop.permute.xlu0 %575
      %579 = vrot.lane.b32.xlu0 %v565, 24
      %v580 = vpop.permute.xlu0 %579
      %v582 = vsel %vm124, %v229, %v572
      %vm583 = vcmask 130048
      %v584 = vsel %vm583, %v582, %v576
      %vm585 = vcmask 195584
      %v586 = vsel %vm585, %v584, %v580
      %v587 = vpack.c.bf16 %v586, %v586
      %vm588 = vcmask 257024
      %589 = vst.msk [vmem:[%s111] sm:$0xf] %vm588, %v587
      %p590 = scmp.lt.s32.totalorder %s12, 1
      %s591 = scalar_select %p590, %s12, 1
      %s592 = smul.addr %s591, 4
      %s593 = scalar_lea.vmem %s1, %s592
      // Predicated region
      $region25: #{simple_transformer_forward.12} parent=23 // pred_check
        %p594 = pneg %p56
      $region26: #{simple_transformer_forward.12} parent=23 // pred_check_branch
        %596 = sbr.rel (%p594) target = $region28
      $region27: #{simple_transformer_forward.12} parent=23 // pred_region
        _
      $region28: #{simple_transformer_forward.12} parent=23 // pred_fallthru
        _
    $region24: #{simple_transformer_forward.12} parent=5 // pred_fallthru
      _
    %p597 = scmp.le.s32.totalorder 2, %s7
    // Predicated region
    $region29: #{simple_transformer_forward.12} parent=5 // pred_check
      %p598 = pneg %p597
    $region30: #{simple_transformer_forward.12} parent=5 // pred_check_branch
      %600 = sbr.rel (%p598) target = $region32
    $region31: #{simple_transformer_forward.12} parent=5 // pred_region
      %s601 = ssub.s32 %s7, 2
      // Predicated region
      $region33: #{simple_transformer_forward.12} parent=31 // pred_check
        %p602 = pneg %p62
      $region34: #{simple_transformer_forward.12} parent=31 // pred_check_branch
        %604 = sbr.rel (%p602) target = $region36
      $region35: #{simple_transformer_forward.12} parent=31 // pred_region
        %p605 = scmp.lt.s32.totalorder %s13, 1
        %s606 = scalar_select %p605, %s13, 1
        %s607 = smul.addr %s606, 4
        %s608 = scalar_lea.vmem %s1, %s607
      $region36: #{simple_transformer_forward.12} parent=31 // pred_fallthru
        _
    $region32: #{simple_transformer_forward.12} parent=5 // pred_fallthru
      _
  $region6: #{simple_transformer_forward.12} parent=0 // loop_footer
    %s11 = sadd.s32 1, %s7
  $region7: #{simple_transformer_forward.12} parent=0 // loop_footer_branch
    %6 = sbr.rel target = $region3
  $region8: #{simple_transformer_forward.12} parent=0 // loop_exit
    _

// kernel: simple_transformer_forward.21
$region0: #{simple_transformer_forward.21}
  #allocation0 [shape = 'u32[]', space=smem, size = 0x4, offset = 0x4, fixed_abs, tag = 'smem constant byte address 0x4 - core index']
  #allocation1 [shape = 'u32[144,128]{1,0:T(1,128)}', space=vmem, size = 0x12000, scoped, tag = 'internal scratch']
  %s0 = inlined_call_operand.vmem [shape: bf16[16,32], index: 0, kind: input, shape index: {}]
  %s1 = inlined_call_operand.vmem [shape: f32[1,32], index: 1, kind: input, shape index: {}]
  %s2 = inlined_call_operand.vmem [shape: f32[1,32], index: 2, kind: input, shape index: {}]
  %s3 = inlined_call_operand.vmem [shape: bf16[32,256], index: 3, kind: input, shape index: {}]
  %s4 = inlined_call_operand.vmem [shape: f32[1,256], index: 4, kind: input, shape index: {}]
  %s5 = inlined_call_operand.hbm [shape: f32[16,256], index: 5, kind: output, shape index: {}]
  %s6 = sld [smem:[#allocation0]]
  $region53: #{simple_transformer_forward.21} parent=0
    _
  %s8 = ssub.s32 1, %s6
  %s9 = scalar_select 0, %s8, %s6
  $region1: #{simple_transformer_forward.21} parent=0
    #allocation2 [shape = 'u8[16384]{0}', space=vmem, size = 0x4000, scoped, tag = 'output window, operand 0']
    #allocation3 [shape = 's32[2]{0}', space=sflag, size = 0x8, scoped, tag = 'scoped memory for simple_transformer_forward.21']
    %10 = vsyncpa [#allocation3], 0
    %s11 = scalar_lea.sflag [#allocation3], 1
    %12 = vsyncpa %s11, 0
    loop: start=0, step=1, limit=4
    $region2: #{simple_transformer_forward.21} parent=1 // loop_pre_header
      _
    $region3: #{simple_transformer_forward.21} parent=1 // loop_header
      %s14 = sphi 0, %s18
      %p15 = scmp.ge.s32.totalorder %s14, 4
      %s21 = sphi 0, %s33
      %s22 = sphi 0, %s29
      %s23 = sphi 0, %s21
      %s24 = sphi 0, %s22
      %s25 = sphi 0, %s23
      %s26 = sphi 0, %s24
      %s36 = sphi 0, %s38
      %s39 = sphi 0, %s36
      %s40 = sphi 0, %s39
      %s56 = sphi 0, %s40
      %s60 = sphi 0, %s60
      %s62 = sphi 0, %s60
      %s63 = sphi 0, %s62
      %s77 = sphi 0, %s63
      %s81 = sphi 0, %s81
      %s83 = sphi 0, %s81
      %s84 = sphi 0, %s83
      %s98 = sphi 0, %s84
      %s104 = sphi 0, %s106
      %s107 = sphi 0, %s104
      %s108 = sphi 0, %s107
      %s124 = sphi 0, %s108
      %s130 = sphi 0, %s132
      %s133 = sphi 0, %s130
      %s134 = sphi 0, %s133
      %s150 = sphi 0, %s134
      %s158 = sphi 0, %s160
      %s161 = sphi 0, %s158
      %s162 = sphi 0, %s161
      %s178 = sphi 0, %s162
    $region4: #{simple_transformer_forward.21} parent=1 // loop_header_branch
      %17 = sbr.rel (%p15) target = $region8
    $region5: #{simple_transformer_forward.21} parent=1 // loop_body
      %s19 = ssub.s32 %s14, 1
      %s20 = ssub.s32 %s14, 2
      %s27 = sadd.s32 1, %s22
      %p28 = scmp.ge.s32.totalorder %s27, 1
      %s29 = scalar_select %p28, 0, %s27
      %s30 = sadd.s32 1, %s21
      %s31 = scalar_select %p28, %s30, %s21
      %p32 = scmp.ge.s32.totalorder %s31, 2
      %s33 = scalar_select %p32, 0, %s31
      %s34 = ssub.s32 %s21, %s33
      %p35 = scmp.eq.s32.totalorder %s34, 0
      %s37 = sadd.s32 %s36, 1
      %s38 = scalar_select %p35, %s36, %s37
      %p41 = pneg %p35
      %p42 = scmp.eq.s32.totalorder %s14, 1
      %p43 = por %p41, %p42
      %p44 = scmp.ne.s32.totalorder %s36, %s39
      %p45 = scmp.eq.s32.totalorder %s14, 0
      %p46 = por %p44, %p45
      %p47 = scmp.ne.s32.totalorder %s36, %s39
      %p48 = scmp.eq.s32.totalorder %s19, 1
      %p49 = por %p47, %p48
      %p50 = scmp.ne.s32.totalorder %s39, %s40
      %p51 = scmp.eq.s32.totalorder %s19, 0
      %p52 = por %p50, %p51
      %p53 = scmp.ne.s32.totalorder %s39, %s40
      %p54 = scmp.eq.s32.totalorder %s20, 1
      %p55 = por %p53, %p54
      %p57 = scmp.ne.s32.totalorder %s40, %s56
      %p58 = scmp.eq.s32.totalorder %s20, 0
      %p59 = por %p57, %p58
      %s61 = sadd.s32 %s60, 1
      %p64 = scmp.eq.s32.totalorder %s14, 1
      %p65 = scmp.ne.s32.totalorder %s60, %s62
      %p66 = scmp.eq.s32.totalorder %s14, 0
      %p67 = por %p65, %p66
      %p68 = scmp.ne.s32.totalorder %s60, %s62
      %p69 = scmp.eq.s32.totalorder %s19, 1
      %p70 = por %p68, %p69
      %p71 = scmp.ne.s32.totalorder %s62, %s63
      %p72 = scmp.eq.s32.totalorder %s19, 0
      %p73 = por %p71, %p72
      %p74 = scmp.ne.s32.totalorder %s62, %s63
      %p75 = scmp.eq.s32.totalorder %s20, 1
      %p76 = por %p74, %p75
      %p78 = scmp.ne.s32.totalorder %s63, %s77
      %p79 = scmp.eq.s32.totalorder %s20, 0
      %p80 = por %p78, %p79
      %s82 = sadd.s32 %s81, 1
      %p85 = scmp.eq.s32.totalorder %s14, 1
      %p86 = scmp.ne.s32.totalorder %s81, %s83
      %p87 = scmp.eq.s32.totalorder %s14, 0
      %p88 = por %p86, %p87
      %p89 = scmp.ne.s32.totalorder %s81, %s83
      %p90 = scmp.eq.s32.totalorder %s19, 1
      %p91 = por %p89, %p90
      %p92 = scmp.ne.s32.totalorder %s83, %s84
      %p93 = scmp.eq.s32.totalorder %s19, 0
      %p94 = por %p92, %p93
      %p95 = scmp.ne.s32.totalorder %s83, %s84
      %p96 = scmp.eq.s32.totalorder %s20, 1
      %p97 = por %p95, %p96
      %p99 = scmp.ne.s32.totalorder %s84, %s98
      %p100 = scmp.eq.s32.totalorder %s20, 0
      %p101 = por %p99, %p100
      %s102 = ssub.s32 %s22, %s29
      %p103 = scmp.eq.s32.totalorder %s102, 0
      %s105 = sadd.s32 %s104, 1
      %s106 = scalar_select %p103, %s104, %s105
      %p109 = pneg %p103
      %p110 = scmp.eq.s32.totalorder %s14, 1
      %p111 = por %p109, %p110
      %p112 = scmp.ne.s32.totalorder %s104, %s107
      %p113 = scmp.eq.s32.totalorder %s14, 0
      %p114 = por %p112, %p113
      %p115 = scmp.ne.s32.totalorder %s104, %s107
      %p116 = scmp.eq.s32.totalorder %s19, 1
      %p117 = por %p115, %p116
      %p118 = scmp.ne.s32.totalorder %s107, %s108
      %p119 = scmp.eq.s32.totalorder %s19, 0
      %p120 = por %p118, %p119
      %p121 = scmp.ne.s32.totalorder %s107, %s108
      %p122 = scmp.eq.s32.totalorder %s20, 1
      %p123 = por %p121, %p122
      %p125 = scmp.ne.s32.totalorder %s108, %s124
      %p126 = scmp.eq.s32.totalorder %s20, 0
      %p127 = por %p125, %p126
      %s128 = ssub.s32 %s22, %s29
      %p129 = scmp.eq.s32.totalorder %s128, 0
      %s131 = sadd.s32 %s130, 1
      %s132 = scalar_select %p129, %s130, %s131
      %p135 = pneg %p129
      %p136 = scmp.eq.s32.totalorder %s14, 1
      %p137 = por %p135, %p136
      %p138 = scmp.ne.s32.totalorder %s130, %s133
      %p139 = scmp.eq.s32.totalorder %s14, 0
      %p140 = por %p138, %p139
      %p141 = scmp.ne.s32.totalorder %s130, %s133
      %p142 = scmp.eq.s32.totalorder %s19, 1
      %p143 = por %p141, %p142
      %p144 = scmp.ne.s32.totalorder %s133, %s134
      %p145 = scmp.eq.s32.totalorder %s19, 0
      %p146 = por %p144, %p145
      %p147 = scmp.ne.s32.totalorder %s133, %s134
      %p148 = scmp.eq.s32.totalorder %s20, 1
      %p149 = por %p147, %p148
      %p151 = scmp.ne.s32.totalorder %s134, %s150
      %p152 = scmp.eq.s32.totalorder %s20, 0
      %p153 = por %p151, %p152
      %s154 = ssub.s32 %s21, %s33
      %s155 = ssub.s32 %s22, %s29
      %s156 = sor.u32 %s154, %s155
      %p157 = scmp.eq.s32.totalorder %s156, 0
      %s159 = sadd.s32 %s158, 1
      %s160 = scalar_select %p157, %s158, %s159
      %p163 = pneg %p157
      %p164 = scmp.eq.s32.totalorder %s14, 1
      %p165 = por %p163, %p164
      %p166 = scmp.ne.s32.totalorder %s158, %s161
      %p167 = scmp.eq.s32.totalorder %s14, 0
      %p168 = por %p166, %p167
      %p169 = scmp.ne.s32.totalorder %s158, %s161
      %p170 = scmp.eq.s32.totalorder %s19, 1
      %p171 = por %p169, %p170
      %p172 = scmp.ne.s32.totalorder %s161, %s162
      %p173 = scmp.eq.s32.totalorder %s19, 0
      %p174 = por %p172, %p173
      %p175 = scmp.ne.s32.totalorder %s161, %s162
      %p176 = scmp.eq.s32.totalorder %s20, 1
      %p177 = por %p175, %p176
      %p179 = scmp.ne.s32.totalorder %s162, %s178
      %p180 = scmp.eq.s32.totalorder %s20, 0
      %p181 = por %p179, %p180
      %p182 = scmp.le.s32.totalorder 1, %s14
      %p183 = scmp.lt.s32.totalorder %s14, 3
      %p184 = pnand %p182, %p183
      %p185 = pneg %p184
      // Predicated region
      $region9: #{simple_transformer_forward.21} parent=5 // pred_check
        _
      $region10: #{simple_transformer_forward.21} parent=5 // pred_check_branch
        %187 = sbr.rel (%p184) target = $region12
      $region11: #{simple_transformer_forward.21} parent=5 // pred_region
        %s188 = ssub.s32 %s14, 1
        // Predicated region
        $region13: #{simple_transformer_forward.21} parent=11 // pred_check
          %p189 = pneg %p73
        $region14: #{simple_transformer_forward.21} parent=11 // pred_check_branch
          %191 = sbr.rel (%p189) target = $region16
        $region15: #{simple_transformer_forward.21} parent=11 // pred_region
          _
        $region16: #{simple_transformer_forward.21} parent=11 // pred_fallthru
          _
        // Predicated region
        $region17: #{simple_transformer_forward.21} parent=11 // pred_check
          %p192 = pneg %p94
        $region18: #{simple_transformer_forward.21} parent=11 // pred_check_branch
          %194 = sbr.rel (%p192) target = $region20
        $region19: #{simple_transformer_forward.21} parent=11 // pred_region
          _
        $region20: #{simple_transformer_forward.21} parent=11 // pred_fallthru
          _
        // Predicated region
        $region21: #{simple_transformer_forward.21} parent=11 // pred_check
          %p195 = pneg %p120
        $region22: #{simple_transformer_forward.21} parent=11 // pred_check_branch
          %197 = sbr.rel (%p195) target = $region24
        $region23: #{simple_transformer_forward.21} parent=11 // pred_region
          %s198 = smul.u32 2, %s24
          %p199 = scmp.lt.s32.totalorder %s198, 1
          %s200 = scalar_select %p199, %s198, 1
          %s201 = smul.addr %s200, 4
          %s202 = scalar_lea.vmem %s3, %s201
          %s203 = smul.u32 2, %s24
        $region24: #{simple_transformer_forward.21} parent=11 // pred_fallthru
          _
        // Predicated region
        $region25: #{simple_transformer_forward.21} parent=11 // pred_check
          %p204 = pneg %p146
        $region26: #{simple_transformer_forward.21} parent=11 // pred_check_branch
          %206 = sbr.rel (%p204) target = $region28
        $region27: #{simple_transformer_forward.21} parent=11 // pred_region
          %s207 = smul.u32 2, %s24
          %p208 = scmp.lt.s32.totalorder %s207, 1
          %s209 = scalar_select %p208, %s207, 1
          %s210 = scalar_lea.vmem %s4, %s209
          %s211 = smul.u32 2, %s24
        $region28: #{simple_transformer_forward.21} parent=11 // pred_fallthru
          _
      $region12: #{simple_transformer_forward.21} parent=5 // pred_fallthru
        _
      %p212 = scmp.lt.s32.totalorder %s14, 2
      // Predicated region
      $region29: #{simple_transformer_forward.21} parent=5 // pred_check
        %p213 = pneg %p212
      $region30: #{simple_transformer_forward.21} parent=5 // pred_check_branch
        %215 = sbr.rel (%p213) target = $region32
      $region31: #{simple_transformer_forward.21} parent=5 // pred_region
        // Predicated region
        $region33: #{simple_transformer_forward.21} parent=31 // pred_check
          %p216 = pneg %p46
        $region34: #{simple_transformer_forward.21} parent=31 // pred_check_branch
          %218 = sbr.rel (%p216) target = $region36
        $region35: #{simple_transformer_forward.21} parent=31 // pred_region
          %p219 = scmp.lt.s32.totalorder %s21, 1
          %s220 = scalar_select %p219, %s21, 1
          %s221 = smul.addr %s220, 4
          %s222 = scalar_lea.vmem %s0, %s221
        $region36: #{simple_transformer_forward.21} parent=31 // pred_fallthru
          _
      $region32: #{simple_transformer_forward.21} parent=5 // pred_fallthru
        _
      %p223 = scmp.le.s32.totalorder 1, %s14
      %p224 = scmp.lt.s32.totalorder %s14, 3
      %p225 = pnand %p223, %p224
      %p226 = pneg %p225
      // Predicated region
      $region37: #{simple_transformer_forward.21} parent=5 // pred_check
        _
      $region38: #{simple_transformer_forward.21} parent=5 // pred_check_branch
        %228 = sbr.rel (%p225) target = $region40
      $region39: #{simple_transformer_forward.21} parent=5 // pred_region
        %s229 = ssub.s32 %s14, 1
        %p230 = scmp.lt.s32.totalorder %s23, 1
        %s231 = scalar_select %p230, %s23, 1
        %s232 = smul.addr %s231, 4
        %s233 = scalar_lea.vmem %s0, %s232
        %p234 = pneg %p52
        %p235 = pneg %p49
        %p236 = pneg %p73
        %p237 = pneg %p70
        %p238 = pneg %p94
        %p239 = pneg %p91
        %s240 = smul.u32 2, %s24
        %p241 = scmp.lt.s32.totalorder %s240, 1
        %s242 = scalar_select %p241, %s240, 1
        %s243 = smul.addr %s242, 4
        %s244 = scalar_lea.vmem %s3, %s243
        %p245 = pneg %p120
        %p246 = pneg %p117
        %s247 = smul.u32 2, %s24
        %p248 = scmp.lt.s32.totalorder %s247, 1
        %s249 = scalar_select %p248, %s247, 1
        %s250 = scalar_lea.vmem %s4, %s249
        %p251 = pneg %p146
        %p252 = pneg %p143
        %p253 = pneg %p174
        %p254 = pneg %p171
        %s255 = sand.u32 %s161, 1
        %s256 = scalar_lea.sflag [#allocation3], %s255
        %s257 = sand.u32 %s161, 1
        %s258 = smul.addr %s257, 16
        %s259 = scalar_lea.vmem [#allocation2], %s258
        %p260 = scmp.lt.s32.totalorder %s23, 1
        %s261 = scalar_select %p260, %s23, 1
        %s262 = smul.addr %s261, 4
        %s263 = scalar_lea.vmem %s0, %s262
        %s264 = smul.u32 2, %s24
        %p265 = scmp.lt.s32.totalorder %s264, 1
        %s266 = scalar_select %p265, %s264, 1
        %s267 = smul.addr %s266, 4
        %s268 = scalar_lea.vmem %s3, %s267
        %s269 = smul.u32 2, %s24
        %s270 = smul.u32 2, %s24
        %p271 = scmp.lt.s32.totalorder %s270, 1
        %s272 = scalar_select %p271, %s270, 1
        %s273 = scalar_lea.vmem %s4, %s272
        %s274 = smul.u32 2, %s24
        %s275 = smul.u32 2, %s24
        %v277 = vld [vmem:[%s263] sm:$0xf]
        %v278 = vunpack.c.l.bf16 %v277
        %vm279 = vcmask 261120
        %v280 = vsel %vm279, %v278, 0.0
        %281 = vadd.xlane.f32.xlu0 %v280
        %v282 = vpop.xlane.xlu0 %281
        %v283 = vrcp.pop 32.0
        %v284 = vmul.f32 %v282, %v283
        %v285 = vsub.f32 %v278, %v284
        %v286 = vmul.f32 %v285, %v285
        %v287 = vsel %vm279, %v286, 0.0
        %288 = vadd.xlane.f32.xlu0 %v287
        %v289 = vpop.xlane.xlu0 %288
        %v290 = vmul.f32 %v289, %v283
        %v291 = vadd.f32 %v290, 1e-05
        %v292 = vrsqrt.pop %v291
        %v293 = vmul.f32 %v285, %v292
        %v294 = vld [vmem:[%s1] sm:$0x1]
        %v296 = vlaneseq
        %v297 = vshrl.u32 %v296, 7
        %v298 = vsub.s32 0, %v297
        %v299 = vrot.slane %v294, %v298
        %v301 = vmul.f32 %v293, %v299
        %v302 = vld [vmem:[%s2] sm:$0x1]
        %v304 = vlaneseq
        %v305 = vshrl.u32 %v304, 7
        %v306 = vsub.s32 0, %v305
        %v307 = vrot.slane %v302, %v306
        %v309 = vadd.f32 %v301, %v307
        %v310 = vpack.c.bf16 %v309, %v309
        %v311 = vld [vmem:[%s268] sm:$0xff]
        %v312 = vld [vmem:[%s268 + $0x8] sm:$0xff]
        %v313 = vld [vmem:[%s268 + $0x10] sm:$0xff]
        %v314 = vld [vmem:[%s268 + $0x18] sm:$0xff]
        %v315 = vld [vmem:[%s273] sm:$0x3]
        %v317 = vlaneseq
        %v318 = vshrl.u32 %v317, 7
        %v319 = vsub.s32 0, %v318
        %v320 = vrot.slane %v315, %v319
        %v321 = vlaneseq
        %v322 = vshrl.u32 %v321, 7
        %v323 = vsub.s32 1, %v322
        %v324 = vrot.slane %v315, %v323
        %v331 = vunpack.c.l.b16 %v311
        %v332 = vunpack.c.h.b16 %v311
        %v333 = vunpack.c.l.b16 %v312
        %v334 = vunpack.c.h.b16 %v312
        %v335 = vunpack.c.l.b16 %v313
        %v336 = vunpack.c.h.b16 %v313
        %v337 = vunpack.c.l.b16 %v314
        %v338 = vunpack.c.h.b16 %v314
        %v339 = vpack.c.b16 %v333, %v331
        %v340 = vpack.c.b16 %v334, %v332
        %v341 = vpack.c.b16 %v337, %v335
        %v342 = vpack.c.b16 %v338, %v336
        %v348 = vsel %vm279, %v310, 0
        %350 = vmatprep.subr.bf16.mxu0 %v340
        %351 = vmatpush1.bf16.msra.mxu0 %v339
        %352 = vmatprep.subr.bf16.mxu0 %v342
        %353 = vmatpush1.bf16.msra.mxu0 %v341
        %354 = vmatprep.subr.bf16.mxu0 0
        %355 = vmatpush1.bf16.msra.mxu0 0
        %356 = vmatprep.subr.bf16.mxu0 0
        %357 = vmatpush1.bf16.msra.mxu0 0
        %358 = vmatprep.subr.bf16.mxu0 0
        %359 = vmatpush1.bf16.msra.mxu0 0
        %360 = vmatprep.subr.bf16.mxu0 0
        %361 = vmatpush1.bf16.msra.mxu0 0
        %362 = vmatprep.subr.bf16.mxu0 0
        %363 = vmatpush1.bf16.msra.mxu0 0
        %364 = vmatprep.subr.bf16.mxu0 0
        %365 = vmatpush1.bf16.msra.mxu0 0
        %366 = vmatprep.subr.bf16.mxu0 0
        %367 = vmatpush1.bf16.msra.mxu0 0
        %368 = vmatprep.subr.bf16.mxu0 0
        %369 = vmatpush1.bf16.msra.mxu0 0
        %370 = vmatprep.subr.bf16.mxu0 0
        %371 = vmatpush1.bf16.msra.mxu0 0
        %372 = vmatprep.subr.bf16.mxu0 0
        %373 = vmatpush1.bf16.msra.mxu0 0
        %374 = vmatprep.subr.bf16.mxu0 0
        %375 = vmatpush1.bf16.msra.mxu0 0
        %376 = vmatprep.subr.bf16.mxu0 0
        %377 = vmatpush1.bf16.msra.mxu0 0
        %378 = vmatprep.subr.bf16.mxu0 0
        %379 = vmatpush1.bf16.msra.mxu0 0
        %380 = vmatprep.subr.bf16.mxu0 0
        %381 = vmatpush1.bf16.msra.mxu0 0
        %382 = vmatprep.mubr.bf16.mxu0 0
        %383 = vmatmul.mubr.bf16.gmra.mrb[0].mxu0 %v348
        %v384 = vpop.f32.mrb[0].mxu0
        %v385 = vadd.f32 %v320, %v384
        %v386 = vpop.f32.mrb[0].mxu0
        %v387 = vadd.f32 %v324, %v386
        %v388 = vpop.f32.mrb[0].mxu0
        %v389 = vpop.f32.mrb[0].mxu0
        %390 = vdwg.mxu0
        %391 = vst [vmem:[%s259] sm:$0xff] %v385
        %392 = vst [vmem:[%s259 + $0x8] sm:$0xff] %v387
        %s393 = sand.u32 %s161, 1
        %s394 = scalar_lea.sflag [#allocation3], %s393
        %s395 = sand.u32 %s161, 1
        %s396 = smul.addr %s395, 16
        %s397 = scalar_lea.vmem [#allocation2], %s396
        // Predicated region
        $region41: #{simple_transformer_forward.21} parent=39 // pred_check
          %p398 = pneg %p171
        $region42: #{simple_transformer_forward.21} parent=39 // pred_check_branch
          %400 = sbr.rel (%p398) target = $region44
        $region43: #{simple_transformer_forward.21} parent=39 // pred_region
          %s401 = smul.u32 2, %s24
          %s403 = ssub.s32 256, 256
          %404 = vsyncadd %s394, %s403
          %s405 = smul.addr %s23, 2
          %s406 = sadd.s32 %s401, %s405
          %s407 = smul.addr %s406, 128
          %s408 = scalar_lea.hbm %s5, %s407
          %s410 = sshll.u32 %s397, 4
          %s411 = int_to_ptr.vmem [resolvable:$true] %s410
          %413 = dma.vmem_to_hbm [thread:$0]  %s411, 256, %s408, %s394
        $region44: #{simple_transformer_forward.21} parent=39 // pred_fallthru
          _
      $region40: #{simple_transformer_forward.21} parent=5 // pred_fallthru
        _
      %p414 = scmp.le.s32.totalorder 2, %s14
      // Predicated region
      $region45: #{simple_transformer_forward.21} parent=5 // pred_check
        %p415 = pneg %p414
      $region46: #{simple_transformer_forward.21} parent=5 // pred_check_branch
        %417 = sbr.rel (%p415) target = $region48
      $region47: #{simple_transformer_forward.21} parent=5 // pred_region
        %s418 = ssub.s32 %s14, 2
        // Predicated region
        $region49: #{simple_transformer_forward.21} parent=47 // pred_check
          %p419 = pneg %p177
        $region50: #{simple_transformer_forward.21} parent=47 // pred_check_branch
          %421 = sbr.rel (%p419) target = $region52
        $region51: #{simple_transformer_forward.21} parent=47 // pred_region
          %s422 = sand.u32 %s162, 1
          %s423 = scalar_lea.sflag [#allocation3], %s422
          %s424 = sand.u32 %s162, 1
          %s425 = smul.addr %s424, 16
          %s426 = scalar_lea.vmem [#allocation2], %s425
          %427 = dma.done %s423, 256
        $region52: #{simple_transformer_forward.21} parent=47 // pred_fallthru
          _
      $region48: #{simple_transformer_forward.21} parent=5 // pred_fallthru
        _
    $region6: #{simple_transformer_forward.21} parent=1 // loop_footer
      %s18 = sadd.s32 1, %s14
    $region7: #{simple_transformer_forward.21} parent=1 // loop_footer_branch
      %13 = sbr.rel target = $region3
    $region8: #{simple_transformer_forward.21} parent=1 // loop_exit
      _
    %428 = vsyncpa [#allocation3], 1
    %s429 = scalar_lea.sflag [#allocation3], 1
    %430 = vsyncpa %s429, 1

// kernel: simple_transformer_forward.15
$region0: #{simple_transformer_forward.15}
  #allocation0 [shape = 'u32[]', space=smem, size = 0x4, offset = 0x4, fixed_abs, tag = 'smem constant byte address 0x4 - core index']
  #allocation1 [shape = 'u32[144,128]{1,0:T(1,128)}', space=vmem, size = 0x12000, scoped, tag = 'internal scratch']
  #allocation2 [shape = 'f32[8,32]{1,0:T(8,128)}', space=vmem, size = 0x1000, scoped, tag = 'scratch operand']
  %s0 = inlined_call_operand.vmem [shape: bf16[16,64], index: 0, kind: input, shape index: {}]
  %s1 = inlined_call_operand.vmem [shape: bf16[64,32], index: 1, kind: input, shape index: {}]
  %s2 = inlined_call_operand.vmem [shape: f32[1,32], index: 2, kind: input, shape index: {}]
  %s3 = inlined_call_operand.vmem [shape: f32[16,32], index: 3, kind: input, shape index: {}]
  %s4 = inlined_call_operand.vmem [shape: f32[1,32], index: 4, kind: input, shape index: {}]
  %s5 = inlined_call_operand.vmem [shape: f32[1,32], index: 5, kind: input, shape index: {}]
  %s6 = inlined_call_operand.vmem [shape: f32[16,32], index: 6, kind: output, shape index: {0}]
  %s7 = inlined_call_operand.vmem [shape: bf16[16,32], index: 7, kind: output, shape index: {1}]
  %8 = xla_tuple %s6, %s7
  %s9 = sld [smem:[#allocation0]]
  $region73: #{simple_transformer_forward.15} parent=0
    _
  %s11 = ssub.s32 1, %s9
  %s12 = scalar_select 0, %s11, %s9
  loop: start=0, step=1, limit=4
  $region2: #{simple_transformer_forward.15} parent=0 // loop_pre_header
    _
  $region3: #{simple_transformer_forward.15} parent=0 // loop_header
    %s14 = sphi 0, %s18
    %p15 = scmp.ge.s32.totalorder %s14, 4
    %s21 = sphi 0, %s33
    %s22 = sphi 0, %s29
    %s23 = sphi 0, %s21
    %s24 = sphi 0, %s22
    %s25 = sphi 0, %s23
    %s26 = sphi 0, %s24
    %s38 = sphi 0, %s40
    %s41 = sphi 0, %s38
    %s42 = sphi 0, %s41
    %s58 = sphi 0, %s42
    %s64 = sphi 0, %s66
    %s67 = sphi 0, %s64
    %s68 = sphi 0, %s67
    %s84 = sphi 0, %s68
    %s88 = sphi 0, %s88
    %s90 = sphi 0, %s88
    %s91 = sphi 0, %s90
    %s105 = sphi 0, %s91
    %s111 = sphi 0, %s113
    %s114 = sphi 0, %s111
    %s115 = sphi 0, %s114
    %s131 = sphi 0, %s115
    %s135 = sphi 0, %s135
    %s137 = sphi 0, %s135
    %s138 = sphi 0, %s137
    %s152 = sphi 0, %s138
    %s156 = sphi 0, %s156
    %s158 = sphi 0, %s156
    %s159 = sphi 0, %s158
    %s173 = sphi 0, %s159
    %s179 = sphi 0, %s181
    %s182 = sphi 0, %s179
    %s183 = sphi 0, %s182
    %s199 = sphi 0, %s183
    %s205 = sphi 0, %s207
    %s208 = sphi 0, %s205
    %s209 = sphi 0, %s208
    %s225 = sphi 0, %s209
  $region4: #{simple_transformer_forward.15} parent=0 // loop_header_branch
    %17 = sbr.rel (%p15) target = $region8
  $region5: #{simple_transformer_forward.15} parent=0 // loop_body
    %s19 = ssub.s32 %s14, 1
    %s20 = ssub.s32 %s14, 2
    %s27 = sadd.s32 1, %s22
    %p28 = scmp.ge.s32.totalorder %s27, 1
    %s29 = scalar_select %p28, 0, %s27
    %s30 = sadd.s32 1, %s21
    %s31 = scalar_select %p28, %s30, %s21
    %p32 = scmp.ge.s32.totalorder %s31, 2
    %s33 = scalar_select %p32, 0, %s31
    %s34 = ssub.s32 %s21, %s33
    %s35 = ssub.s32 %s22, %s29
    %s36 = sor.u32 %s34, %s35
    %p37 = scmp.eq.s32.totalorder %s36, 0
    %s39 = sadd.s32 %s38, 1
    %s40 = scalar_select %p37, %s38, %s39
    %p43 = pneg %p37
    %p44 = scmp.eq.s32.totalorder %s14, 1
    %p45 = por %p43, %p44
    %p46 = scmp.ne.s32.totalorder %s38, %s41
    %p47 = scmp.eq.s32.totalorder %s14, 0
    %p48 = por %p46, %p47
    %p49 = scmp.ne.s32.totalorder %s38, %s41
    %p50 = scmp.eq.s32.totalorder %s19, 1
    %p51 = por %p49, %p50
    %p52 = scmp.ne.s32.totalorder %s41, %s42
    %p53 = scmp.eq.s32.totalorder %s19, 0
    %p54 = por %p52, %p53
    %p55 = scmp.ne.s32.totalorder %s41, %s42
    %p56 = scmp.eq.s32.totalorder %s20, 1
    %p57 = por %p55, %p56
    %p59 = scmp.ne.s32.totalorder %s42, %s58
    %p60 = scmp.eq.s32.totalorder %s20, 0
    %p61 = por %p59, %p60
    %s62 = ssub.s32 %s22, %s29
    %p63 = scmp.eq.s32.totalorder %s62, 0
    %s65 = sadd.s32 %s64, 1
    %s66 = scalar_select %p63, %s64, %s65
    %p69 = pneg %p63
    %p70 = scmp.eq.s32.totalorder %s14, 1
    %p71 = por %p69, %p70
    %p72 = scmp.ne.s32.totalorder %s64, %s67
    %p73 = scmp.eq.s32.totalorder %s14, 0
    %p74 = por %p72, %p73
    %p75 = scmp.ne.s32.totalorder %s64, %s67
    %p76 = scmp.eq.s32.totalorder %s19, 1
    %p77 = por %p75, %p76
    %p78 = scmp.ne.s32.totalorder %s67, %s68
    %p79 = scmp.eq.s32.totalorder %s19, 0
    %p80 = por %p78, %p79
    %p81 = scmp.ne.s32.totalorder %s67, %s68
    %p82 = scmp.eq.s32.totalorder %s20, 1
    %p83 = por %p81, %p82
    %p85 = scmp.ne.s32.totalorder %s68, %s84
    %p86 = scmp.eq.s32.totalorder %s20, 0
    %p87 = por %p85, %p86
    %s89 = sadd.s32 %s88, 1
    %p92 = scmp.eq.s32.totalorder %s14, 1
    %p93 = scmp.ne.s32.totalorder %s88, %s90
    %p94 = scmp.eq.s32.totalorder %s14, 0
    %p95 = por %p93, %p94
    %p96 = scmp.ne.s32.totalorder %s88, %s90
    %p97 = scmp.eq.s32.totalorder %s19, 1
    %p98 = por %p96, %p97
    %p99 = scmp.ne.s32.totalorder %s90, %s91
    %p100 = scmp.eq.s32.totalorder %s19, 0
    %p101 = por %p99, %p100
    %p102 = scmp.ne.s32.totalorder %s90, %s91
    %p103 = scmp.eq.s32.totalorder %s20, 1
    %p104 = por %p102, %p103
    %p106 = scmp.ne.s32.totalorder %s91, %s105
    %p107 = scmp.eq.s32.totalorder %s20, 0
    %p108 = por %p106, %p107
    %s109 = ssub.s32 %s21, %s33
    %p110 = scmp.eq.s32.totalorder %s109, 0
    %s112 = sadd.s32 %s111, 1
    %s113 = scalar_select %p110, %s111, %s112
    %p116 = pneg %p110
    %p117 = scmp.eq.s32.totalorder %s14, 1
    %p118 = por %p116, %p117
    %p119 = scmp.ne.s32.totalorder %s111, %s114
    %p120 = scmp.eq.s32.totalorder %s14, 0
    %p121 = por %p119, %p120
    %p122 = scmp.ne.s32.totalorder %s111, %s114
    %p123 = scmp.eq.s32.totalorder %s19, 1
    %p124 = por %p122, %p123
    %p125 = scmp.ne.s32.totalorder %s114, %s115
    %p126 = scmp.eq.s32.totalorder %s19, 0
    %p127 = por %p125, %p126
    %p128 = scmp.ne.s32.totalorder %s114, %s115
    %p129 = scmp.eq.s32.totalorder %s20, 1
    %p130 = por %p128, %p129
    %p132 = scmp.ne.s32.totalorder %s115, %s131
    %p133 = scmp.eq.s32.totalorder %s20, 0
    %p134 = por %p132, %p133
    %s136 = sadd.s32 %s135, 1
    %p139 = scmp.eq.s32.totalorder %s14, 1
    %p140 = scmp.ne.s32.totalorder %s135, %s137
    %p141 = scmp.eq.s32.totalorder %s14, 0
    %p142 = por %p140, %p141
    %p143 = scmp.ne.s32.totalorder %s135, %s137
    %p144 = scmp.eq.s32.totalorder %s19, 1
    %p145 = por %p143, %p144
    %p146 = scmp.ne.s32.totalorder %s137, %s138
    %p147 = scmp.eq.s32.totalorder %s19, 0
    %p148 = por %p146, %p147
    %p149 = scmp.ne.s32.totalorder %s137, %s138
    %p150 = scmp.eq.s32.totalorder %s20, 1
    %p151 = por %p149, %p150
    %p153 = scmp.ne.s32.totalorder %s138, %s152
    %p154 = scmp.eq.s32.totalorder %s20, 0
    %p155 = por %p153, %p154
    %s157 = sadd.s32 %s156, 1
    %p160 = scmp.eq.s32.totalorder %s14, 1
    %p161 = scmp.ne.s32.totalorder %s156, %s158
    %p162 = scmp.eq.s32.totalorder %s14, 0
    %p163 = por %p161, %p162
    %p164 = scmp.ne.s32.totalorder %s156, %s158
    %p165 = scmp.eq.s32.totalorder %s19, 1
    %p166 = por %p164, %p165
    %p167 = scmp.ne.s32.totalorder %s158, %s159
    %p168 = scmp.eq.s32.totalorder %s19, 0
    %p169 = por %p167, %p168
    %p170 = scmp.ne.s32.totalorder %s158, %s159
    %p171 = scmp.eq.s32.totalorder %s20, 1
    %p172 = por %p170, %p171
    %p174 = scmp.ne.s32.totalorder %s159, %s173
    %p175 = scmp.eq.s32.totalorder %s20, 0
    %p176 = por %p174, %p175
    %s177 = ssub.s32 %s21, %s33
    %p178 = scmp.eq.s32.totalorder %s177, 0
    %s180 = sadd.s32 %s179, 1
    %s181 = scalar_select %p178, %s179, %s180
    %p184 = pneg %p178
    %p185 = scmp.eq.s32.totalorder %s14, 1
    %p186 = por %p184, %p185
    %p187 = scmp.ne.s32.totalorder %s179, %s182
    %p188 = scmp.eq.s32.totalorder %s14, 0
    %p189 = por %p187, %p188
    %p190 = scmp.ne.s32.totalorder %s179, %s182
    %p191 = scmp.eq.s32.totalorder %s19, 1
    %p192 = por %p190, %p191
    %p193 = scmp.ne.s32.totalorder %s182, %s183
    %p194 = scmp.eq.s32.totalorder %s19, 0
    %p195 = por %p193, %p194
    %p196 = scmp.ne.s32.totalorder %s182, %s183
    %p197 = scmp.eq.s32.totalorder %s20, 1
    %p198 = por %p196, %p197
    %p200 = scmp.ne.s32.totalorder %s183, %s199
    %p201 = scmp.eq.s32.totalorder %s20, 0
    %p202 = por %p200, %p201
    %s203 = ssub.s32 %s21, %s33
    %p204 = scmp.eq.s32.totalorder %s203, 0
    %s206 = sadd.s32 %s205, 1
    %s207 = scalar_select %p204, %s205, %s206
    %p210 = pneg %p204
    %p211 = scmp.eq.s32.totalorder %s14, 1
    %p212 = por %p210, %p211
    %p213 = scmp.ne.s32.totalorder %s205, %s208
    %p214 = scmp.eq.s32.totalorder %s14, 0
    %p215 = por %p213, %p214
    %p216 = scmp.ne.s32.totalorder %s205, %s208
    %p217 = scmp.eq.s32.totalorder %s19, 1
    %p218 = por %p216, %p217
    %p219 = scmp.ne.s32.totalorder %s208, %s209
    %p220 = scmp.eq.s32.totalorder %s19, 0
    %p221 = por %p219, %p220
    %p222 = scmp.ne.s32.totalorder %s208, %s209
    %p223 = scmp.eq.s32.totalorder %s20, 1
    %p224 = por %p222, %p223
    %p226 = scmp.ne.s32.totalorder %s209, %s225
    %p227 = scmp.eq.s32.totalorder %s20, 0
    %p228 = por %p226, %p227
    %p229 = scmp.le.s32.totalorder 1, %s14
    %p230 = scmp.lt.s32.totalorder %s14, 3
    %p231 = pnand %p229, %p230
    %p232 = pneg %p231
    // Predicated region
    $region9: #{simple_transformer_forward.15} parent=5 // pred_check
      _
    $region10: #{simple_transformer_forward.15} parent=5 // pred_check_branch
      %234 = sbr.rel (%p231) target = $region12
    $region11: #{simple_transformer_forward.15} parent=5 // pred_region
      %s235 = ssub.s32 %s14, 1
      // Predicated region
      $region13: #{simple_transformer_forward.15} parent=11 // pred_check
        %p236 = pneg %p80
      $region14: #{simple_transformer_forward.15} parent=11 // pred_check_branch
        %238 = sbr.rel (%p236) target = $region16
      $region15: #{simple_transformer_forward.15} parent=11 // pred_region
        %s239 = smul.u32 8, %s24
        %p240 = scmp.lt.s32.totalorder %s239, 7
        %s241 = scalar_select %p240, %s239, 7
        %s242 = smul.addr %s241, 4
        %s243 = scalar_lea.vmem %s1, %s242
        %s244 = smul.u32 8, %s24
      $region16: #{simple_transformer_forward.15} parent=11 // pred_fallthru
        _
      // Predicated region
      $region17: #{simple_transformer_forward.15} parent=11 // pred_check
        %p245 = pneg %p101
      $region18: #{simple_transformer_forward.15} parent=11 // pred_check_branch
        %247 = sbr.rel (%p245) target = $region20
      $region19: #{simple_transformer_forward.15} parent=11 // pred_region
        _
      $region20: #{simple_transformer_forward.15} parent=11 // pred_fallthru
        _
      // Predicated region
      $region21: #{simple_transformer_forward.15} parent=11 // pred_check
        %p248 = pneg %p148
      $region22: #{simple_transformer_forward.15} parent=11 // pred_check_branch
        %250 = sbr.rel (%p248) target = $region24
      $region23: #{simple_transformer_forward.15} parent=11 // pred_region
        _
      $region24: #{simple_transformer_forward.15} parent=11 // pred_fallthru
        _
      // Predicated region
      $region25: #{simple_transformer_forward.15} parent=11 // pred_check
        %p251 = pneg %p169
      $region26: #{simple_transformer_forward.15} parent=11 // pred_check_branch
        %253 = sbr.rel (%p251) target = $region28
      $region27: #{simple_transformer_forward.15} parent=11 // pred_region
        _
      $region28: #{simple_transformer_forward.15} parent=11 // pred_fallthru
        _
    $region12: #{simple_transformer_forward.15} parent=5 // pred_fallthru
      _
    %p254 = scmp.lt.s32.totalorder %s14, 2
    // Predicated region
    $region29: #{simple_transformer_forward.15} parent=5 // pred_check
      %p255 = pneg %p254
    $region30: #{simple_transformer_forward.15} parent=5 // pred_check_branch
      %257 = sbr.rel (%p255) target = $region32
    $region31: #{simple_transformer_forward.15} parent=5 // pred_region
      // Predicated region
      $region33: #{simple_transformer_forward.15} parent=31 // pred_check
        %p258 = pneg %p48
      $region34: #{simple_transformer_forward.15} parent=31 // pred_check_branch
        %260 = sbr.rel (%p258) target = $region36
      $region35: #{simple_transformer_forward.15} parent=31 // pred_region
        %p261 = scmp.lt.s32.totalorder %s21, 1
        %s262 = scalar_select %p261, %s21, 1
        %p263 = scmp.lt.s32.totalorder %s22, 0
        %s264 = scalar_select %p263, %s22, 0
        %s265 = sadd.s32 %s264, %s262
        %s266 = smul.addr %s265, 4
        %s267 = scalar_lea.vmem %s0, %s266
      $region36: #{simple_transformer_forward.15} parent=31 // pred_fallthru
        _
      // Predicated region
      $region37: #{simple_transformer_forward.15} parent=31 // pred_check
        %p268 = pneg %p121
      $region38: #{simple_transformer_forward.15} parent=31 // pred_check_branch
        %270 = sbr.rel (%p268) target = $region40
      $region39: #{simple_transformer_forward.15} parent=31 // pred_region
        %p271 = scmp.lt.s32.totalorder %s21, 1
        %s272 = scalar_select %p271, %s21, 1
        %s273 = smul.addr %s272, 8
        %s274 = scalar_lea.vmem %s3, %s273
      $region40: #{simple_transformer_forward.15} parent=31 // pred_fallthru
        _
    $region32: #{simple_transformer_forward.15} parent=5 // pred_fallthru
      _
    %p275 = scmp.le.s32.totalorder 1, %s14
    %p276 = scmp.lt.s32.totalorder %s14, 3
    %p277 = pnand %p275, %p276
    %p278 = pneg %p277
    // Predicated region
    $region41: #{simple_transformer_forward.15} parent=5 // pred_check
      _
    $region42: #{simple_transformer_forward.15} parent=5 // pred_check_branch
      %280 = sbr.rel (%p277) target = $region44
    $region43: #{simple_transformer_forward.15} parent=5 // pred_region
      %s281 = ssub.s32 %s14, 1
      %p282 = scmp.lt.s32.totalorder %s23, 1
      %s283 = scalar_select %p282, %s23, 1
      %p284 = scmp.lt.s32.totalorder %s24, 0
      %s285 = scalar_select %p284, %s24, 0
      %s286 = sadd.s32 %s285, %s283
      %s287 = smul.addr %s286, 4
      %s288 = scalar_lea.vmem %s0, %s287
      %p289 = pneg %p54
      %p290 = pneg %p51
      %s291 = smul.u32 8, %s24
      %p292 = scmp.lt.s32.totalorder %s291, 7
      %s293 = scalar_select %p292, %s291, 7
      %s294 = smul.addr %s293, 4
      %s295 = scalar_lea.vmem %s1, %s294
      %p296 = pneg %p80
      %p297 = pneg %p77
      %p298 = pneg %p101
      %p299 = pneg %p98
      %p300 = scmp.lt.s32.totalorder %s23, 1
      %s301 = scalar_select %p300, %s23, 1
      %s302 = smul.addr %s301, 8
      %s303 = scalar_lea.vmem %s3, %s302
      %p304 = pneg %p127
      %p305 = pneg %p124
      %p306 = pneg %p148
      %p307 = pneg %p145
      %p308 = pneg %p169
      %p309 = pneg %p166
      %p310 = pneg %p195
      %p311 = pneg %p192
      %p312 = scmp.lt.s32.totalorder %s23, 1
      %s313 = scalar_select %p312, %s23, 1
      %s314 = smul.addr %s313, 8
      %s315 = scalar_lea.vmem %s6, %s314
      %p316 = pneg %p221
      %p317 = pneg %p218
      %p318 = scmp.lt.s32.totalorder %s23, 1
      %s319 = scalar_select %p318, %s23, 1
      %s320 = smul.addr %s319, 4
      %s321 = scalar_lea.vmem %s7, %s320
      %p322 = scmp.lt.s32.totalorder %s23, 1
      %s323 = scalar_select %p322, %s23, 1
      %p324 = scmp.lt.s32.totalorder %s24, 0
      %s325 = scalar_select %p324, %s24, 0
      %s326 = sadd.s32 %s325, %s323
      %s327 = smul.addr %s326, 4
      %s328 = scalar_lea.vmem %s0, %s327
      %s329 = smul.u32 8, %s24
      %p330 = scmp.lt.s32.totalorder %s329, 7
      %s331 = scalar_select %p330, %s329, 7
      %s332 = smul.addr %s331, 4
      %s333 = scalar_lea.vmem %s1, %s332
      %s334 = smul.u32 8, %s24
      %p335 = scmp.lt.s32.totalorder %s23, 1
      %s336 = scalar_select %p335, %s23, 1
      %s337 = smul.addr %s336, 8
      %s338 = scalar_lea.vmem %s3, %s337
      %p339 = scmp.lt.s32.totalorder %s23, 1
      %s340 = scalar_select %p339, %s23, 1
      %s341 = smul.addr %s340, 8
      %s342 = scalar_lea.vmem %s6, %s341
      %p343 = scmp.lt.s32.totalorder %s23, 1
      %s344 = scalar_select %p343, %s23, 1
      %s345 = smul.addr %s344, 4
      %s346 = scalar_lea.vmem %s7, %s345
      %p348 = scmp.eq.s32.totalorder %s24, 0
      // Predicated region
      $region45: #{simple_transformer_forward.15} parent=43 // pred_check
        %p349 = pneg %p348
      $region46: #{simple_transformer_forward.15} parent=43 // pred_check_branch
        %351 = sbr.rel (%p349) target = $region48
      $region47: #{simple_transformer_forward.15} parent=43 // pred_region
        %vm352 = vcmask 261120
        %353 = vst.msk [vmem:[#allocation2] sm:$0xff] %vm352, 0.0
      $region48: #{simple_transformer_forward.15} parent=43 // pred_fallthru
        _
      %v354 = vld [vmem:[#allocation2] sm:$0xff]
      %v355 = vld [vmem:[%s328] sm:$0xf]
      %v356 = vld [vmem:[%s333] sm:$0xf]
      %v357 = vld [vmem:[%s333 + $0x4] sm:$0xf]
      %v358 = vld [vmem:[%s333 + $0x8] sm:$0xf]
      %v359 = vld [vmem:[%s333 + $0xc] sm:$0xf]
      %v360 = vld [vmem:[%s333 + $0x10] sm:$0xf]
      %v361 = vld [vmem:[%s333 + $0x14] sm:$0xf]
      %v362 = vld [vmem:[%s333 + $0x18] sm:$0xf]
      %v363 = vld [vmem:[%s333 + $0x1c] sm:$0xf]
      %v372 = vunpack.c.l.b16 %v356
      %v373 = vunpack.c.l.b16 %v357
      %v374 = vunpack.c.l.b16 %v358
      %v375 = vunpack.c.l.b16 %v359
      %v376 = vunpack.c.l.b16 %v360
      %v377 = vunpack.c.l.b16 %v361
      %v378 = vunpack.c.l.b16 %v362
      %v379 = vunpack.c.l.b16 %v363
      %v380 = vpack.c.b16 %v373, %v372
      %v381 = vpack.c.b16 %v375, %v374
      %v382 = vpack.c.b16 %v377, %v376
      %v383 = vpack.c.b16 %v379, %v378
      %vm388 = vcmask 523264
      %v390 = vsel %vm388, %v355, 0
      %392 = vmatprep.subr.bf16.mxu0 0
      %393 = vmatpush1.bf16.msra.mxu0 %v380
      %394 = vmatprep.subr.bf16.mxu0 0
      %395 = vmatpush1.bf16.msra.mxu0 %v381
      %396 = vmatprep.subr.bf16.mxu0 0
      %397 = vmatpush1.bf16.msra.mxu0 %v382
      %398 = vmatprep.subr.bf16.mxu0 0
      %399 = vmatpush1.bf16.msra.mxu0 %v383
      %400 = vmatprep.subr.bf16.mxu0 0
      %401 = vmatpush1.bf16.msra.mxu0 0
      %402 = vmatprep.subr.bf16.mxu0 0
      %403 = vmatpush1.bf16.msra.mxu0 0
      %404 = vmatprep.subr.bf16.mxu0 0
      %405 = vmatpush1.bf16.msra.mxu0 0
      %406 = vmatprep.subr.bf16.mxu0 0
      %407 = vmatpush1.bf16.msra.mxu0 0
      %408 = vmatprep.subr.bf16.mxu0 0
      %409 = vmatpush1.bf16.msra.mxu0 0
      %410 = vmatprep.subr.bf16.mxu0 0
      %411 = vmatpush1.bf16.msra.mxu0 0
      %412 = vmatprep.subr.bf16.mxu0 0
      %413 = vmatpush1.bf16.msra.mxu0 0
      %414 = vmatprep.subr.bf16.mxu0 0
      %415 = vmatpush1.bf16.msra.mxu0 0
      %416 = vmatprep.subr.bf16.mxu0 0
      %417 = vmatpush1.bf16.msra.mxu0 0
      %418 = vmatprep.subr.bf16.mxu0 0
      %419 = vmatpush1.bf16.msra.mxu0 0
      %420 = vmatprep.subr.bf16.mxu0 0
      %421 = vmatpush1.bf16.msra.mxu0 0
      %422 = vmatprep.subr.bf16.mxu0 0
      %423 = vmatpush1.bf16.msra.mxu0 0
      %424 = vmatprep.mubr.bf16.mxu0 0
      %425 = vmatmul.mubr.bf16.gmra.mrb[0].mxu0 %v390
      %v426 = vpop.f32.mrb[0].mxu0
      %v427 = vadd.f32 0.0, %v426
      %v428 = vpop.f32.mrb[0].mxu0
      %v429 = vpop.f32.mrb[0].mxu0
      %v430 = vpop.f32.mrb[0].mxu0
      %431 = vdwg.mxu0
      %v432 = vadd.f32 %v354, %v427
      %vm433 = vcmask 261120
      %434 = vst.msk [vmem:[#allocation2] sm:$0xff] %vm433, %v432
      // Predicated region
      $region49: #{simple_transformer_forward.15} parent=43 // pred_check
        %p435 = pneg %p348
      $region50: #{simple_transformer_forward.15} parent=43 // pred_check_branch
        %437 = sbr.rel (%p435) target = $region52
      $region51: #{simple_transformer_forward.15} parent=43 // pred_region
        %v438 = vld [vmem:[#allocation2] sm:$0xff]
        %v439 = vld [vmem:[%s2] sm:$0x1]
        %v441 = vlaneseq
        %v442 = vshrl.u32 %v441, 7
        %v443 = vsub.s32 0, %v442
        %v444 = vrot.slane %v439, %v443
        %v446 = vadd.f32 %v438, %v444
        %v447 = vld [vmem:[%s338] sm:$0xff]
        %v448 = vadd.f32 %v446, %v447
        %v449 = vsel %vm433, %v448, 0.0
        %450 = vadd.xlane.f32.xlu0 %v449
        %v451 = vpop.xlane.xlu0 %450
        %v452 = vrcp.pop 32.0
        %v453 = vmul.f32 %v451, %v452
        %v454 = vsub.f32 %v448, %v453
        %v455 = vmul.f32 %v454, %v454
        %v456 = vsel %vm433, %v455, 0.0
        %457 = vadd.xlane.f32.xlu0 %v456
        %v458 = vpop.xlane.xlu0 %457
        %v459 = vmul.f32 %v458, %v452
        %v460 = vadd.f32 %v459, 1e-05
        %v461 = vrsqrt.pop %v460
        %v462 = vmul.f32 %v454, %v461
        %v463 = vld [vmem:[%s4] sm:$0x1]
        %v465 = vlaneseq
        %v466 = vshrl.u32 %v465, 7
        %v467 = vsub.s32 0, %v466
        %v468 = vrot.slane %v463, %v467
        %v470 = vmul.f32 %v462, %v468
        %v471 = vld [vmem:[%s5] sm:$0x1]
        %v473 = vlaneseq
        %v474 = vshrl.u32 %v473, 7
        %v475 = vsub.s32 0, %v474
        %v476 = vrot.slane %v471, %v475
        %v478 = vadd.f32 %v470, %v476
        %479 = vst.msk [vmem:[%s342] sm:$0xff] %vm433, %v478
        %v480 = vpack.c.bf16 %v478, %v478
        %vm481 = vcmask 257024
        %482 = vst.msk [vmem:[%s346] sm:$0xf] %vm481, %v480
      $region52: #{simple_transformer_forward.15} parent=43 // pred_fallthru
        _
      %p483 = scmp.lt.s32.totalorder %s23, 1
      %s484 = scalar_select %p483, %s23, 1
      %s485 = smul.addr %s484, 8
      %s486 = scalar_lea.vmem %s6, %s485
      %p487 = scmp.lt.s32.totalorder %s23, 1
      %s488 = scalar_select %p487, %s23, 1
      %s489 = smul.addr %s488, 4
      %s490 = scalar_lea.vmem %s7, %s489
      // Predicated region
      $region53: #{simple_transformer_forward.15} parent=43 // pred_check
        %p491 = pneg %p192
      $region54: #{simple_transformer_forward.15} parent=43 // pred_check_branch
        %493 = sbr.rel (%p491) target = $region56
      $region55: #{simple_transformer_forward.15} parent=43 // pred_region
        _
      $region56: #{simple_transformer_forward.15} parent=43 // pred_fallthru
        _
      // Predicated region
      $region57: #{simple_transformer_forward.15} parent=43 // pred_check
        %p494 = pneg %p218
      $region58: #{simple_transformer_forward.15} parent=43 // pred_check_branch
        %496 = sbr.rel (%p494) target = $region60
      $region59: #{simple_transformer_forward.15} parent=43 // pred_region
        _
      $region60: #{simple_transformer_forward.15} parent=43 // pred_fallthru
        _
    $region44: #{simple_transformer_forward.15} parent=5 // pred_fallthru
      _
    %p497 = scmp.le.s32.totalorder 2, %s14
    // Predicated region
    $region61: #{simple_transformer_forward.15} parent=5 // pred_check
      %p498 = pneg %p497
    $region62: #{simple_transformer_forward.15} parent=5 // pred_check_branch
      %500 = sbr.rel (%p498) target = $region64
    $region63: #{simple_transformer_forward.15} parent=5 // pred_region
      %s501 = ssub.s32 %s14, 2
      // Predicated region
      $region65: #{simple_transformer_forward.15} parent=63 // pred_check
        %p502 = pneg %p198
      $region66: #{simple_transformer_forward.15} parent=63 // pred_check_branch
        %504 = sbr.rel (%p502) target = $region68
      $region67: #{simple_transformer_forward.15} parent=63 // pred_region
        %p505 = scmp.lt.s32.totalorder %s25, 1
        %s506 = scalar_select %p505, %s25, 1
        %s507 = smul.addr %s506, 8
        %s508 = scalar_lea.vmem %s6, %s507
      $region68: #{simple_transformer_forward.15} parent=63 // pred_fallthru
        _
      // Predicated region
      $region69: #{simple_transformer_forward.15} parent=63 // pred_check
        %p509 = pneg %p224
      $region70: #{simple_transformer_forward.15} parent=63 // pred_check_branch
        %511 = sbr.rel (%p509) target = $region72
      $region71: #{simple_transformer_forward.15} parent=63 // pred_region
        %p512 = scmp.lt.s32.totalorder %s25, 1
        %s513 = scalar_select %p512, %s25, 1
        %s514 = smul.addr %s513, 4
        %s515 = scalar_lea.vmem %s7, %s514
      $region72: #{simple_transformer_forward.15} parent=63 // pred_fallthru
        _
    $region64: #{simple_transformer_forward.15} parent=5 // pred_fallthru
      _
  $region6: #{simple_transformer_forward.15} parent=0 // loop_footer
    %s18 = sadd.s32 1, %s14
  $region7: #{simple_transformer_forward.15} parent=0 // loop_footer_branch
    %13 = sbr.rel target = $region3
  $region8: #{simple_transformer_forward.15} parent=0 // loop_exit
    _

// kernel: simple_transformer_forward.20
$region0: #{simple_transformer_forward.20}
  #allocation0 [shape = 'u32[]', space=smem, size = 0x4, offset = 0x4, fixed_abs, tag = 'smem constant byte address 0x4 - core index']
  #allocation1 [shape = 'u32[144,128]{1,0:T(1,128)}', space=vmem, size = 0x12000, scoped, tag = 'internal scratch']
  #allocation2 [shape = 'f32[8,32]{1,0:T(8,128)}', space=vmem, size = 0x1000, scoped, tag = 'scratch operand']
  %s0 = inlined_call_operand.vmem [shape: bf16[16,64], index: 0, kind: input, shape index: {}]
  %s1 = inlined_call_operand.vmem [shape: bf16[64,32], index: 1, kind: input, shape index: {}]
  %s2 = inlined_call_operand.vmem [shape: f32[1,32], index: 2, kind: input, shape index: {}]
  %s3 = inlined_call_operand.vmem [shape: f32[16,32], index: 3, kind: input, shape index: {}]
  %s4 = inlined_call_operand.vmem [shape: f32[1,32], index: 4, kind: input, shape index: {}]
  %s5 = inlined_call_operand.vmem [shape: f32[1,32], index: 5, kind: input, shape index: {}]
  %s6 = inlined_call_operand.hbm [shape: f32[16,32], index: 6, kind: output, shape index: {0}]
  %s7 = inlined_call_operand.vmem [shape: bf16[16,32], index: 7, kind: output, shape index: {1}]
  %8 = xla_tuple %s6, %s7
  %s9 = sld [smem:[#allocation0]]
  $region73: #{simple_transformer_forward.20} parent=0
    _
  %s11 = ssub.s32 1, %s9
  %s12 = scalar_select 0, %s11, %s9
  $region1: #{simple_transformer_forward.20} parent=0
    #allocation3 [shape = 'u8[8192]{0}', space=vmem, size = 0x2000, scoped, tag = 'output window, operand 0']
    #allocation4 [shape = 's32[2]{0}', space=sflag, size = 0x8, scoped, tag = 'scoped memory for simple_transformer_forward.20']
    %13 = vsyncpa [#allocation4], 0
    %s14 = scalar_lea.sflag [#allocation4], 1
    %15 = vsyncpa %s14, 0
    loop: start=0, step=1, limit=4
    $region2: #{simple_transformer_forward.20} parent=1 // loop_pre_header
      _
    $region3: #{simple_transformer_forward.20} parent=1 // loop_header
      %s17 = sphi 0, %s21
      %p18 = scmp.ge.s32.totalorder %s17, 4
      %s24 = sphi 0, %s36
      %s25 = sphi 0, %s32
      %s26 = sphi 0, %s24
      %s27 = sphi 0, %s25
      %s28 = sphi 0, %s26
      %s29 = sphi 0, %s27
      %s41 = sphi 0, %s43
      %s44 = sphi 0, %s41
      %s45 = sphi 0, %s44
      %s61 = sphi 0, %s45
      %s67 = sphi 0, %s69
      %s70 = sphi 0, %s67
      %s71 = sphi 0, %s70
      %s87 = sphi 0, %s71
      %s91 = sphi 0, %s91
      %s93 = sphi 0, %s91
      %s94 = sphi 0, %s93
      %s108 = sphi 0, %s94
      %s114 = sphi 0, %s116
      %s117 = sphi 0, %s114
      %s118 = sphi 0, %s117
      %s134 = sphi 0, %s118
      %s138 = sphi 0, %s138
      %s140 = sphi 0, %s138
      %s141 = sphi 0, %s140
      %s155 = sphi 0, %s141
      %s159 = sphi 0, %s159
      %s161 = sphi 0, %s159
      %s162 = sphi 0, %s161
      %s176 = sphi 0, %s162
      %s182 = sphi 0, %s184
      %s185 = sphi 0, %s182
      %s186 = sphi 0, %s185
      %s202 = sphi 0, %s186
      %s208 = sphi 0, %s210
      %s211 = sphi 0, %s208
      %s212 = sphi 0, %s211
      %s228 = sphi 0, %s212
    $region4: #{simple_transformer_forward.20} parent=1 // loop_header_branch
      %20 = sbr.rel (%p18) target = $region8
    $region5: #{simple_transformer_forward.20} parent=1 // loop_body
      %s22 = ssub.s32 %s17, 1
      %s23 = ssub.s32 %s17, 2
      %s30 = sadd.s32 1, %s25
      %p31 = scmp.ge.s32.totalorder %s30, 1
      %s32 = scalar_select %p31, 0, %s30
      %s33 = sadd.s32 1, %s24
      %s34 = scalar_select %p31, %s33, %s24
      %p35 = scmp.ge.s32.totalorder %s34, 2
      %s36 = scalar_select %p35, 0, %s34
      %s37 = ssub.s32 %s24, %s36
      %s38 = ssub.s32 %s25, %s32
      %s39 = sor.u32 %s37, %s38
      %p40 = scmp.eq.s32.totalorder %s39, 0
      %s42 = sadd.s32 %s41, 1
      %s43 = scalar_select %p40, %s41, %s42
      %p46 = pneg %p40
      %p47 = scmp.eq.s32.totalorder %s17, 1
      %p48 = por %p46, %p47
      %p49 = scmp.ne.s32.totalorder %s41, %s44
      %p50 = scmp.eq.s32.totalorder %s17, 0
      %p51 = por %p49, %p50
      %p52 = scmp.ne.s32.totalorder %s41, %s44
      %p53 = scmp.eq.s32.totalorder %s22, 1
      %p54 = por %p52, %p53
      %p55 = scmp.ne.s32.totalorder %s44, %s45
      %p56 = scmp.eq.s32.totalorder %s22, 0
      %p57 = por %p55, %p56
      %p58 = scmp.ne.s32.totalorder %s44, %s45
      %p59 = scmp.eq.s32.totalorder %s23, 1
      %p60 = por %p58, %p59
      %p62 = scmp.ne.s32.totalorder %s45, %s61
      %p63 = scmp.eq.s32.totalorder %s23, 0
      %p64 = por %p62, %p63
      %s65 = ssub.s32 %s25, %s32
      %p66 = scmp.eq.s32.totalorder %s65, 0
      %s68 = sadd.s32 %s67, 1
      %s69 = scalar_select %p66, %s67, %s68
      %p72 = pneg %p66
      %p73 = scmp.eq.s32.totalorder %s17, 1
      %p74 = por %p72, %p73
      %p75 = scmp.ne.s32.totalorder %s67, %s70
      %p76 = scmp.eq.s32.totalorder %s17, 0
      %p77 = por %p75, %p76
      %p78 = scmp.ne.s32.totalorder %s67, %s70
      %p79 = scmp.eq.s32.totalorder %s22, 1
      %p80 = por %p78, %p79
      %p81 = scmp.ne.s32.totalorder %s70, %s71
      %p82 = scmp.eq.s32.totalorder %s22, 0
      %p83 = por %p81, %p82
      %p84 = scmp.ne.s32.totalorder %s70, %s71
      %p85 = scmp.eq.s32.totalorder %s23, 1
      %p86 = por %p84, %p85
      %p88 = scmp.ne.s32.totalorder %s71, %s87
      %p89 = scmp.eq.s32.totalorder %s23, 0
      %p90 = por %p88, %p89
      %s92 = sadd.s32 %s91, 1
      %p95 = scmp.eq.s32.totalorder %s17, 1
      %p96 = scmp.ne.s32.totalorder %s91, %s93
      %p97 = scmp.eq.s32.totalorder %s17, 0
      %p98 = por %p96, %p97
      %p99 = scmp.ne.s32.totalorder %s91, %s93
      %p100 = scmp.eq.s32.totalorder %s22, 1
      %p101 = por %p99, %p100
      %p102 = scmp.ne.s32.totalorder %s93, %s94
      %p103 = scmp.eq.s32.totalorder %s22, 0
      %p104 = por %p102, %p103
      %p105 = scmp.ne.s32.totalorder %s93, %s94
      %p106 = scmp.eq.s32.totalorder %s23, 1
      %p107 = por %p105, %p106
      %p109 = scmp.ne.s32.totalorder %s94, %s108
      %p110 = scmp.eq.s32.totalorder %s23, 0
      %p111 = por %p109, %p110
      %s112 = ssub.s32 %s24, %s36
      %p113 = scmp.eq.s32.totalorder %s112, 0
      %s115 = sadd.s32 %s114, 1
      %s116 = scalar_select %p113, %s114, %s115
      %p119 = pneg %p113
      %p120 = scmp.eq.s32.totalorder %s17, 1
      %p121 = por %p119, %p120
      %p122 = scmp.ne.s32.totalorder %s114, %s117
      %p123 = scmp.eq.s32.totalorder %s17, 0
      %p124 = por %p122, %p123
      %p125 = scmp.ne.s32.totalorder %s114, %s117
      %p126 = scmp.eq.s32.totalorder %s22, 1
      %p127 = por %p125, %p126
      %p128 = scmp.ne.s32.totalorder %s117, %s118
      %p129 = scmp.eq.s32.totalorder %s22, 0
      %p130 = por %p128, %p129
      %p131 = scmp.ne.s32.totalorder %s117, %s118
      %p132 = scmp.eq.s32.totalorder %s23, 1
      %p133 = por %p131, %p132
      %p135 = scmp.ne.s32.totalorder %s118, %s134
      %p136 = scmp.eq.s32.totalorder %s23, 0
      %p137 = por %p135, %p136
      %s139 = sadd.s32 %s138, 1
      %p142 = scmp.eq.s32.totalorder %s17, 1
      %p143 = scmp.ne.s32.totalorder %s138, %s140
      %p144 = scmp.eq.s32.totalorder %s17, 0
      %p145 = por %p143, %p144
      %p146 = scmp.ne.s32.totalorder %s138, %s140
      %p147 = scmp.eq.s32.totalorder %s22, 1
      %p148 = por %p146, %p147
      %p149 = scmp.ne.s32.totalorder %s140, %s141
      %p150 = scmp.eq.s32.totalorder %s22, 0
      %p151 = por %p149, %p150
      %p152 = scmp.ne.s32.totalorder %s140, %s141
      %p153 = scmp.eq.s32.totalorder %s23, 1
      %p154 = por %p152, %p153
      %p156 = scmp.ne.s32.totalorder %s141, %s155
      %p157 = scmp.eq.s32.totalorder %s23, 0
      %p158 = por %p156, %p157
      %s160 = sadd.s32 %s159, 1
      %p163 = scmp.eq.s32.totalorder %s17, 1
      %p164 = scmp.ne.s32.totalorder %s159, %s161
      %p165 = scmp.eq.s32.totalorder %s17, 0
      %p166 = por %p164, %p165
      %p167 = scmp.ne.s32.totalorder %s159, %s161
      %p168 = scmp.eq.s32.totalorder %s22, 1
      %p169 = por %p167, %p168
      %p170 = scmp.ne.s32.totalorder %s161, %s162
      %p171 = scmp.eq.s32.totalorder %s22, 0
      %p172 = por %p170, %p171
      %p173 = scmp.ne.s32.totalorder %s161, %s162
      %p174 = scmp.eq.s32.totalorder %s23, 1
      %p175 = por %p173, %p174
      %p177 = scmp.ne.s32.totalorder %s162, %s176
      %p178 = scmp.eq.s32.totalorder %s23, 0
      %p179 = por %p177, %p178
      %s180 = ssub.s32 %s24, %s36
      %p181 = scmp.eq.s32.totalorder %s180, 0
      %s183 = sadd.s32 %s182, 1
      %s184 = scalar_select %p181, %s182, %s183
      %p187 = pneg %p181
      %p188 = scmp.eq.s32.totalorder %s17, 1
      %p189 = por %p187, %p188
      %p190 = scmp.ne.s32.totalorder %s182, %s185
      %p191 = scmp.eq.s32.totalorder %s17, 0
      %p192 = por %p190, %p191
      %p193 = scmp.ne.s32.totalorder %s182, %s185
      %p194 = scmp.eq.s32.totalorder %s22, 1
      %p195 = por %p193, %p194
      %p196 = scmp.ne.s32.totalorder %s185, %s186
      %p197 = scmp.eq.s32.totalorder %s22, 0
      %p198 = por %p196, %p197
      %p199 = scmp.ne.s32.totalorder %s185, %s186
      %p200 = scmp.eq.s32.totalorder %s23, 1
      %p201 = por %p199, %p200
      %p203 = scmp.ne.s32.totalorder %s186, %s202
      %p204 = scmp.eq.s32.totalorder %s23, 0
      %p205 = por %p203, %p204
      %s206 = ssub.s32 %s24, %s36
      %p207 = scmp.eq.s32.totalorder %s206, 0
      %s209 = sadd.s32 %s208, 1
      %s210 = scalar_select %p207, %s208, %s209
      %p213 = pneg %p207
      %p214 = scmp.eq.s32.totalorder %s17, 1
      %p215 = por %p213, %p214
      %p216 = scmp.ne.s32.totalorder %s208, %s211
      %p217 = scmp.eq.s32.totalorder %s17, 0
      %p218 = por %p216, %p217
      %p219 = scmp.ne.s32.totalorder %s208, %s211
      %p220 = scmp.eq.s32.totalorder %s22, 1
      %p221 = por %p219, %p220
      %p222 = scmp.ne.s32.totalorder %s211, %s212
      %p223 = scmp.eq.s32.totalorder %s22, 0
      %p224 = por %p222, %p223
      %p225 = scmp.ne.s32.totalorder %s211, %s212
      %p226 = scmp.eq.s32.totalorder %s23, 1
      %p227 = por %p225, %p226
      %p229 = scmp.ne.s32.totalorder %s212, %s228
      %p230 = scmp.eq.s32.totalorder %s23, 0
      %p231 = por %p229, %p230
      %p232 = scmp.le.s32.totalorder 1, %s17
      %p233 = scmp.lt.s32.totalorder %s17, 3
      %p234 = pnand %p232, %p233
      %p235 = pneg %p234
      // Predicated region
      $region9: #{simple_transformer_forward.20} parent=5 // pred_check
        _
      $region10: #{simple_transformer_forward.20} parent=5 // pred_check_branch
        %237 = sbr.rel (%p234) target = $region12
      $region11: #{simple_transformer_forward.20} parent=5 // pred_region
        %s238 = ssub.s32 %s17, 1
        // Predicated region
        $region13: #{simple_transformer_forward.20} parent=11 // pred_check
          %p239 = pneg %p83
        $region14: #{simple_transformer_forward.20} parent=11 // pred_check_branch
          %241 = sbr.rel (%p239) target = $region16
        $region15: #{simple_transformer_forward.20} parent=11 // pred_region
          %s242 = smul.u32 8, %s27
          %p243 = scmp.lt.s32.totalorder %s242, 7
          %s244 = scalar_select %p243, %s242, 7
          %s245 = smul.addr %s244, 4
          %s246 = scalar_lea.vmem %s1, %s245
          %s247 = smul.u32 8, %s27
        $region16: #{simple_transformer_forward.20} parent=11 // pred_fallthru
          _
        // Predicated region
        $region17: #{simple_transformer_forward.20} parent=11 // pred_check
          %p248 = pneg %p104
        $region18: #{simple_transformer_forward.20} parent=11 // pred_check_branch
          %250 = sbr.rel (%p248) target = $region20
        $region19: #{simple_transformer_forward.20} parent=11 // pred_region
          _
        $region20: #{simple_transformer_forward.20} parent=11 // pred_fallthru
          _
        // Predicated region
        $region21: #{simple_transformer_forward.20} parent=11 // pred_check
          %p251 = pneg %p151
        $region22: #{simple_transformer_forward.20} parent=11 // pred_check_branch
          %253 = sbr.rel (%p251) target = $region24
        $region23: #{simple_transformer_forward.20} parent=11 // pred_region
          _
        $region24: #{simple_transformer_forward.20} parent=11 // pred_fallthru
          _
        // Predicated region
        $region25: #{simple_transformer_forward.20} parent=11 // pred_check
          %p254 = pneg %p172
        $region26: #{simple_transformer_forward.20} parent=11 // pred_check_branch
          %256 = sbr.rel (%p254) target = $region28
        $region27: #{simple_transformer_forward.20} parent=11 // pred_region
          _
        $region28: #{simple_transformer_forward.20} parent=11 // pred_fallthru
          _
      $region12: #{simple_transformer_forward.20} parent=5 // pred_fallthru
        _
      %p257 = scmp.lt.s32.totalorder %s17, 2
      // Predicated region
      $region29: #{simple_transformer_forward.20} parent=5 // pred_check
        %p258 = pneg %p257
      $region30: #{simple_transformer_forward.20} parent=5 // pred_check_branch
        %260 = sbr.rel (%p258) target = $region32
      $region31: #{simple_transformer_forward.20} parent=5 // pred_region
        // Predicated region
        $region33: #{simple_transformer_forward.20} parent=31 // pred_check
          %p261 = pneg %p51
        $region34: #{simple_transformer_forward.20} parent=31 // pred_check_branch
          %263 = sbr.rel (%p261) target = $region36
        $region35: #{simple_transformer_forward.20} parent=31 // pred_region
          %p264 = scmp.lt.s32.totalorder %s24, 1
          %s265 = scalar_select %p264, %s24, 1
          %p266 = scmp.lt.s32.totalorder %s25, 0
          %s267 = scalar_select %p266, %s25, 0
          %s268 = sadd.s32 %s267, %s265
          %s269 = smul.addr %s268, 4
          %s270 = scalar_lea.vmem %s0, %s269
        $region36: #{simple_transformer_forward.20} parent=31 // pred_fallthru
          _
        // Predicated region
        $region37: #{simple_transformer_forward.20} parent=31 // pred_check
          %p271 = pneg %p124
        $region38: #{simple_transformer_forward.20} parent=31 // pred_check_branch
          %273 = sbr.rel (%p271) target = $region40
        $region39: #{simple_transformer_forward.20} parent=31 // pred_region
          %p274 = scmp.lt.s32.totalorder %s24, 1
          %s275 = scalar_select %p274, %s24, 1
          %s276 = smul.addr %s275, 8
          %s277 = scalar_lea.vmem %s3, %s276
        $region40: #{simple_transformer_forward.20} parent=31 // pred_fallthru
          _
      $region32: #{simple_transformer_forward.20} parent=5 // pred_fallthru
        _
      %p278 = scmp.le.s32.totalorder 1, %s17
      %p279 = scmp.lt.s32.totalorder %s17, 3
      %p280 = pnand %p278, %p279
      %p281 = pneg %p280
      // Predicated region
      $region41: #{simple_transformer_forward.20} parent=5 // pred_check
        _
      $region42: #{simple_transformer_forward.20} parent=5 // pred_check_branch
        %283 = sbr.rel (%p280) target = $region44
      $region43: #{simple_transformer_forward.20} parent=5 // pred_region
        %s284 = ssub.s32 %s17, 1
        %p285 = scmp.lt.s32.totalorder %s26, 1
        %s286 = scalar_select %p285, %s26, 1
        %p287 = scmp.lt.s32.totalorder %s27, 0
        %s288 = scalar_select %p287, %s27, 0
        %s289 = sadd.s32 %s288, %s286
        %s290 = smul.addr %s289, 4
        %s291 = scalar_lea.vmem %s0, %s290
        %p292 = pneg %p57
        %p293 = pneg %p54
        %s294 = smul.u32 8, %s27
        %p295 = scmp.lt.s32.totalorder %s294, 7
        %s296 = scalar_select %p295, %s294, 7
        %s297 = smul.addr %s296, 4
        %s298 = scalar_lea.vmem %s1, %s297
        %p299 = pneg %p83
        %p300 = pneg %p80
        %p301 = pneg %p104
        %p302 = pneg %p101
        %p303 = scmp.lt.s32.totalorder %s26, 1
        %s304 = scalar_select %p303, %s26, 1
        %s305 = smul.addr %s304, 8
        %s306 = scalar_lea.vmem %s3, %s305
        %p307 = pneg %p130
        %p308 = pneg %p127
        %p309 = pneg %p151
        %p310 = pneg %p148
        %p311 = pneg %p172
        %p312 = pneg %p169
        %p313 = pneg %p198
        %p314 = pneg %p195
        %s315 = sand.u32 %s185, 1
        %s316 = scalar_lea.sflag [#allocation4], %s315
        %s317 = sand.u32 %s185, 1
        %s318 = smul.addr %s317, 8
        %s319 = scalar_lea.vmem [#allocation3], %s318
        %p320 = pneg %p224
        %p321 = pneg %p221
        %p322 = scmp.lt.s32.totalorder %s26, 1
        %s323 = scalar_select %p322, %s26, 1
        %s324 = smul.addr %s323, 4
        %s325 = scalar_lea.vmem %s7, %s324
        %p326 = scmp.lt.s32.totalorder %s26, 1
        %s327 = scalar_select %p326, %s26, 1
        %p328 = scmp.lt.s32.totalorder %s27, 0
        %s329 = scalar_select %p328, %s27, 0
        %s330 = sadd.s32 %s329, %s327
        %s331 = smul.addr %s330, 4
        %s332 = scalar_lea.vmem %s0, %s331
        %s333 = smul.u32 8, %s27
        %p334 = scmp.lt.s32.totalorder %s333, 7
        %s335 = scalar_select %p334, %s333, 7
        %s336 = smul.addr %s335, 4
        %s337 = scalar_lea.vmem %s1, %s336
        %s338 = smul.u32 8, %s27
        %p339 = scmp.lt.s32.totalorder %s26, 1
        %s340 = scalar_select %p339, %s26, 1
        %s341 = smul.addr %s340, 8
        %s342 = scalar_lea.vmem %s3, %s341
        %p343 = scmp.lt.s32.totalorder %s26, 1
        %s344 = scalar_select %p343, %s26, 1
        %s345 = smul.addr %s344, 4
        %s346 = scalar_lea.vmem %s7, %s345
        %p348 = scmp.eq.s32.totalorder %s27, 0
        // Predicated region
        $region45: #{simple_transformer_forward.20} parent=43 // pred_check
          %p349 = pneg %p348
        $region46: #{simple_transformer_forward.20} parent=43 // pred_check_branch
          %351 = sbr.rel (%p349) target = $region48
        $region47: #{simple_transformer_forward.20} parent=43 // pred_region
          %vm352 = vcmask 261120
          %353 = vst.msk [vmem:[#allocation2] sm:$0xff] %vm352, 0.0
        $region48: #{simple_transformer_forward.20} parent=43 // pred_fallthru
          _
        %v354 = vld [vmem:[#allocation2] sm:$0xff]
        %v355 = vld [vmem:[%s332] sm:$0xf]
        %v356 = vld [vmem:[%s337] sm:$0xf]
        %v357 = vld [vmem:[%s337 + $0x4] sm:$0xf]
        %v358 = vld [vmem:[%s337 + $0x8] sm:$0xf]
        %v359 = vld [vmem:[%s337 + $0xc] sm:$0xf]
        %v360 = vld [vmem:[%s337 + $0x10] sm:$0xf]
        %v361 = vld [vmem:[%s337 + $0x14] sm:$0xf]
        %v362 = vld [vmem:[%s337 + $0x18] sm:$0xf]
        %v363 = vld [vmem:[%s337 + $0x1c] sm:$0xf]
        %v372 = vunpack.c.l.b16 %v356
        %v373 = vunpack.c.l.b16 %v357
        %v374 = vunpack.c.l.b16 %v358
        %v375 = vunpack.c.l.b16 %v359
        %v376 = vunpack.c.l.b16 %v360
        %v377 = vunpack.c.l.b16 %v361
        %v378 = vunpack.c.l.b16 %v362
        %v379 = vunpack.c.l.b16 %v363
        %v380 = vpack.c.b16 %v373, %v372
        %v381 = vpack.c.b16 %v375, %v374
        %v382 = vpack.c.b16 %v377, %v376
        %v383 = vpack.c.b16 %v379, %v378
        %vm388 = vcmask 523264
        %v390 = vsel %vm388, %v355, 0
        %392 = vmatprep.subr.bf16.mxu0 0
        %393 = vmatpush1.bf16.msra.mxu0 %v380
        %394 = vmatprep.subr.bf16.mxu0 0
        %395 = vmatpush1.bf16.msra.mxu0 %v381
        %396 = vmatprep.subr.bf16.mxu0 0
        %397 = vmatpush1.bf16.msra.mxu0 %v382
        %398 = vmatprep.subr.bf16.mxu0 0
        %399 = vmatpush1.bf16.msra.mxu0 %v383
        %400 = vmatprep.subr.bf16.mxu0 0
        %401 = vmatpush1.bf16.msra.mxu0 0
        %402 = vmatprep.subr.bf16.mxu0 0
        %403 = vmatpush1.bf16.msra.mxu0 0
        %404 = vmatprep.subr.bf16.mxu0 0
        %405 = vmatpush1.bf16.msra.mxu0 0
        %406 = vmatprep.subr.bf16.mxu0 0
        %407 = vmatpush1.bf16.msra.mxu0 0
        %408 = vmatprep.subr.bf16.mxu0 0
        %409 = vmatpush1.bf16.msra.mxu0 0
        %410 = vmatprep.subr.bf16.mxu0 0
        %411 = vmatpush1.bf16.msra.mxu0 0
        %412 = vmatprep.subr.bf16.mxu0 0
        %413 = vmatpush1.bf16.msra.mxu0 0
        %414 = vmatprep.subr.bf16.mxu0 0
        %415 = vmatpush1.bf16.msra.mxu0 0
        %416 = vmatprep.subr.bf16.mxu0 0
        %417 = vmatpush1.bf16.msra.mxu0 0
        %418 = vmatprep.subr.bf16.mxu0 0
        %419 = vmatpush1.bf16.msra.mxu0 0
        %420 = vmatprep.subr.bf16.mxu0 0
        %421 = vmatpush1.bf16.msra.mxu0 0
        %422 = vmatprep.subr.bf16.mxu0 0
        %423 = vmatpush1.bf16.msra.mxu0 0
        %424 = vmatprep.mubr.bf16.mxu0 0
        %425 = vmatmul.mubr.bf16.gmra.mrb[0].mxu0 %v390
        %v426 = vpop.f32.mrb[0].mxu0
        %v427 = vadd.f32 0.0, %v426
        %v428 = vpop.f32.mrb[0].mxu0
        %v429 = vpop.f32.mrb[0].mxu0
        %v430 = vpop.f32.mrb[0].mxu0
        %431 = vdwg.mxu0
        %v432 = vadd.f32 %v354, %v427
        %vm433 = vcmask 261120
        %434 = vst.msk [vmem:[#allocation2] sm:$0xff] %vm433, %v432
        // Predicated region
        $region49: #{simple_transformer_forward.20} parent=43 // pred_check
          %p435 = pneg %p348
        $region50: #{simple_transformer_forward.20} parent=43 // pred_check_branch
          %437 = sbr.rel (%p435) target = $region52
        $region51: #{simple_transformer_forward.20} parent=43 // pred_region
          %v438 = vld [vmem:[#allocation2] sm:$0xff]
          %v439 = vld [vmem:[%s2] sm:$0x1]
          %v441 = vlaneseq
          %v442 = vshrl.u32 %v441, 7
          %v443 = vsub.s32 0, %v442
          %v444 = vrot.slane %v439, %v443
          %v446 = vadd.f32 %v438, %v444
          %v447 = vld [vmem:[%s342] sm:$0xff]
          %v448 = vadd.f32 %v446, %v447
          %v449 = vsel %vm433, %v448, 0.0
          %450 = vadd.xlane.f32.xlu0 %v449
          %v451 = vpop.xlane.xlu0 %450
          %v452 = vrcp.pop 32.0
          %v453 = vmul.f32 %v451, %v452
          %v454 = vsub.f32 %v448, %v453
          %v455 = vmul.f32 %v454, %v454
          %v456 = vsel %vm433, %v455, 0.0
          %457 = vadd.xlane.f32.xlu0 %v456
          %v458 = vpop.xlane.xlu0 %457
          %v459 = vmul.f32 %v458, %v452
          %v460 = vadd.f32 %v459, 1e-05
          %v461 = vrsqrt.pop %v460
          %v462 = vmul.f32 %v454, %v461
          %v463 = vld [vmem:[%s4] sm:$0x1]
          %v465 = vlaneseq
          %v466 = vshrl.u32 %v465, 7
          %v467 = vsub.s32 0, %v466
          %v468 = vrot.slane %v463, %v467
          %v470 = vmul.f32 %v462, %v468
          %v471 = vld [vmem:[%s5] sm:$0x1]
          %v473 = vlaneseq
          %v474 = vshrl.u32 %v473, 7
          %v475 = vsub.s32 0, %v474
          %v476 = vrot.slane %v471, %v475
          %v478 = vadd.f32 %v470, %v476
          %479 = vst.msk [vmem:[%s319] sm:$0xff] %vm433, %v478
          %v480 = vpack.c.bf16 %v478, %v478
          %vm481 = vcmask 257024
          %482 = vst.msk [vmem:[%s346] sm:$0xf] %vm481, %v480
        $region52: #{simple_transformer_forward.20} parent=43 // pred_fallthru
          _
        %s483 = sand.u32 %s185, 1
        %s484 = scalar_lea.sflag [#allocation4], %s483
        %s485 = sand.u32 %s185, 1
        %s486 = smul.addr %s485, 8
        %s487 = scalar_lea.vmem [#allocation3], %s486
        %p488 = scmp.lt.s32.totalorder %s26, 1
        %s489 = scalar_select %p488, %s26, 1
        %s490 = smul.addr %s489, 4
        %s491 = scalar_lea.vmem %s7, %s490
        // Predicated region
        $region53: #{simple_transformer_forward.20} parent=43 // pred_check
          %p492 = pneg %p195
        $region54: #{simple_transformer_forward.20} parent=43 // pred_check_branch
          %494 = sbr.rel (%p492) target = $region56
        $region55: #{simple_transformer_forward.20} parent=43 // pred_region
          %s496 = ssub.s32 128, 128
          %497 = vsyncadd %s484, %s496
          %s498 = smul.addr %s26, 128
          %s499 = scalar_lea.hbm %s6, %s498
          %s501 = sshll.u32 %s487, 4
          %s502 = int_to_ptr.vmem [resolvable:$true] %s501
          %504 = dma.vmem_to_hbm [thread:$0]  %s502, 128, %s499, %s484
        $region56: #{simple_transformer_forward.20} parent=43 // pred_fallthru
          _
        // Predicated region
        $region57: #{simple_transformer_forward.20} parent=43 // pred_check
          %p505 = pneg %p221
        $region58: #{simple_transformer_forward.20} parent=43 // pred_check_branch
          %507 = sbr.rel (%p505) target = $region60
        $region59: #{simple_transformer_forward.20} parent=43 // pred_region
          _
        $region60: #{simple_transformer_forward.20} parent=43 // pred_fallthru
          _
      $region44: #{simple_transformer_forward.20} parent=5 // pred_fallthru
        _
      %p508 = scmp.le.s32.totalorder 2, %s17
      // Predicated region
      $region61: #{simple_transformer_forward.20} parent=5 // pred_check
        %p509 = pneg %p508
      $region62: #{simple_transformer_forward.20} parent=5 // pred_check_branch
        %511 = sbr.rel (%p509) target = $region64
      $region63: #{simple_transformer_forward.20} parent=5 // pred_region
        %s512 = ssub.s32 %s17, 2
        // Predicated region
        $region65: #{simple_transformer_forward.20} parent=63 // pred_check
          %p513 = pneg %p201
        $region66: #{simple_transformer_forward.20} parent=63 // pred_check_branch
          %515 = sbr.rel (%p513) target = $region68
        $region67: #{simple_transformer_forward.20} parent=63 // pred_region
          %s516 = sand.u32 %s186, 1
          %s517 = scalar_lea.sflag [#allocation4], %s516
          %s518 = sand.u32 %s186, 1
          %s519 = smul.addr %s518, 8
          %s520 = scalar_lea.vmem [#allocation3], %s519
          %521 = dma.done %s517, 128
        $region68: #{simple_transformer_forward.20} parent=63 // pred_fallthru
          _
        // Predicated region
        $region69: #{simple_transformer_forward.20} parent=63 // pred_check
          %p522 = pneg %p227
        $region70: #{simple_transformer_forward.20} parent=63 // pred_check_branch
          %524 = sbr.rel (%p522) target = $region72
        $region71: #{simple_transformer_forward.20} parent=63 // pred_region
          %p525 = scmp.lt.s32.totalorder %s28, 1
          %s526 = scalar_select %p525, %s28, 1
          %s527 = smul.addr %s526, 4
          %s528 = scalar_lea.vmem %s7, %s527
        $region72: #{simple_transformer_forward.20} parent=63 // pred_fallthru
          _
      $region64: #{simple_transformer_forward.20} parent=5 // pred_fallthru
        _
    $region6: #{simple_transformer_forward.20} parent=1 // loop_footer
      %s21 = sadd.s32 1, %s17
    $region7: #{simple_transformer_forward.20} parent=1 // loop_footer_branch
      %16 = sbr.rel target = $region3
    $region8: #{simple_transformer_forward.20} parent=1 // loop_exit
      _
    %529 = vsyncpa [#allocation4], 1
    %s530 = scalar_lea.sflag [#allocation4], 1
    %531 = vsyncpa %s530, 1

</llo_original>
